<compile_context>
chip_gen: v7x
topology: tpu7x:2x2x1
jax: 0.10.0
libtpu: 0.0.40
codegen_flags: <defaults>
</compile_context>

<pallas_src>
import math
from functools import partial

import jax
import jax.numpy as jnp
from jax.experimental import pallas as pl
from jax.experimental.pallas import tpu as pltpu

D_MODEL = 32
N_HEAD = 4
HEAD_DIM = D_MODEL // N_HEAD
DIM_FF = 64
NUM_LAYERS = 2
LN_EPS = 1e-5
VEC_W = max(3 * D_MODEL, DIM_FF)   # lane width of the packed per-layer vector table

# rows of the packed per-layer vector table (each row lane-padded to VEC_W)
_BQKV, _BO, _B1, _B2, _G1, _BETA1, _G2, _BETA2 = range(8)


def _layernorm(x, g, b):
    mu = jnp.mean(x, axis=-1, keepdims=True)
    xc = x - mu
    var = jnp.mean(xc * xc, axis=-1, keepdims=True)
    return xc * jax.lax.rsqrt(var + LN_EPS) * g + b


def encoder_kernel(src_ref, pos_ref,
                   wat_ref,   # (L, D, 3D)    [Wq^T | Wk^T | Wv^T]
                   wo_ref,    # (L, D, D)     out-proj weight, pre-transposed
                   wff_ref,   # (L, D+F, F)   rows 0:D = W1^T, rows D:D+F = [W2^T | 0]
                   vec_ref,   # (L, 8, VEC_W) [b_qkv, bo, b1, b2, g1, beta1, g2, beta2]
                   out_ref):
    Bb, S, D = src_ref.shape
    H, hd, F = N_HEAD, HEAD_DIM, DIM_FF
    N = Bb * S
    scale = 1.0 / math.sqrt(hd)

    x = src_ref[...].astype(jnp.float32).reshape(N, D)     # flatten (B,S)->N: safe for
    pos = pos_ref[...].astype(jnp.float32).reshape(N, D)   # projections / FFN / LayerNorm

    for l in range(NUM_LAYERS):        # static unroll; all stacked weights stay resident in VMEM
        # ---- fused q/k and v projections (q = k use x+pos, v uses x) ----
        b_qkv = vec_ref[l, _BQKV:_BQKV + 1, :3 * D]                         # (1, 3D)
        qk = jnp.dot(x + pos, wat_ref[l, :, :2 * D],
                     preferred_element_type=jnp.float32) + b_qkv[:, :2 * D]  # (N, 2D)
        v = jnp.dot(x, wat_ref[l, :, 2 * D:],
                    preferred_element_type=jnp.float32) + b_qkv[:, 2 * D:]   # (N, D)

        # ---- per-head scaled-dot-product attention; batch index kept explicit ----
        head_outs = []
        for h in range(H):
            qh = (qk[:, h * hd:(h + 1) * hd] * scale).reshape(Bb, S, hd)
            kh = qk[:, D + h * hd: D + (h + 1) * hd].reshape(Bb, S, hd)
            vh = v[:, h * hd:(h + 1) * hd].reshape(Bb, S, hd)
            s = jnp.einsum('bqd,bkd->bqk', qh, kh,
                           preferred_element_type=jnp.float32)              # (Bb, S, S)
            s = s - jnp.max(s, axis=-1, keepdims=True)
            p = jnp.exp(s)
            denom = jnp.sum(p, axis=-1, keepdims=True)
            inv = pl.reciprocal(denom, approx=True)                         # EUP slot
            inv = inv * (2.0 - denom * inv)                                 # Newton -> f32 acc.
            head_outs.append(jnp.einsum('bqk,bkd->bqd', p * inv, vh,
                                        preferred_element_type=jnp.float32))

        # concat heads along lanes -> ONE K=D out-projection matmul
        o = jnp.concatenate(head_outs, axis=-1).reshape(N, D)
        attn = jnp.dot(o, wo_ref[l], preferred_element_type=jnp.float32) \
            + vec_ref[l, _BO:_BO + 1, :D]

        # ---- residual + post-LN (normalize_before=False; dropout = identity in eval) ----
        x = _layernorm(x + attn,
                       vec_ref[l, _G1:_G1 + 1, :D], vec_ref[l, _BETA1:_BETA1 + 1, :D])

        # ---- FFN: linear1 -> ReLU -> linear2, residual + post-LN ----
        h1 = jnp.dot(x, wff_ref[l, :D, :], preferred_element_type=jnp.float32) \
            + vec_ref[l, _B1:_B1 + 1, :F]
        h1 = jnp.maximum(h1, 0.0)
        h2 = jnp.dot(h1, wff_ref[l, D:, :], preferred_element_type=jnp.float32)[:, :D] \
            + vec_ref[l, _B2:_B2 + 1, :D]
        x = _layernorm(x + h2,
                       vec_ref[l, _G2:_G2 + 1, :D], vec_ref[l, _BETA2:_BETA2 + 1, :D])

    out_ref[...] = x.reshape(Bb, S, D).astype(out_ref.dtype)


# ---------------- host-side parameter packing (one-time, outside the kernel) ----------------

def pack_params(layer_params):
    D, F = D_MODEL, DIM_FF
    assert F >= D, "FFN slab packing assumes dim_feedforward >= d_model"

    def pad_row(v):                     # (1, n) -> (1, VEC_W)
        return jnp.pad(v, ((0, 0), (0, VEC_W - v.shape[1])))

    wat, wo, wff, vec = [], [], [], []
    for p in layer_params:
        wat.append(jnp.concatenate([p["wq"].T, p["wk"].T, p["wv"].T], axis=1))   # (D, 3D)
        wo.append(p["wo"].T)                                                     # (D, D)
        w2t_pad = jnp.pad(p["w2"].T, ((0, 0), (0, F - D)))                       # (F, F)
        wff.append(jnp.concatenate([p["w1"].T, w2t_pad], axis=0))                # (D+F, F)
        b_qkv = jnp.concatenate([p["bq"], p["bk"], p["bv"]], axis=1)             # (1, 3D)
        vec.append(jnp.concatenate(
            [pad_row(b_qkv), pad_row(p["bo"]), pad_row(p["b1"]), pad_row(p["b2"]),
             pad_row(p["g1"]), pad_row(p["beta1"]),
             pad_row(p["g2"]), pad_row(p["beta2"])], axis=0))                    # (8, VEC_W)

    return (jnp.stack(wat), jnp.stack(wo), jnp.stack(wff), jnp.stack(vec))


def transformer_encoder(src, pos, layer_params, *, batch_parallel=False):
    """src_mask=None (no attention mask); final encoder norm is None (module default)."""
    B, S, D = src.shape
    packed = pack_params(layer_params)

    def weight_spec(a):
        nd = a.ndim
        # constant block index -> fetched once, resident across the whole grid.
        return pl.BlockSpec(a.shape, lambda b, nd=nd: (0,) * nd)

    if batch_parallel:
        # v7x: shard the batch across the two TensorCores.
        grid = (B,)
        act_spec = pl.BlockSpec((1, S, D), lambda b: (b, 0, 0))
        semantics = ("parallel",)
    else:
        # v5e / v6e (single TensorCore): one grid step, whole batch in one body.
        grid = (1,)
        act_spec = pl.BlockSpec((B, S, D), lambda b: (0, 0, 0))
        semantics = ("arbitrary",)

    return pl.pallas_call(
        encoder_kernel,
        out_shape=jax.ShapeDtypeStruct(src.shape, src.dtype),
        grid=grid,
        in_specs=[act_spec, act_spec] + [weight_spec(a) for a in packed],
        out_specs=act_spec,
        compiler_params=pltpu.CompilerParams(
            dimension_semantics=semantics,
            vmem_limit_bytes=32 * 1024 * 1024),
    )(src, pos, *packed)


# ---------------- deterministic parameter init ----------------

def init_layer_params(key):
    ks = jax.random.split(key, 12)
    D, F = D_MODEL, DIM_FF

    def w(k, shape, fan_in):
        return jax.random.normal(k, shape, jnp.float32) / math.sqrt(fan_in)

    def b(k, shape):
        return 0.02 * jax.random.normal(k, shape, jnp.float32)

    return {
        "wq": w(ks[0], (D, D), D), "bq": b(ks[1], (1, D)),
        "wk": w(ks[2], (D, D), D), "bk": b(ks[3], (1, D)),
        "wv": w(ks[4], (D, D), D), "bv": b(ks[5], (1, D)),
        "wo": w(ks[6], (D, D), D), "bo": b(ks[7], (1, D)),
        "w1": w(ks[8], (F, D), D), "b1": b(ks[9], (1, F)),
        "w2": w(ks[10], (D, F), F), "b2": b(ks[11], (1, D)),
        "g1": jnp.ones((1, D), jnp.float32), "beta1": jnp.zeros((1, D), jnp.float32),
        "g2": jnp.ones((1, D), jnp.float32), "beta2": jnp.zeros((1, D), jnp.float32),
    }


# ---------------- pure-JAX reference for verification ----------------

def _ref_mha(q, k, v, p):
    B, S, D = q.shape
    hd = D // N_HEAD
    qp = (q @ p["wq"].T + p["bq"]).reshape(B, S, N_HEAD, hd).transpose(0, 2, 1, 3)
    kp = (k @ p["wk"].T + p["bk"]).reshape(B, S, N_HEAD, hd).transpose(0, 2, 1, 3)
    vp = (v @ p["wv"].T + p["bv"]).reshape(B, S, N_HEAD, hd).transpose(0, 2, 1, 3)
    s = jnp.einsum('bhqd,bhkd->bhqk', qp, kp) / math.sqrt(hd)
    a = jax.nn.softmax(s, axis=-1)
    o = jnp.einsum('bhqk,bhkd->bhqd', a, vp).transpose(0, 2, 1, 3).reshape(B, S, D)
    return o @ p["wo"].T + p["bo"]


def _ref_layer(src, pos, p):
    qk = src + pos
    attn = _ref_mha(qk, qk, src, p)
    x = _layernorm(src + attn, p["g1"], p["beta1"])
    h = jnp.maximum(x @ p["w1"].T + p["b1"], 0.0)
    return _layernorm(x + h @ p["w2"].T + p["b2"], p["g2"], p["beta2"])


def _ref_encoder(src, pos, layer_params):
    out = src
    for p in layer_params:
        out = _ref_layer(out, pos, p)
    return out


if __name__ == "__main__":
    B, S = 2, 16
    key = jax.random.PRNGKey(0)
    keys = jax.random.split(key, 2 + NUM_LAYERS)
    src = jax.random.normal(keys[0], (B, S, D_MODEL), jnp.float32)
    pos = jax.random.normal(keys[1], (B, S, D_MODEL), jnp.float32)
    layer_params = [init_layer_params(keys[2 + i]) for i in range(NUM_LAYERS)]

    ref = _ref_encoder(src, pos, layer_params)

    # default path: collapsed batch grid (best on single-TensorCore v5e / v6e)
    run = jax.jit(transformer_encoder)
    out = jax.block_until_ready(run(src, pos, layer_params))
    assert out.shape == (B, S, D_MODEL)
    err = float(jnp.max(jnp.abs(out - ref)))
    assert jnp.allclose(out, ref, atol=5e-4, rtol=5e-4), err

    # v7x path: batch sharded across the two TensorCores
    run_par = jax.jit(partial(transformer_encoder, batch_parallel=True))
    out_par = jax.block_until_ready(run_par(src, pos, layer_params))
    err_par = float(jnp.max(jnp.abs(out_par - ref)))
    assert jnp.allclose(out_par, ref, atol=5e-4, rtol=5e-4), err_par

    print("KERNEL_OK")
</pallas_src>

<mosaic_0001>
module attributes {stable_mosaic.version = 11 : i64} {
  func.func @encoder_kernel(%arg0: i32, %arg1: memref<2x16x32xf32, #tpu.memory_space<vmem>>, %arg2: memref<2x16x32xf32, #tpu.memory_space<vmem>>, %arg3: memref<2x32x96xf32, #tpu.memory_space<vmem>>, %arg4: memref<2x32x32xf32, #tpu.memory_space<vmem>>, %arg5: memref<2x96x64xf32, #tpu.memory_space<vmem>>, %arg6: memref<2x8x96xf32, #tpu.memory_space<vmem>>, %arg7: memref<2x16x32xf32, #tpu.memory_space<vmem>>) attributes {dimension_semantics = [#tpu.dimension_semantics<arbitrary>], iteration_bounds = array<i64: 1>, scalar_prefetch = 0 : i64, scratch_operands = 0 : i64, tpu.core_type = #tpu.core_type<tc>, window_params = [{pipeline_mode = #tpu.pipeline_mode<synchronous>, transform_indices = @transform_0, window_bounds = array<i64: 2, 16, 32>}, {pipeline_mode = #tpu.pipeline_mode<synchronous>, transform_indices = @transform_1, window_bounds = array<i64: 2, 16, 32>}, {pipeline_mode = #tpu.pipeline_mode<synchronous>, transform_indices = @transform_2, window_bounds = array<i64: 2, 32, 96>}, {pipeline_mode = #tpu.pipeline_mode<synchronous>, transform_indices = @transform_3, window_bounds = array<i64: 2, 32, 32>}, {pipeline_mode = #tpu.pipeline_mode<synchronous>, transform_indices = @transform_4, window_bounds = array<i64: 2, 96, 64>}, {pipeline_mode = #tpu.pipeline_mode<synchronous>, transform_indices = @transform_5, window_bounds = array<i64: 2, 8, 96>}, {pipeline_mode = #tpu.pipeline_mode<synchronous>, transform_indices = @transform_6, window_bounds = array<i64: 2, 16, 32>}]} {
    %c0 = arith.constant 0 : index
    %c0_0 = arith.constant 0 : index
    %c0_1 = arith.constant 0 : index
    %0 = vector.load %arg1[%c0, %c0_0, %c0_1] : memref<2x16x32xf32, #tpu.memory_space<vmem>>, vector<2x16x32xf32>
    %1 = vector.shape_cast %0 : vector<2x16x32xf32> to vector<32x32xf32>
    %c0_2 = arith.constant 0 : index
    %c0_3 = arith.constant 0 : index
    %c0_4 = arith.constant 0 : index
    %2 = vector.load %arg2[%c0_2, %c0_3, %c0_4] : memref<2x16x32xf32, #tpu.memory_space<vmem>>, vector<2x16x32xf32>
    %3 = vector.shape_cast %2 : vector<2x16x32xf32> to vector<32x32xf32>
    %c0_5 = arith.constant 0 : index
    %c0_6 = arith.constant 0 : index
    %c0_7 = arith.constant 0 : index
    %4 = vector.load %arg6[%c0_5, %c0_6, %c0_7] : memref<2x8x96xf32, #tpu.memory_space<vmem>>, vector<1x1x96xf32>
    %5 = vector.shape_cast %4 : vector<1x1x96xf32> to vector<1x96xf32>
    %6 = arith.addf %1, %3 : vector<32x32xf32>
    %c0_8 = arith.constant 0 : index
    %c0_9 = arith.constant 0 : index
    %c0_10 = arith.constant 0 : index
    %7 = vector.load %arg3[%c0_8, %c0_9, %c0_10] : memref<2x32x96xf32, #tpu.memory_space<vmem>>, vector<1x32x64xf32>
    %8 = vector.shape_cast %7 : vector<1x32x64xf32> to vector<32x64xf32>
    %cst = arith.constant dense<0.000000e+00> : vector<32x64xf32>
    %9 = tpu.matmul %6, %8, %cst {dimension_numbers = #tpu.dot_dimension_numbers<[1], [0], [0], [1], [0, 0, 1, 1], [], []>} : vector<32x32xf32>, vector<32x64xf32>, vector<32x64xf32> -> vector<32x64xf32>
    %10 = vector.extract_strided_slice %5 {offsets = [0, 0], sizes = [1, 64], strides = [1, 1]} : vector<1x96xf32> to vector<1x64xf32>
    %11 = vector.broadcast %10 : vector<1x64xf32> to vector<32x64xf32>
    %12 = arith.addf %9, %11 : vector<32x64xf32>
    %c0_11 = arith.constant 0 : index
    %c0_12 = arith.constant 0 : index
    %c64 = arith.constant 64 : index
    %13 = vector.load %arg3[%c0_11, %c0_12, %c64] : memref<2x32x96xf32, #tpu.memory_space<vmem>>, vector<1x32x32xf32>
    %14 = vector.shape_cast %13 : vector<1x32x32xf32> to vector<32x32xf32>
    %cst_13 = arith.constant dense<0.000000e+00> : vector<32x32xf32>
    %15 = tpu.matmul %1, %14, %cst_13 {dimension_numbers = #tpu.dot_dimension_numbers<[1], [0], [0], [1], [0, 0, 1, 1], [], []>} : vector<32x32xf32>, vector<32x32xf32>, vector<32x32xf32> -> vector<32x32xf32>
    %16 = vector.extract_strided_slice %5 {offsets = [0, 64], sizes = [1, 32], strides = [1, 1]} : vector<1x96xf32> to vector<1x32xf32>
    %17 = vector.broadcast %16 : vector<1x32xf32> to vector<32x32xf32>
    %18 = arith.addf %15, %17 : vector<32x32xf32>
    %19 = vector.extract_strided_slice %12 {offsets = [0, 0], sizes = [32, 8], strides = [1, 1]} : vector<32x64xf32> to vector<32x8xf32>
    %cst_14 = arith.constant 0.353553385 : f32
    %20 = vector.broadcast %cst_14 : f32 to vector<32x8xf32>
    %21 = arith.mulf %19, %20 : vector<32x8xf32>
    %22 = vector.shape_cast %21 : vector<32x8xf32> to vector<2x16x8xf32>
    %23 = vector.extract_strided_slice %12 {offsets = [0, 32], sizes = [32, 8], strides = [1, 1]} : vector<32x64xf32> to vector<32x8xf32>
    %24 = vector.shape_cast %23 : vector<32x8xf32> to vector<2x16x8xf32>
    %25 = vector.extract_strided_slice %18 {offsets = [0, 0], sizes = [32, 8], strides = [1, 1]} : vector<32x32xf32> to vector<32x8xf32>
    %26 = vector.shape_cast %25 : vector<32x8xf32> to vector<2x16x8xf32>
    "tpu.trace_start"() <{level = 10 : i32, message = "bqd,bkd->bqk"}> : () -> ()
    %cst_15 = arith.constant dense<0.000000e+00> : vector<2x16x16xf32>
    %27 = tpu.matmul %22, %24, %cst_15 {dimension_numbers = #tpu.dot_dimension_numbers<[2], [2], [1], [1], [0, 0, 0, 1, 1, 1], [0], [0]>} : vector<2x16x8xf32>, vector<2x16x8xf32>, vector<2x16x16xf32> -> vector<2x16x16xf32>
    "tpu.trace_stop"() : () -> ()
    %cst_16 = arith.constant dense<0xFF800000> : vector<2x16xf32>
    %28 = vector.multi_reduction <maximumf>, %27, %cst_16 [2] : vector<2x16x16xf32> to vector<2x16xf32>
    %29 = vector.shape_cast %28 : vector<2x16xf32> to vector<2x16x1xf32>
    %30 = vector.broadcast %29 : vector<2x16x1xf32> to vector<2x16x16xf32>
    %31 = arith.subf %27, %30 : vector<2x16x16xf32>
    %32 = math.exp %31 : vector<2x16x16xf32>
    %cst_17 = arith.constant dense<0.000000e+00> : vector<2x16xf32>
    %33 = vector.multi_reduction <add>, %32, %cst_17 [2] : vector<2x16x16xf32> to vector<2x16xf32>
    %34 = vector.shape_cast %33 : vector<2x16xf32> to vector<2x16x1xf32>
    %35 = tpu.reciprocal %34 {approx = true} : vector<2x16x1xf32> -> vector<2x16x1xf32>
    %36 = arith.mulf %34, %35 : vector<2x16x1xf32>
    %cst_18 = arith.constant 2.000000e+00 : f32
    %37 = vector.broadcast %cst_18 : f32 to vector<2x16x1xf32>
    %38 = arith.subf %37, %36 : vector<2x16x1xf32>
    %39 = arith.mulf %35, %38 : vector<2x16x1xf32>
    %40 = vector.broadcast %39 : vector<2x16x1xf32> to vector<2x16x16xf32>
    %41 = arith.mulf %32, %40 : vector<2x16x16xf32>
    "tpu.trace_start"() <{level = 10 : i32, message = "bqk,bkd->bqd"}> : () -> ()
    %cst_19 = arith.constant dense<0.000000e+00> : vector<2x16x8xf32>
    %42 = tpu.matmul %41, %26, %cst_19 {dimension_numbers = #tpu.dot_dimension_numbers<[2], [1], [1], [2], [0, 0, 0, 1, 1, 2], [0], [0]>} : vector<2x16x16xf32>, vector<2x16x8xf32>, vector<2x16x8xf32> -> vector<2x16x8xf32>
    "tpu.trace_stop"() : () -> ()
    %43 = vector.extract_strided_slice %12 {offsets = [0, 8], sizes = [32, 8], strides = [1, 1]} : vector<32x64xf32> to vector<32x8xf32>
    %cst_20 = arith.constant 0.353553385 : f32
    %44 = vector.broadcast %cst_20 : f32 to vector<32x8xf32>
    %45 = arith.mulf %43, %44 : vector<32x8xf32>
    %46 = vector.shape_cast %45 : vector<32x8xf32> to vector<2x16x8xf32>
    %47 = vector.extract_strided_slice %12 {offsets = [0, 40], sizes = [32, 8], strides = [1, 1]} : vector<32x64xf32> to vector<32x8xf32>
    %48 = vector.shape_cast %47 : vector<32x8xf32> to vector<2x16x8xf32>
    %49 = vector.extract_strided_slice %18 {offsets = [0, 8], sizes = [32, 8], strides = [1, 1]} : vector<32x32xf32> to vector<32x8xf32>
    %50 = vector.shape_cast %49 : vector<32x8xf32> to vector<2x16x8xf32>
    "tpu.trace_start"() <{level = 10 : i32, message = "bqd,bkd->bqk"}> : () -> ()
    %cst_21 = arith.constant dense<0.000000e+00> : vector<2x16x16xf32>
    %51 = tpu.matmul %46, %48, %cst_21 {dimension_numbers = #tpu.dot_dimension_numbers<[2], [2], [1], [1], [0, 0, 0, 1, 1, 1], [0], [0]>} : vector<2x16x8xf32>, vector<2x16x8xf32>, vector<2x16x16xf32> -> vector<2x16x16xf32>
    "tpu.trace_stop"() : () -> ()
    %cst_22 = arith.constant dense<0xFF800000> : vector<2x16xf32>
    %52 = vector.multi_reduction <maximumf>, %51, %cst_22 [2] : vector<2x16x16xf32> to vector<2x16xf32>
    %53 = vector.shape_cast %52 : vector<2x16xf32> to vector<2x16x1xf32>
    %54 = vector.broadcast %53 : vector<2x16x1xf32> to vector<2x16x16xf32>
    %55 = arith.subf %51, %54 : vector<2x16x16xf32>
    %56 = math.exp %55 : vector<2x16x16xf32>
    %cst_23 = arith.constant dense<0.000000e+00> : vector<2x16xf32>
    %57 = vector.multi_reduction <add>, %56, %cst_23 [2] : vector<2x16x16xf32> to vector<2x16xf32>
    %58 = vector.shape_cast %57 : vector<2x16xf32> to vector<2x16x1xf32>
    %59 = tpu.reciprocal %58 {approx = true} : vector<2x16x1xf32> -> vector<2x16x1xf32>
    %60 = arith.mulf %58, %59 : vector<2x16x1xf32>
    %cst_24 = arith.constant 2.000000e+00 : f32
    %61 = vector.broadcast %cst_24 : f32 to vector<2x16x1xf32>
    %62 = arith.subf %61, %60 : vector<2x16x1xf32>
    %63 = arith.mulf %59, %62 : vector<2x16x1xf32>
    %64 = vector.broadcast %63 : vector<2x16x1xf32> to vector<2x16x16xf32>
    %65 = arith.mulf %56, %64 : vector<2x16x16xf32>
    "tpu.trace_start"() <{level = 10 : i32, message = "bqk,bkd->bqd"}> : () -> ()
    %cst_25 = arith.constant dense<0.000000e+00> : vector<2x16x8xf32>
    %66 = tpu.matmul %65, %50, %cst_25 {dimension_numbers = #tpu.dot_dimension_numbers<[2], [1], [1], [2], [0, 0, 0, 1, 1, 2], [0], [0]>} : vector<2x16x16xf32>, vector<2x16x8xf32>, vector<2x16x8xf32> -> vector<2x16x8xf32>
    "tpu.trace_stop"() : () -> ()
    %67 = vector.extract_strided_slice %12 {offsets = [0, 16], sizes = [32, 8], strides = [1, 1]} : vector<32x64xf32> to vector<32x8xf32>
    %cst_26 = arith.constant 0.353553385 : f32
    %68 = vector.broadcast %cst_26 : f32 to vector<32x8xf32>
    %69 = arith.mulf %67, %68 : vector<32x8xf32>
    %70 = vector.shape_cast %69 : vector<32x8xf32> to vector<2x16x8xf32>
    %71 = vector.extract_strided_slice %12 {offsets = [0, 48], sizes = [32, 8], strides = [1, 1]} : vector<32x64xf32> to vector<32x8xf32>
    %72 = vector.shape_cast %71 : vector<32x8xf32> to vector<2x16x8xf32>
    %73 = vector.extract_strided_slice %18 {offsets = [0, 16], sizes = [32, 8], strides = [1, 1]} : vector<32x32xf32> to vector<32x8xf32>
    %74 = vector.shape_cast %73 : vector<32x8xf32> to vector<2x16x8xf32>
    "tpu.trace_start"() <{level = 10 : i32, message = "bqd,bkd->bqk"}> : () -> ()
    %cst_27 = arith.constant dense<0.000000e+00> : vector<2x16x16xf32>
    %75 = tpu.matmul %70, %72, %cst_27 {dimension_numbers = #tpu.dot_dimension_numbers<[2], [2], [1], [1], [0, 0, 0, 1, 1, 1], [0], [0]>} : vector<2x16x8xf32>, vector<2x16x8xf32>, vector<2x16x16xf32> -> vector<2x16x16xf32>
    "tpu.trace_stop"() : () -> ()
    %cst_28 = arith.constant dense<0xFF800000> : vector<2x16xf32>
    %76 = vector.multi_reduction <maximumf>, %75, %cst_28 [2] : vector<2x16x16xf32> to vector<2x16xf32>
    %77 = vector.shape_cast %76 : vector<2x16xf32> to vector<2x16x1xf32>
    %78 = vector.broadcast %77 : vector<2x16x1xf32> to vector<2x16x16xf32>
    %79 = arith.subf %75, %78 : vector<2x16x16xf32>
    %80 = math.exp %79 : vector<2x16x16xf32>
    %cst_29 = arith.constant dense<0.000000e+00> : vector<2x16xf32>
    %81 = vector.multi_reduction <add>, %80, %cst_29 [2] : vector<2x16x16xf32> to vector<2x16xf32>
    %82 = vector.shape_cast %81 : vector<2x16xf32> to vector<2x16x1xf32>
    %83 = tpu.reciprocal %82 {approx = true} : vector<2x16x1xf32> -> vector<2x16x1xf32>
    %84 = arith.mulf %82, %83 : vector<2x16x1xf32>
    %cst_30 = arith.constant 2.000000e+00 : f32
    %85 = vector.broadcast %cst_30 : f32 to vector<2x16x1xf32>
    %86 = arith.subf %85, %84 : vector<2x16x1xf32>
    %87 = arith.mulf %83, %86 : vector<2x16x1xf32>
    %88 = vector.broadcast %87 : vector<2x16x1xf32> to vector<2x16x16xf32>
    %89 = arith.mulf %80, %88 : vector<2x16x16xf32>
    "tpu.trace_start"() <{level = 10 : i32, message = "bqk,bkd->bqd"}> : () -> ()
    %cst_31 = arith.constant dense<0.000000e+00> : vector<2x16x8xf32>
    %90 = tpu.matmul %89, %74, %cst_31 {dimension_numbers = #tpu.dot_dimension_numbers<[2], [1], [1], [2], [0, 0, 0, 1, 1, 2], [0], [0]>} : vector<2x16x16xf32>, vector<2x16x8xf32>, vector<2x16x8xf32> -> vector<2x16x8xf32>
    "tpu.trace_stop"() : () -> ()
    %91 = vector.extract_strided_slice %12 {offsets = [0, 24], sizes = [32, 8], strides = [1, 1]} : vector<32x64xf32> to vector<32x8xf32>
    %cst_32 = arith.constant 0.353553385 : f32
    %92 = vector.broadcast %cst_32 : f32 to vector<32x8xf32>
    %93 = arith.mulf %91, %92 : vector<32x8xf32>
    %94 = vector.shape_cast %93 : vector<32x8xf32> to vector<2x16x8xf32>
    %95 = vector.extract_strided_slice %12 {offsets = [0, 56], sizes = [32, 8], strides = [1, 1]} : vector<32x64xf32> to vector<32x8xf32>
    %96 = vector.shape_cast %95 : vector<32x8xf32> to vector<2x16x8xf32>
    %97 = vector.extract_strided_slice %18 {offsets = [0, 24], sizes = [32, 8], strides = [1, 1]} : vector<32x32xf32> to vector<32x8xf32>
    %98 = vector.shape_cast %97 : vector<32x8xf32> to vector<2x16x8xf32>
    "tpu.trace_start"() <{level = 10 : i32, message = "bqd,bkd->bqk"}> : () -> ()
    %cst_33 = arith.constant dense<0.000000e+00> : vector<2x16x16xf32>
    %99 = tpu.matmul %94, %96, %cst_33 {dimension_numbers = #tpu.dot_dimension_numbers<[2], [2], [1], [1], [0, 0, 0, 1, 1, 1], [0], [0]>} : vector<2x16x8xf32>, vector<2x16x8xf32>, vector<2x16x16xf32> -> vector<2x16x16xf32>
    "tpu.trace_stop"() : () -> ()
    %cst_34 = arith.constant dense<0xFF800000> : vector<2x16xf32>
    %100 = vector.multi_reduction <maximumf>, %99, %cst_34 [2] : vector<2x16x16xf32> to vector<2x16xf32>
    %101 = vector.shape_cast %100 : vector<2x16xf32> to vector<2x16x1xf32>
    %102 = vector.broadcast %101 : vector<2x16x1xf32> to vector<2x16x16xf32>
    %103 = arith.subf %99, %102 : vector<2x16x16xf32>
    %104 = math.exp %103 : vector<2x16x16xf32>
    %cst_35 = arith.constant dense<0.000000e+00> : vector<2x16xf32>
    %105 = vector.multi_reduction <add>, %104, %cst_35 [2] : vector<2x16x16xf32> to vector<2x16xf32>
    %106 = vector.shape_cast %105 : vector<2x16xf32> to vector<2x16x1xf32>
    %107 = tpu.reciprocal %106 {approx = true} : vector<2x16x1xf32> -> vector<2x16x1xf32>
    %108 = arith.mulf %106, %107 : vector<2x16x1xf32>
    %cst_36 = arith.constant 2.000000e+00 : f32
    %109 = vector.broadcast %cst_36 : f32 to vector<2x16x1xf32>
    %110 = arith.subf %109, %108 : vector<2x16x1xf32>
    %111 = arith.mulf %107, %110 : vector<2x16x1xf32>
    %112 = vector.broadcast %111 : vector<2x16x1xf32> to vector<2x16x16xf32>
    %113 = arith.mulf %104, %112 : vector<2x16x16xf32>
    "tpu.trace_start"() <{level = 10 : i32, message = "bqk,bkd->bqd"}> : () -> ()
    %cst_37 = arith.constant dense<0.000000e+00> : vector<2x16x8xf32>
    %114 = tpu.matmul %113, %98, %cst_37 {dimension_numbers = #tpu.dot_dimension_numbers<[2], [1], [1], [2], [0, 0, 0, 1, 1, 2], [0], [0]>} : vector<2x16x16xf32>, vector<2x16x8xf32>, vector<2x16x8xf32> -> vector<2x16x8xf32>
    "tpu.trace_stop"() : () -> ()
    %115 = tpu.concatenate %42, %66, %90, %114 in 2 : vector<2x16x8xf32>, vector<2x16x8xf32>, vector<2x16x8xf32>, vector<2x16x8xf32> -> vector<2x16x32xf32>
    %116 = vector.shape_cast %115 : vector<2x16x32xf32> to vector<32x32xf32>
    %c0_38 = arith.constant 0 : index
    %c0_39 = arith.constant 0 : index
    %c0_40 = arith.constant 0 : index
    %117 = vector.load %arg4[%c0_38, %c0_39, %c0_40] : memref<2x32x32xf32, #tpu.memory_space<vmem>>, vector<1x32x32xf32>
    %118 = vector.shape_cast %117 : vector<1x32x32xf32> to vector<32x32xf32>
    %cst_41 = arith.constant dense<0.000000e+00> : vector<32x32xf32>
    %119 = tpu.matmul %116, %118, %cst_41 {dimension_numbers = #tpu.dot_dimension_numbers<[1], [0], [0], [1], [0, 0, 1, 1], [], []>} : vector<32x32xf32>, vector<32x32xf32>, vector<32x32xf32> -> vector<32x32xf32>
    %c0_42 = arith.constant 0 : index
    %c1 = arith.constant 1 : index
    %c0_43 = arith.constant 0 : index
    %120 = vector.load %arg6[%c0_42, %c1, %c0_43] : memref<2x8x96xf32, #tpu.memory_space<vmem>>, vector<1x1x32xf32>
    %121 = vector.shape_cast %120 : vector<1x1x32xf32> to vector<1x32xf32>
    %122 = vector.broadcast %121 : vector<1x32xf32> to vector<32x32xf32>
    %123 = arith.addf %119, %122 : vector<32x32xf32>
    %124 = arith.addf %1, %123 : vector<32x32xf32>
    %c0_44 = arith.constant 0 : index
    %c4 = arith.constant 4 : index
    %c0_45 = arith.constant 0 : index
    %125 = vector.load %arg6[%c0_44, %c4, %c0_45] : memref<2x8x96xf32, #tpu.memory_space<vmem>>, vector<1x1x32xf32>
    %126 = vector.shape_cast %125 : vector<1x1x32xf32> to vector<1x32xf32>
    %c0_46 = arith.constant 0 : index
    %c5 = arith.constant 5 : index
    %c0_47 = arith.constant 0 : index
    %127 = vector.load %arg6[%c0_46, %c5, %c0_47] : memref<2x8x96xf32, #tpu.memory_space<vmem>>, vector<1x1x32xf32>
    %128 = vector.shape_cast %127 : vector<1x1x32xf32> to vector<1x32xf32>
    %cst_48 = arith.constant dense<0.000000e+00> : vector<32xf32>
    %129 = vector.multi_reduction <add>, %124, %cst_48 [1] : vector<32x32xf32> to vector<32xf32>
    %130 = vector.shape_cast %129 : vector<32xf32> to vector<32x1xf32>
    %cst_49 = arith.constant 3.200000e+01 : f32
    %131 = vector.broadcast %cst_49 : f32 to vector<32x1xf32>
    %132 = arith.divf %130, %131 : vector<32x1xf32>
    %133 = vector.broadcast %132 : vector<32x1xf32> to vector<32x32xf32>
    %134 = arith.subf %124, %133 : vector<32x32xf32>
    %135 = arith.mulf %134, %134 : vector<32x32xf32>
    %cst_50 = arith.constant dense<0.000000e+00> : vector<32xf32>
    %136 = vector.multi_reduction <add>, %135, %cst_50 [1] : vector<32x32xf32> to vector<32xf32>
    %137 = vector.shape_cast %136 : vector<32xf32> to vector<32x1xf32>
    %cst_51 = arith.constant 3.200000e+01 : f32
    %138 = vector.broadcast %cst_51 : f32 to vector<32x1xf32>
    %139 = arith.divf %137, %138 : vector<32x1xf32>
    %cst_52 = arith.constant 9.99999974E-6 : f32
    %140 = vector.broadcast %cst_52 : f32 to vector<32x1xf32>
    %141 = arith.addf %139, %140 : vector<32x1xf32>
    %142 = math.rsqrt %141 : vector<32x1xf32>
    %143 = vector.broadcast %142 : vector<32x1xf32> to vector<32x32xf32>
    %144 = arith.mulf %134, %143 : vector<32x32xf32>
    %145 = vector.broadcast %126 : vector<1x32xf32> to vector<32x32xf32>
    %146 = arith.mulf %144, %145 : vector<32x32xf32>
    %147 = vector.broadcast %128 : vector<1x32xf32> to vector<32x32xf32>
    %148 = arith.addf %146, %147 : vector<32x32xf32>
    %c0_53 = arith.constant 0 : index
    %c0_54 = arith.constant 0 : index
    %c0_55 = arith.constant 0 : index
    %149 = vector.load %arg5[%c0_53, %c0_54, %c0_55] : memref<2x96x64xf32, #tpu.memory_space<vmem>>, vector<1x32x64xf32>
    %150 = vector.shape_cast %149 : vector<1x32x64xf32> to vector<32x64xf32>
    %cst_56 = arith.constant dense<0.000000e+00> : vector<32x64xf32>
    %151 = tpu.matmul %148, %150, %cst_56 {dimension_numbers = #tpu.dot_dimension_numbers<[1], [0], [0], [1], [0, 0, 1, 1], [], []>} : vector<32x32xf32>, vector<32x64xf32>, vector<32x64xf32> -> vector<32x64xf32>
    %c0_57 = arith.constant 0 : index
    %c2 = arith.constant 2 : index
    %c0_58 = arith.constant 0 : index
    %152 = vector.load %arg6[%c0_57, %c2, %c0_58] : memref<2x8x96xf32, #tpu.memory_space<vmem>>, vector<1x1x64xf32>
    %153 = vector.shape_cast %152 : vector<1x1x64xf32> to vector<1x64xf32>
    %154 = vector.broadcast %153 : vector<1x64xf32> to vector<32x64xf32>
    %155 = arith.addf %151, %154 : vector<32x64xf32>
    %cst_59 = arith.constant 0.000000e+00 : f32
    %156 = vector.broadcast %cst_59 : f32 to vector<32x64xf32>
    %157 = arith.maximumf %155, %156 : vector<32x64xf32>
    %c0_60 = arith.constant 0 : index
    %c32 = arith.constant 32 : index
    %c0_61 = arith.constant 0 : index
    %158 = vector.load %arg5[%c0_60, %c32, %c0_61] : memref<2x96x64xf32, #tpu.memory_space<vmem>>, vector<1x64x64xf32>
    %159 = vector.shape_cast %158 : vector<1x64x64xf32> to vector<64x64xf32>
    %cst_62 = arith.constant dense<0.000000e+00> : vector<32x64xf32>
    %160 = tpu.matmul %157, %159, %cst_62 {dimension_numbers = #tpu.dot_dimension_numbers<[1], [0], [0], [1], [0, 0, 1, 1], [], []>} : vector<32x64xf32>, vector<64x64xf32>, vector<32x64xf32> -> vector<32x64xf32>
    %161 = vector.extract_strided_slice %160 {offsets = [0, 0], sizes = [32, 32], strides = [1, 1]} : vector<32x64xf32> to vector<32x32xf32>
    %c0_63 = arith.constant 0 : index
    %c3 = arith.constant 3 : index
    %c0_64 = arith.constant 0 : index
    %162 = vector.load %arg6[%c0_63, %c3, %c0_64] : memref<2x8x96xf32, #tpu.memory_space<vmem>>, vector<1x1x32xf32>
    %163 = vector.shape_cast %162 : vector<1x1x32xf32> to vector<1x32xf32>
    %164 = vector.broadcast %163 : vector<1x32xf32> to vector<32x32xf32>
    %165 = arith.addf %161, %164 : vector<32x32xf32>
    %166 = arith.addf %148, %165 : vector<32x32xf32>
    %c0_65 = arith.constant 0 : index
    %c6 = arith.constant 6 : index
    %c0_66 = arith.constant 0 : index
    %167 = vector.load %arg6[%c0_65, %c6, %c0_66] : memref<2x8x96xf32, #tpu.memory_space<vmem>>, vector<1x1x32xf32>
    %168 = vector.shape_cast %167 : vector<1x1x32xf32> to vector<1x32xf32>
    %c0_67 = arith.constant 0 : index
    %c7 = arith.constant 7 : index
    %c0_68 = arith.constant 0 : index
    %169 = vector.load %arg6[%c0_67, %c7, %c0_68] : memref<2x8x96xf32, #tpu.memory_space<vmem>>, vector<1x1x32xf32>
    %170 = vector.shape_cast %169 : vector<1x1x32xf32> to vector<1x32xf32>
    %cst_69 = arith.constant dense<0.000000e+00> : vector<32xf32>
    %171 = vector.multi_reduction <add>, %166, %cst_69 [1] : vector<32x32xf32> to vector<32xf32>
    %172 = vector.shape_cast %171 : vector<32xf32> to vector<32x1xf32>
    %cst_70 = arith.constant 3.200000e+01 : f32
    %173 = vector.broadcast %cst_70 : f32 to vector<32x1xf32>
    %174 = arith.divf %172, %173 : vector<32x1xf32>
    %175 = vector.broadcast %174 : vector<32x1xf32> to vector<32x32xf32>
    %176 = arith.subf %166, %175 : vector<32x32xf32>
    %177 = arith.mulf %176, %176 : vector<32x32xf32>
    %cst_71 = arith.constant dense<0.000000e+00> : vector<32xf32>
    %178 = vector.multi_reduction <add>, %177, %cst_71 [1] : vector<32x32xf32> to vector<32xf32>
    %179 = vector.shape_cast %178 : vector<32xf32> to vector<32x1xf32>
    %cst_72 = arith.constant 3.200000e+01 : f32
    %180 = vector.broadcast %cst_72 : f32 to vector<32x1xf32>
    %181 = arith.divf %179, %180 : vector<32x1xf32>
    %cst_73 = arith.constant 9.99999974E-6 : f32
    %182 = vector.broadcast %cst_73 : f32 to vector<32x1xf32>
    %183 = arith.addf %181, %182 : vector<32x1xf32>
    %184 = math.rsqrt %183 : vector<32x1xf32>
    %185 = vector.broadcast %184 : vector<32x1xf32> to vector<32x32xf32>
    %186 = arith.mulf %176, %185 : vector<32x32xf32>
    %187 = vector.broadcast %168 : vector<1x32xf32> to vector<32x32xf32>
    %188 = arith.mulf %186, %187 : vector<32x32xf32>
    %189 = vector.broadcast %170 : vector<1x32xf32> to vector<32x32xf32>
    %190 = arith.addf %188, %189 : vector<32x32xf32>
    %c1_74 = arith.constant 1 : index
    %c0_75 = arith.constant 0 : index
    %c0_76 = arith.constant 0 : index
    %191 = vector.load %arg6[%c1_74, %c0_75, %c0_76] : memref<2x8x96xf32, #tpu.memory_space<vmem>>, vector<1x1x96xf32>
    %192 = vector.shape_cast %191 : vector<1x1x96xf32> to vector<1x96xf32>
    %193 = arith.addf %190, %3 : vector<32x32xf32>
    %c1_77 = arith.constant 1 : index
    %c0_78 = arith.constant 0 : index
    %c0_79 = arith.constant 0 : index
    %194 = vector.load %arg3[%c1_77, %c0_78, %c0_79] : memref<2x32x96xf32, #tpu.memory_space<vmem>>, vector<1x32x64xf32>
    %195 = vector.shape_cast %194 : vector<1x32x64xf32> to vector<32x64xf32>
    %cst_80 = arith.constant dense<0.000000e+00> : vector<32x64xf32>
    %196 = tpu.matmul %193, %195, %cst_80 {dimension_numbers = #tpu.dot_dimension_numbers<[1], [0], [0], [1], [0, 0, 1, 1], [], []>} : vector<32x32xf32>, vector<32x64xf32>, vector<32x64xf32> -> vector<32x64xf32>
    %197 = vector.extract_strided_slice %192 {offsets = [0, 0], sizes = [1, 64], strides = [1, 1]} : vector<1x96xf32> to vector<1x64xf32>
    %198 = vector.broadcast %197 : vector<1x64xf32> to vector<32x64xf32>
    %199 = arith.addf %196, %198 : vector<32x64xf32>
    %c1_81 = arith.constant 1 : index
    %c0_82 = arith.constant 0 : index
    %c64_83 = arith.constant 64 : index
    %200 = vector.load %arg3[%c1_81, %c0_82, %c64_83] : memref<2x32x96xf32, #tpu.memory_space<vmem>>, vector<1x32x32xf32>
    %201 = vector.shape_cast %200 : vector<1x32x32xf32> to vector<32x32xf32>
    %cst_84 = arith.constant dense<0.000000e+00> : vector<32x32xf32>
    %202 = tpu.matmul %190, %201, %cst_84 {dimension_numbers = #tpu.dot_dimension_numbers<[1], [0], [0], [1], [0, 0, 1, 1], [], []>} : vector<32x32xf32>, vector<32x32xf32>, vector<32x32xf32> -> vector<32x32xf32>
    %203 = vector.extract_strided_slice %192 {offsets = [0, 64], sizes = [1, 32], strides = [1, 1]} : vector<1x96xf32> to vector<1x32xf32>
    %204 = vector.broadcast %203 : vector<1x32xf32> to vector<32x32xf32>
    %205 = arith.addf %202, %204 : vector<32x32xf32>
    %206 = vector.extract_strided_slice %199 {offsets = [0, 0], sizes = [32, 8], strides = [1, 1]} : vector<32x64xf32> to vector<32x8xf32>
    %cst_85 = arith.constant 0.353553385 : f32
    %207 = vector.broadcast %cst_85 : f32 to vector<32x8xf32>
    %208 = arith.mulf %206, %207 : vector<32x8xf32>
    %209 = vector.shape_cast %208 : vector<32x8xf32> to vector<2x16x8xf32>
    %210 = vector.extract_strided_slice %199 {offsets = [0, 32], sizes = [32, 8], strides = [1, 1]} : vector<32x64xf32> to vector<32x8xf32>
    %211 = vector.shape_cast %210 : vector<32x8xf32> to vector<2x16x8xf32>
    %212 = vector.extract_strided_slice %205 {offsets = [0, 0], sizes = [32, 8], strides = [1, 1]} : vector<32x32xf32> to vector<32x8xf32>
    %213 = vector.shape_cast %212 : vector<32x8xf32> to vector<2x16x8xf32>
    "tpu.trace_start"() <{level = 10 : i32, message = "bqd,bkd->bqk"}> : () -> ()
    %cst_86 = arith.constant dense<0.000000e+00> : vector<2x16x16xf32>
    %214 = tpu.matmul %209, %211, %cst_86 {dimension_numbers = #tpu.dot_dimension_numbers<[2], [2], [1], [1], [0, 0, 0, 1, 1, 1], [0], [0]>} : vector<2x16x8xf32>, vector<2x16x8xf32>, vector<2x16x16xf32> -> vector<2x16x16xf32>
    "tpu.trace_stop"() : () -> ()
    %cst_87 = arith.constant dense<0xFF800000> : vector<2x16xf32>
    %215 = vector.multi_reduction <maximumf>, %214, %cst_87 [2] : vector<2x16x16xf32> to vector<2x16xf32>
    %216 = vector.shape_cast %215 : vector<2x16xf32> to vector<2x16x1xf32>
    %217 = vector.broadcast %216 : vector<2x16x1xf32> to vector<2x16x16xf32>
    %218 = arith.subf %214, %217 : vector<2x16x16xf32>
    %219 = math.exp %218 : vector<2x16x16xf32>
    %cst_88 = arith.constant dense<0.000000e+00> : vector<2x16xf32>
    %220 = vector.multi_reduction <add>, %219, %cst_88 [2] : vector<2x16x16xf32> to vector<2x16xf32>
    %221 = vector.shape_cast %220 : vector<2x16xf32> to vector<2x16x1xf32>
    %222 = tpu.reciprocal %221 {approx = true} : vector<2x16x1xf32> -> vector<2x16x1xf32>
    %223 = arith.mulf %221, %222 : vector<2x16x1xf32>
    %cst_89 = arith.constant 2.000000e+00 : f32
    %224 = vector.broadcast %cst_89 : f32 to vector<2x16x1xf32>
    %225 = arith.subf %224, %223 : vector<2x16x1xf32>
    %226 = arith.mulf %222, %225 : vector<2x16x1xf32>
    %227 = vector.broadcast %226 : vector<2x16x1xf32> to vector<2x16x16xf32>
    %228 = arith.mulf %219, %227 : vector<2x16x16xf32>
    "tpu.trace_start"() <{level = 10 : i32, message = "bqk,bkd->bqd"}> : () -> ()
    %cst_90 = arith.constant dense<0.000000e+00> : vector<2x16x8xf32>
    %229 = tpu.matmul %228, %213, %cst_90 {dimension_numbers = #tpu.dot_dimension_numbers<[2], [1], [1], [2], [0, 0, 0, 1, 1, 2], [0], [0]>} : vector<2x16x16xf32>, vector<2x16x8xf32>, vector<2x16x8xf32> -> vector<2x16x8xf32>
    "tpu.trace_stop"() : () -> ()
    %230 = vector.extract_strided_slice %199 {offsets = [0, 8], sizes = [32, 8], strides = [1, 1]} : vector<32x64xf32> to vector<32x8xf32>
    %cst_91 = arith.constant 0.353553385 : f32
    %231 = vector.broadcast %cst_91 : f32 to vector<32x8xf32>
    %232 = arith.mulf %230, %231 : vector<32x8xf32>
    %233 = vector.shape_cast %232 : vector<32x8xf32> to vector<2x16x8xf32>
    %234 = vector.extract_strided_slice %199 {offsets = [0, 40], sizes = [32, 8], strides = [1, 1]} : vector<32x64xf32> to vector<32x8xf32>
    %235 = vector.shape_cast %234 : vector<32x8xf32> to vector<2x16x8xf32>
    %236 = vector.extract_strided_slice %205 {offsets = [0, 8], sizes = [32, 8], strides = [1, 1]} : vector<32x32xf32> to vector<32x8xf32>
    %237 = vector.shape_cast %236 : vector<32x8xf32> to vector<2x16x8xf32>
    "tpu.trace_start"() <{level = 10 : i32, message = "bqd,bkd->bqk"}> : () -> ()
    %cst_92 = arith.constant dense<0.000000e+00> : vector<2x16x16xf32>
    %238 = tpu.matmul %233, %235, %cst_92 {dimension_numbers = #tpu.dot_dimension_numbers<[2], [2], [1], [1], [0, 0, 0, 1, 1, 1], [0], [0]>} : vector<2x16x8xf32>, vector<2x16x8xf32>, vector<2x16x16xf32> -> vector<2x16x16xf32>
    "tpu.trace_stop"() : () -> ()
    %cst_93 = arith.constant dense<0xFF800000> : vector<2x16xf32>
    %239 = vector.multi_reduction <maximumf>, %238, %cst_93 [2] : vector<2x16x16xf32> to vector<2x16xf32>
    %240 = vector.shape_cast %239 : vector<2x16xf32> to vector<2x16x1xf32>
    %241 = vector.broadcast %240 : vector<2x16x1xf32> to vector<2x16x16xf32>
    %242 = arith.subf %238, %241 : vector<2x16x16xf32>
    %243 = math.exp %242 : vector<2x16x16xf32>
    %cst_94 = arith.constant dense<0.000000e+00> : vector<2x16xf32>
    %244 = vector.multi_reduction <add>, %243, %cst_94 [2] : vector<2x16x16xf32> to vector<2x16xf32>
    %245 = vector.shape_cast %244 : vector<2x16xf32> to vector<2x16x1xf32>
    %246 = tpu.reciprocal %245 {approx = true} : vector<2x16x1xf32> -> vector<2x16x1xf32>
    %247 = arith.mulf %245, %246 : vector<2x16x1xf32>
    %cst_95 = arith.constant 2.000000e+00 : f32
    %248 = vector.broadcast %cst_95 : f32 to vector<2x16x1xf32>
    %249 = arith.subf %248, %247 : vector<2x16x1xf32>
    %250 = arith.mulf %246, %249 : vector<2x16x1xf32>
    %251 = vector.broadcast %250 : vector<2x16x1xf32> to vector<2x16x16xf32>
    %252 = arith.mulf %243, %251 : vector<2x16x16xf32>
    "tpu.trace_start"() <{level = 10 : i32, message = "bqk,bkd->bqd"}> : () -> ()
    %cst_96 = arith.constant dense<0.000000e+00> : vector<2x16x8xf32>
    %253 = tpu.matmul %252, %237, %cst_96 {dimension_numbers = #tpu.dot_dimension_numbers<[2], [1], [1], [2], [0, 0, 0, 1, 1, 2], [0], [0]>} : vector<2x16x16xf32>, vector<2x16x8xf32>, vector<2x16x8xf32> -> vector<2x16x8xf32>
    "tpu.trace_stop"() : () -> ()
    %254 = vector.extract_strided_slice %199 {offsets = [0, 16], sizes = [32, 8], strides = [1, 1]} : vector<32x64xf32> to vector<32x8xf32>
    %cst_97 = arith.constant 0.353553385 : f32
    %255 = vector.broadcast %cst_97 : f32 to vector<32x8xf32>
    %256 = arith.mulf %254, %255 : vector<32x8xf32>
    %257 = vector.shape_cast %256 : vector<32x8xf32> to vector<2x16x8xf32>
    %258 = vector.extract_strided_slice %199 {offsets = [0, 48], sizes = [32, 8], strides = [1, 1]} : vector<32x64xf32> to vector<32x8xf32>
    %259 = vector.shape_cast %258 : vector<32x8xf32> to vector<2x16x8xf32>
    %260 = vector.extract_strided_slice %205 {offsets = [0, 16], sizes = [32, 8], strides = [1, 1]} : vector<32x32xf32> to vector<32x8xf32>
    %261 = vector.shape_cast %260 : vector<32x8xf32> to vector<2x16x8xf32>
    "tpu.trace_start"() <{level = 10 : i32, message = "bqd,bkd->bqk"}> : () -> ()
    %cst_98 = arith.constant dense<0.000000e+00> : vector<2x16x16xf32>
    %262 = tpu.matmul %257, %259, %cst_98 {dimension_numbers = #tpu.dot_dimension_numbers<[2], [2], [1], [1], [0, 0, 0, 1, 1, 1], [0], [0]>} : vector<2x16x8xf32>, vector<2x16x8xf32>, vector<2x16x16xf32> -> vector<2x16x16xf32>
    "tpu.trace_stop"() : () -> ()
    %cst_99 = arith.constant dense<0xFF800000> : vector<2x16xf32>
    %263 = vector.multi_reduction <maximumf>, %262, %cst_99 [2] : vector<2x16x16xf32> to vector<2x16xf32>
    %264 = vector.shape_cast %263 : vector<2x16xf32> to vector<2x16x1xf32>
    %265 = vector.broadcast %264 : vector<2x16x1xf32> to vector<2x16x16xf32>
    %266 = arith.subf %262, %265 : vector<2x16x16xf32>
    %267 = math.exp %266 : vector<2x16x16xf32>
    %cst_100 = arith.constant dense<0.000000e+00> : vector<2x16xf32>
    %268 = vector.multi_reduction <add>, %267, %cst_100 [2] : vector<2x16x16xf32> to vector<2x16xf32>
    %269 = vector.shape_cast %268 : vector<2x16xf32> to vector<2x16x1xf32>
    %270 = tpu.reciprocal %269 {approx = true} : vector<2x16x1xf32> -> vector<2x16x1xf32>
    %271 = arith.mulf %269, %270 : vector<2x16x1xf32>
    %cst_101 = arith.constant 2.000000e+00 : f32
    %272 = vector.broadcast %cst_101 : f32 to vector<2x16x1xf32>
    %273 = arith.subf %272, %271 : vector<2x16x1xf32>
    %274 = arith.mulf %270, %273 : vector<2x16x1xf32>
    %275 = vector.broadcast %274 : vector<2x16x1xf32> to vector<2x16x16xf32>
    %276 = arith.mulf %267, %275 : vector<2x16x16xf32>
    "tpu.trace_start"() <{level = 10 : i32, message = "bqk,bkd->bqd"}> : () -> ()
    %cst_102 = arith.constant dense<0.000000e+00> : vector<2x16x8xf32>
    %277 = tpu.matmul %276, %261, %cst_102 {dimension_numbers = #tpu.dot_dimension_numbers<[2], [1], [1], [2], [0, 0, 0, 1, 1, 2], [0], [0]>} : vector<2x16x16xf32>, vector<2x16x8xf32>, vector<2x16x8xf32> -> vector<2x16x8xf32>
    "tpu.trace_stop"() : () -> ()
    %278 = vector.extract_strided_slice %199 {offsets = [0, 24], sizes = [32, 8], strides = [1, 1]} : vector<32x64xf32> to vector<32x8xf32>
    %cst_103 = arith.constant 0.353553385 : f32
    %279 = vector.broadcast %cst_103 : f32 to vector<32x8xf32>
    %280 = arith.mulf %278, %279 : vector<32x8xf32>
    %281 = vector.shape_cast %280 : vector<32x8xf32> to vector<2x16x8xf32>
    %282 = vector.extract_strided_slice %199 {offsets = [0, 56], sizes = [32, 8], strides = [1, 1]} : vector<32x64xf32> to vector<32x8xf32>
    %283 = vector.shape_cast %282 : vector<32x8xf32> to vector<2x16x8xf32>
    %284 = vector.extract_strided_slice %205 {offsets = [0, 24], sizes = [32, 8], strides = [1, 1]} : vector<32x32xf32> to vector<32x8xf32>
    %285 = vector.shape_cast %284 : vector<32x8xf32> to vector<2x16x8xf32>
    "tpu.trace_start"() <{level = 10 : i32, message = "bqd,bkd->bqk"}> : () -> ()
    %cst_104 = arith.constant dense<0.000000e+00> : vector<2x16x16xf32>
    %286 = tpu.matmul %281, %283, %cst_104 {dimension_numbers = #tpu.dot_dimension_numbers<[2], [2], [1], [1], [0, 0, 0, 1, 1, 1], [0], [0]>} : vector<2x16x8xf32>, vector<2x16x8xf32>, vector<2x16x16xf32> -> vector<2x16x16xf32>
    "tpu.trace_stop"() : () -> ()
    %cst_105 = arith.constant dense<0xFF800000> : vector<2x16xf32>
    %287 = vector.multi_reduction <maximumf>, %286, %cst_105 [2] : vector<2x16x16xf32> to vector<2x16xf32>
    %288 = vector.shape_cast %287 : vector<2x16xf32> to vector<2x16x1xf32>
    %289 = vector.broadcast %288 : vector<2x16x1xf32> to vector<2x16x16xf32>
    %290 = arith.subf %286, %289 : vector<2x16x16xf32>
    %291 = math.exp %290 : vector<2x16x16xf32>
    %cst_106 = arith.constant dense<0.000000e+00> : vector<2x16xf32>
    %292 = vector.multi_reduction <add>, %291, %cst_106 [2] : vector<2x16x16xf32> to vector<2x16xf32>
    %293 = vector.shape_cast %292 : vector<2x16xf32> to vector<2x16x1xf32>
    %294 = tpu.reciprocal %293 {approx = true} : vector<2x16x1xf32> -> vector<2x16x1xf32>
    %295 = arith.mulf %293, %294 : vector<2x16x1xf32>
    %cst_107 = arith.constant 2.000000e+00 : f32
    %296 = vector.broadcast %cst_107 : f32 to vector<2x16x1xf32>
    %297 = arith.subf %296, %295 : vector<2x16x1xf32>
    %298 = arith.mulf %294, %297 : vector<2x16x1xf32>
    %299 = vector.broadcast %298 : vector<2x16x1xf32> to vector<2x16x16xf32>
    %300 = arith.mulf %291, %299 : vector<2x16x16xf32>
    "tpu.trace_start"() <{level = 10 : i32, message = "bqk,bkd->bqd"}> : () -> ()
    %cst_108 = arith.constant dense<0.000000e+00> : vector<2x16x8xf32>
    %301 = tpu.matmul %300, %285, %cst_108 {dimension_numbers = #tpu.dot_dimension_numbers<[2], [1], [1], [2], [0, 0, 0, 1, 1, 2], [0], [0]>} : vector<2x16x16xf32>, vector<2x16x8xf32>, vector<2x16x8xf32> -> vector<2x16x8xf32>
    "tpu.trace_stop"() : () -> ()
    %302 = tpu.concatenate %229, %253, %277, %301 in 2 : vector<2x16x8xf32>, vector<2x16x8xf32>, vector<2x16x8xf32>, vector<2x16x8xf32> -> vector<2x16x32xf32>
    %303 = vector.shape_cast %302 : vector<2x16x32xf32> to vector<32x32xf32>
    %c1_109 = arith.constant 1 : index
    %c0_110 = arith.constant 0 : index
    %c0_111 = arith.constant 0 : index
    %304 = vector.load %arg4[%c1_109, %c0_110, %c0_111] : memref<2x32x32xf32, #tpu.memory_space<vmem>>, vector<1x32x32xf32>
    %305 = vector.shape_cast %304 : vector<1x32x32xf32> to vector<32x32xf32>
    %cst_112 = arith.constant dense<0.000000e+00> : vector<32x32xf32>
    %306 = tpu.matmul %303, %305, %cst_112 {dimension_numbers = #tpu.dot_dimension_numbers<[1], [0], [0], [1], [0, 0, 1, 1], [], []>} : vector<32x32xf32>, vector<32x32xf32>, vector<32x32xf32> -> vector<32x32xf32>
    %c1_113 = arith.constant 1 : index
    %c1_114 = arith.constant 1 : index
    %c0_115 = arith.constant 0 : index
    %307 = vector.load %arg6[%c1_113, %c1_114, %c0_115] : memref<2x8x96xf32, #tpu.memory_space<vmem>>, vector<1x1x32xf32>
    %308 = vector.shape_cast %307 : vector<1x1x32xf32> to vector<1x32xf32>
    %309 = vector.broadcast %308 : vector<1x32xf32> to vector<32x32xf32>
    %310 = arith.addf %306, %309 : vector<32x32xf32>
    %311 = arith.addf %190, %310 : vector<32x32xf32>
    %c1_116 = arith.constant 1 : index
    %c4_117 = arith.constant 4 : index
    %c0_118 = arith.constant 0 : index
    %312 = vector.load %arg6[%c1_116, %c4_117, %c0_118] : memref<2x8x96xf32, #tpu.memory_space<vmem>>, vector<1x1x32xf32>
    %313 = vector.shape_cast %312 : vector<1x1x32xf32> to vector<1x32xf32>
    %c1_119 = arith.constant 1 : index
    %c5_120 = arith.constant 5 : index
    %c0_121 = arith.constant 0 : index
    %314 = vector.load %arg6[%c1_119, %c5_120, %c0_121] : memref<2x8x96xf32, #tpu.memory_space<vmem>>, vector<1x1x32xf32>
    %315 = vector.shape_cast %314 : vector<1x1x32xf32> to vector<1x32xf32>
    %cst_122 = arith.constant dense<0.000000e+00> : vector<32xf32>
    %316 = vector.multi_reduction <add>, %311, %cst_122 [1] : vector<32x32xf32> to vector<32xf32>
    %317 = vector.shape_cast %316 : vector<32xf32> to vector<32x1xf32>
    %cst_123 = arith.constant 3.200000e+01 : f32
    %318 = vector.broadcast %cst_123 : f32 to vector<32x1xf32>
    %319 = arith.divf %317, %318 : vector<32x1xf32>
    %320 = vector.broadcast %319 : vector<32x1xf32> to vector<32x32xf32>
    %321 = arith.subf %311, %320 : vector<32x32xf32>
    %322 = arith.mulf %321, %321 : vector<32x32xf32>
    %cst_124 = arith.constant dense<0.000000e+00> : vector<32xf32>
    %323 = vector.multi_reduction <add>, %322, %cst_124 [1] : vector<32x32xf32> to vector<32xf32>
    %324 = vector.shape_cast %323 : vector<32xf32> to vector<32x1xf32>
    %cst_125 = arith.constant 3.200000e+01 : f32
    %325 = vector.broadcast %cst_125 : f32 to vector<32x1xf32>
    %326 = arith.divf %324, %325 : vector<32x1xf32>
    %cst_126 = arith.constant 9.99999974E-6 : f32
    %327 = vector.broadcast %cst_126 : f32 to vector<32x1xf32>
    %328 = arith.addf %326, %327 : vector<32x1xf32>
    %329 = math.rsqrt %328 : vector<32x1xf32>
    %330 = vector.broadcast %329 : vector<32x1xf32> to vector<32x32xf32>
    %331 = arith.mulf %321, %330 : vector<32x32xf32>
    %332 = vector.broadcast %313 : vector<1x32xf32> to vector<32x32xf32>
    %333 = arith.mulf %331, %332 : vector<32x32xf32>
    %334 = vector.broadcast %315 : vector<1x32xf32> to vector<32x32xf32>
    %335 = arith.addf %333, %334 : vector<32x32xf32>
    %c1_127 = arith.constant 1 : index
    %c0_128 = arith.constant 0 : index
    %c0_129 = arith.constant 0 : index
    %336 = vector.load %arg5[%c1_127, %c0_128, %c0_129] : memref<2x96x64xf32, #tpu.memory_space<vmem>>, vector<1x32x64xf32>
    %337 = vector.shape_cast %336 : vector<1x32x64xf32> to vector<32x64xf32>
    %cst_130 = arith.constant dense<0.000000e+00> : vector<32x64xf32>
    %338 = tpu.matmul %335, %337, %cst_130 {dimension_numbers = #tpu.dot_dimension_numbers<[1], [0], [0], [1], [0, 0, 1, 1], [], []>} : vector<32x32xf32>, vector<32x64xf32>, vector<32x64xf32> -> vector<32x64xf32>
    %c1_131 = arith.constant 1 : index
    %c2_132 = arith.constant 2 : index
    %c0_133 = arith.constant 0 : index
    %339 = vector.load %arg6[%c1_131, %c2_132, %c0_133] : memref<2x8x96xf32, #tpu.memory_space<vmem>>, vector<1x1x64xf32>
    %340 = vector.shape_cast %339 : vector<1x1x64xf32> to vector<1x64xf32>
    %341 = vector.broadcast %340 : vector<1x64xf32> to vector<32x64xf32>
    %342 = arith.addf %338, %341 : vector<32x64xf32>
    %cst_134 = arith.constant 0.000000e+00 : f32
    %343 = vector.broadcast %cst_134 : f32 to vector<32x64xf32>
    %344 = arith.maximumf %342, %343 : vector<32x64xf32>
    %c1_135 = arith.constant 1 : index
    %c32_136 = arith.constant 32 : index
    %c0_137 = arith.constant 0 : index
    %345 = vector.load %arg5[%c1_135, %c32_136, %c0_137] : memref<2x96x64xf32, #tpu.memory_space<vmem>>, vector<1x64x64xf32>
    %346 = vector.shape_cast %345 : vector<1x64x64xf32> to vector<64x64xf32>
    %cst_138 = arith.constant dense<0.000000e+00> : vector<32x64xf32>
    %347 = tpu.matmul %344, %346, %cst_138 {dimension_numbers = #tpu.dot_dimension_numbers<[1], [0], [0], [1], [0, 0, 1, 1], [], []>} : vector<32x64xf32>, vector<64x64xf32>, vector<32x64xf32> -> vector<32x64xf32>
    %348 = vector.extract_strided_slice %347 {offsets = [0, 0], sizes = [32, 32], strides = [1, 1]} : vector<32x64xf32> to vector<32x32xf32>
    %c1_139 = arith.constant 1 : index
    %c3_140 = arith.constant 3 : index
    %c0_141 = arith.constant 0 : index
    %349 = vector.load %arg6[%c1_139, %c3_140, %c0_141] : memref<2x8x96xf32, #tpu.memory_space<vmem>>, vector<1x1x32xf32>
    %350 = vector.shape_cast %349 : vector<1x1x32xf32> to vector<1x32xf32>
    %351 = vector.broadcast %350 : vector<1x32xf32> to vector<32x32xf32>
    %352 = arith.addf %348, %351 : vector<32x32xf32>
    %353 = arith.addf %335, %352 : vector<32x32xf32>
    %c1_142 = arith.constant 1 : index
    %c6_143 = arith.constant 6 : index
    %c0_144 = arith.constant 0 : index
    %354 = vector.load %arg6[%c1_142, %c6_143, %c0_144] : memref<2x8x96xf32, #tpu.memory_space<vmem>>, vector<1x1x32xf32>
    %355 = vector.shape_cast %354 : vector<1x1x32xf32> to vector<1x32xf32>
    %c1_145 = arith.constant 1 : index
    %c7_146 = arith.constant 7 : index
    %c0_147 = arith.constant 0 : index
    %356 = vector.load %arg6[%c1_145, %c7_146, %c0_147] : memref<2x8x96xf32, #tpu.memory_space<vmem>>, vector<1x1x32xf32>
    %357 = vector.shape_cast %356 : vector<1x1x32xf32> to vector<1x32xf32>
    %cst_148 = arith.constant dense<0.000000e+00> : vector<32xf32>
    %358 = vector.multi_reduction <add>, %353, %cst_148 [1] : vector<32x32xf32> to vector<32xf32>
    %359 = vector.shape_cast %358 : vector<32xf32> to vector<32x1xf32>
    %cst_149 = arith.constant 3.200000e+01 : f32
    %360 = vector.broadcast %cst_149 : f32 to vector<32x1xf32>
    %361 = arith.divf %359, %360 : vector<32x1xf32>
    %362 = vector.broadcast %361 : vector<32x1xf32> to vector<32x32xf32>
    %363 = arith.subf %353, %362 : vector<32x32xf32>
    %364 = arith.mulf %363, %363 : vector<32x32xf32>
    %cst_150 = arith.constant dense<0.000000e+00> : vector<32xf32>
    %365 = vector.multi_reduction <add>, %364, %cst_150 [1] : vector<32x32xf32> to vector<32xf32>
    %366 = vector.shape_cast %365 : vector<32xf32> to vector<32x1xf32>
    %cst_151 = arith.constant 3.200000e+01 : f32
    %367 = vector.broadcast %cst_151 : f32 to vector<32x1xf32>
    %368 = arith.divf %366, %367 : vector<32x1xf32>
    %cst_152 = arith.constant 9.99999974E-6 : f32
    %369 = vector.broadcast %cst_152 : f32 to vector<32x1xf32>
    %370 = arith.addf %368, %369 : vector<32x1xf32>
    %371 = math.rsqrt %370 : vector<32x1xf32>
    %372 = vector.broadcast %371 : vector<32x1xf32> to vector<32x32xf32>
    %373 = arith.mulf %363, %372 : vector<32x32xf32>
    %374 = vector.broadcast %355 : vector<1x32xf32> to vector<32x32xf32>
    %375 = arith.mulf %373, %374 : vector<32x32xf32>
    %376 = vector.broadcast %357 : vector<1x32xf32> to vector<32x32xf32>
    %377 = arith.addf %375, %376 : vector<32x32xf32>
    %378 = vector.shape_cast %377 : vector<32x32xf32> to vector<2x16x32xf32>
    %c0_153 = arith.constant 0 : index
    %c0_154 = arith.constant 0 : index
    %c0_155 = arith.constant 0 : index
    %379 = vector.load %arg7[%c0_153, %c0_154, %c0_155] : memref<2x16x32xf32, #tpu.memory_space<vmem>>, vector<2x16x32xf32>
    tpu.vector_store %arg7[%c0_153, %c0_154, %c0_155], %378 {strides = array<i32>} : memref<2x16x32xf32, #tpu.memory_space<vmem>>, vector<2x16x32xf32>,
    return
  }
  func.func @transform_0(%arg0: i32) -> (i32, i32, i32) {
    %c0_i32 = arith.constant 0 : i32
    %c0_i32_0 = arith.constant 0 : i32
    %c0_i32_1 = arith.constant 0 : i32
    %c0_i32_2 = arith.constant 0 : i32
    return %c0_i32, %c0_i32_0, %c0_i32_1 : i32, i32, i32
  }
  func.func @transform_1(%arg0: i32) -> (i32, i32, i32) {
    %c0_i32 = arith.constant 0 : i32
    %c0_i32_0 = arith.constant 0 : i32
    %c0_i32_1 = arith.constant 0 : i32
    %c0_i32_2 = arith.constant 0 : i32
    return %c0_i32, %c0_i32_0, %c0_i32_1 : i32, i32, i32
  }
  func.func @transform_2(%arg0: i32) -> (i32, i32, i32) {
    %c0_i32 = arith.constant 0 : i32
    %c0_i32_0 = arith.constant 0 : i32
    %c0_i32_1 = arith.constant 0 : i32
    %c0_i32_2 = arith.constant 0 : i32
    return %c0_i32, %c0_i32_0, %c0_i32_1 : i32, i32, i32
  }
  func.func @transform_3(%arg0: i32) -> (i32, i32, i32) {
    %c0_i32 = arith.constant 0 : i32
    %c0_i32_0 = arith.constant 0 : i32
    %c0_i32_1 = arith.constant 0 : i32
    %c0_i32_2 = arith.constant 0 : i32
    return %c0_i32, %c0_i32_0, %c0_i32_1 : i32, i32, i32
  }
  func.func @transform_4(%arg0: i32) -> (i32, i32, i32) {
    %c0_i32 = arith.constant 0 : i32
    %c0_i32_0 = arith.constant 0 : i32
    %c0_i32_1 = arith.constant 0 : i32
    %c0_i32_2 = arith.constant 0 : i32
    return %c0_i32, %c0_i32_0, %c0_i32_1 : i32, i32, i32
  }
  func.func @transform_5(%arg0: i32) -> (i32, i32, i32) {
    %c0_i32 = arith.constant 0 : i32
    %c0_i32_0 = arith.constant 0 : i32
    %c0_i32_1 = arith.constant 0 : i32
    %c0_i32_2 = arith.constant 0 : i32
    return %c0_i32, %c0_i32_0, %c0_i32_1 : i32, i32, i32
  }
  func.func @transform_6(%arg0: i32) -> (i32, i32, i32) {
    %c0_i32 = arith.constant 0 : i32
    %c0_i32_0 = arith.constant 0 : i32
    %c0_i32_1 = arith.constant 0 : i32
    %c0_i32_2 = arith.constant 0 : i32
    return %c0_i32, %c0_i32_0, %c0_i32_1 : i32, i32, i32
  }
}

</mosaic_0001>

<llo_original>
// kernel: transformer_encoder.1
$region0: #{transformer_encoder.1}
  #allocation0 [shape = 'u32[]', space=smem, size = 0x4, offset = 0x4, fixed_abs, tag = 'smem constant byte address 0x4 - core index']
  #allocation1 [shape = 'u32[144,128]{1,0:T(1,128)}', space=vmem, size = 0x12000, scoped, tag = 'internal scratch']
  %s0 = inlined_call_operand.vmem [shape: f32[2,16,32], index: 0, kind: input, shape index: {}]
  %s1 = inlined_call_operand.vmem [shape: f32[2,16,32], index: 1, kind: input, shape index: {}]
  %s2 = inlined_call_operand.vmem [shape: f32[2,32,96], index: 2, kind: input, shape index: {}]
  %s3 = inlined_call_operand.vmem [shape: f32[2,32,32], index: 3, kind: input, shape index: {}]
  %s4 = inlined_call_operand.vmem [shape: f32[2,96,64], index: 4, kind: input, shape index: {}]
  %s5 = inlined_call_operand.vmem [shape: f32[2,8,96], index: 5, kind: input, shape index: {}]
  %s6 = inlined_call_operand.hbm [shape: f32[2,16,32], index: 6, kind: output, shape index: {}]
  %s7 = sld [smem:[#allocation0]]
  $region34: #{transformer_encoder.1} parent=0
    _
  %s9 = ssub.s32 1, %s7
  %s10 = scalar_select 0, %s9, %s7
  $region1: #{transformer_encoder.1} parent=0
    #allocation2 [shape = 'u8[16384]{0}', space=vmem, size = 0x4000, scoped, tag = 'output window, operand 0, single buffered']
    #allocation3 [shape = 's32[1]{0}', space=sflag, size = 0x4, scoped, tag = 'scoped memory for transformer_encoder.1']
    %11 = vsyncpa [#allocation3], 0
    // Predicated region
    $region2: #{transformer_encoder.1} parent=1 // pred_check
      _
    $region3: #{transformer_encoder.1} parent=1 // pred_check_branch
      %13 = sbr.rel (0) target = $region5
    $region4: #{transformer_encoder.1} parent=1 // pred_region
      _
    $region5: #{transformer_encoder.1} parent=1 // pred_fallthru
      _
    // Predicated region
    $region6: #{transformer_encoder.1} parent=1 // pred_check
      _
    $region7: #{transformer_encoder.1} parent=1 // pred_check_branch
      %15 = sbr.rel (0) target = $region9
    $region8: #{transformer_encoder.1} parent=1 // pred_region
      _
    $region9: #{transformer_encoder.1} parent=1 // pred_fallthru
      _
    // Predicated region
    $region10: #{transformer_encoder.1} parent=1 // pred_check
      _
    $region11: #{transformer_encoder.1} parent=1 // pred_check_branch
      %17 = sbr.rel (0) target = $region13
    $region12: #{transformer_encoder.1} parent=1 // pred_region
      _
    $region13: #{transformer_encoder.1} parent=1 // pred_fallthru
      _
    // Predicated region
    $region14: #{transformer_encoder.1} parent=1 // pred_check
      _
    $region15: #{transformer_encoder.1} parent=1 // pred_check_branch
      %19 = sbr.rel (0) target = $region17
    $region16: #{transformer_encoder.1} parent=1 // pred_region
      _
    $region17: #{transformer_encoder.1} parent=1 // pred_fallthru
      _
    // Predicated region
    $region18: #{transformer_encoder.1} parent=1 // pred_check
      _
    $region19: #{transformer_encoder.1} parent=1 // pred_check_branch
      %21 = sbr.rel (0) target = $region21
    $region20: #{transformer_encoder.1} parent=1 // pred_region
      _
    $region21: #{transformer_encoder.1} parent=1 // pred_fallthru
      _
    // Predicated region
    $region22: #{transformer_encoder.1} parent=1 // pred_check
      _
    $region23: #{transformer_encoder.1} parent=1 // pred_check_branch
      %23 = sbr.rel (0) target = $region25
    $region24: #{transformer_encoder.1} parent=1 // pred_region
      _
    $region25: #{transformer_encoder.1} parent=1 // pred_fallthru
      _
    %v24 = vld [vmem:[%s0] sm:$0xff]
    %v25 = vld [vmem:[%s0 + $0x8] sm:$0xff]
    %v26 = vld [vmem:[%s0 + $0x10] sm:$0xff]
    %v27 = vld [vmem:[%s0 + $0x18] sm:$0xff]
    %v28 = vld [vmem:[%s1] sm:$0xff]
    %v29 = vld [vmem:[%s1 + $0x8] sm:$0xff]
    %v30 = vld [vmem:[%s1 + $0x10] sm:$0xff]
    %v31 = vld [vmem:[%s1 + $0x18] sm:$0xff]
    %v32 = vld [vmem:[%s5] sm:$0x1]
    %v33 = vadd.f32 %v24, %v28
    %v34 = vadd.f32 %v25, %v29
    %v35 = vadd.f32 %v26, %v30
    %v36 = vadd.f32 %v27, %v31
    %v37 = vld [vmem:[%s2] sm:$0xff]
    %v38 = vld [vmem:[%s2 + $0x8] sm:$0xff]
    %v39 = vld [vmem:[%s2 + $0x10] sm:$0xff]
    %v40 = vld [vmem:[%s2 + $0x18] sm:$0xff]
    %v41 = vlaneseq
    %v42 = vshrl.u32 %v41, 7
    %v43 = vsub.s32 0, %v42
    %v44 = vrot.slane %v32, %v43
    %vm45 = vcmask 261120
    %v47 = vsel %vm45, %v33, 0
    %v50 = vsel %vm45, %v34, 0
    %v53 = vsel %vm45, %v35, 0
    %v56 = vsel %vm45, %v36, 0
    %58 = vmatprep.subr.mxu0 0.0
    %59 = vmatpush1.msra.mxu0 %v37
    %60 = vmatprep.subr.mxu0 0.0
    %61 = vmatpush1.msra.mxu0 %v38
    %62 = vmatprep.subr.mxu0 0.0
    %63 = vmatpush1.msra.mxu0 %v39
    %64 = vmatprep.subr.mxu0 0.0
    %65 = vmatpush1.msra.mxu0 %v40
    %66 = vmatprep.subr.mxu0 0.0
    %67 = vmatpush1.msra.mxu0 0.0
    %68 = vmatprep.subr.mxu0 0.0
    %69 = vmatpush1.msra.mxu0 0.0
    %70 = vmatprep.subr.mxu0 0.0
    %71 = vmatpush1.msra.mxu0 0.0
    %72 = vmatprep.subr.mxu0 0.0
    %73 = vmatpush1.msra.mxu0 0.0
    %74 = vmatprep.subr.mxu0 0.0
    %75 = vmatpush1.msra.mxu0 0.0
    %76 = vmatprep.subr.mxu0 0.0
    %77 = vmatpush1.msra.mxu0 0.0
    %78 = vmatprep.subr.mxu0 0.0
    %79 = vmatpush1.msra.mxu0 0.0
    %80 = vmatprep.subr.mxu0 0.0
    %81 = vmatpush1.msra.mxu0 0.0
    %82 = vmatprep.subr.mxu0 0.0
    %83 = vmatpush1.msra.mxu0 0.0
    %84 = vmatprep.subr.mxu0 0.0
    %85 = vmatpush1.msra.mxu0 0.0
    %86 = vmatprep.subr.mxu0 0.0
    %87 = vmatpush1.msra.mxu0 0.0
    %88 = vmatprep.subr.mxu0 0.0
    %89 = vmatpush1.msra.mxu0 0.0
    %90 = vmatprep.subr.mxu0 0.0
    %91 = vmatpush1.msra.mxu0 0.0
    %92 = vmatprep.subr.mxu0 0.0
    %93 = vmatpush1.msra.mxu0 0.0
    %94 = vmatprep.subr.mxu0 0.0
    %95 = vmatpush1.msra.mxu0 0.0
    %96 = vmatprep.subr.mxu0 0.0
    %97 = vmatpush1.msra.mxu0 0.0
    %98 = vmatprep.subr.mxu0 0.0
    %99 = vmatpush1.msra.mxu0 0.0
    %100 = vmatprep.subr.mxu0 0.0
    %101 = vmatpush1.msra.mxu0 0.0
    %102 = vmatprep.subr.mxu0 0.0
    %103 = vmatpush1.msra.mxu0 0.0
    %104 = vmatprep.subr.mxu0 0.0
    %105 = vmatpush1.msra.mxu0 0.0
    %106 = vmatprep.subr.mxu0 0.0
    %107 = vmatpush1.msra.mxu0 0.0
    %108 = vmatprep.subr.mxu0 0.0
    %109 = vmatpush1.msra.mxu0 0.0
    %110 = vmatprep.subr.mxu0 0.0
    %111 = vmatpush1.msra.mxu0 0.0
    %112 = vmatprep.subr.mxu0 0.0
    %113 = vmatpush1.msra.mxu0 0.0
    %114 = vmatprep.subr.mxu0 0.0
    %115 = vmatpush1.msra.mxu0 0.0
    %116 = vmatprep.subr.mxu0 0.0
    %117 = vmatpush1.msra.mxu0 0.0
    %118 = vmatprep.subr.mxu0 0.0
    %119 = vmatpush1.msra.mxu0 0.0
    %120 = vmatprep.subr.mxu0 0.0
    %121 = vmatpush1.msra.mxu0 0.0
    %122 = vmatprep.mubr.f32.mxu0 0.0
    %123 = vmatmul.mubr.f32.gmra.mrb[0].mxu0 %v47
    %v124 = vpop.f32.mrb[0].mxu0
    %v125 = vadd.f32 %v44, %v124
    %v126 = vpop.f32.mrb[0].mxu0
    %127 = vmatprep.mubr.f32.mxu0 0.0
    %128 = vmatmul.mubr.f32.gmra.mrb[0].mxu0 %v50
    %v129 = vpop.f32.mrb[0].mxu0
    %v130 = vadd.f32 %v44, %v129
    %v131 = vpop.f32.mrb[0].mxu0
    %132 = vmatprep.mubr.f32.mxu0 0.0
    %133 = vmatmul.mubr.f32.gmra.mrb[0].mxu0 %v53
    %v134 = vpop.f32.mrb[0].mxu0
    %v135 = vadd.f32 %v44, %v134
    %v136 = vpop.f32.mrb[0].mxu0
    %137 = vmatprep.mubr.f32.mxu0 0.0
    %138 = vmatmul.mubr.f32.gmra.mrb[0].mxu0 %v56
    %v139 = vpop.f32.mrb[0].mxu0
    %v140 = vadd.f32 %v44, %v139
    %v141 = vpop.f32.mrb[0].mxu0
    %142 = vdwg.mxu0
    %147 = vrot.lane.b32.xlu0 %v37, 64
    %v148 = vpop.permute.xlu0 %147
    %149 = vrot.lane.b32.xlu0 %v38, 64
    %v150 = vpop.permute.xlu0 %149
    %151 = vrot.lane.b32.xlu0 %v39, 64
    %v152 = vpop.permute.xlu0 %151
    %153 = vrot.lane.b32.xlu0 %v40, 64
    %v154 = vpop.permute.xlu0 %153
    %160 = vrot.lane.b32.xlu0 %v44, 64
    %v161 = vpop.permute.xlu0 %160
    %v164 = vsel %vm45, %v24, 0
    %v167 = vsel %vm45, %v25, 0
    %v170 = vsel %vm45, %v26, 0
    %v173 = vsel %vm45, %v27, 0
    %175 = vmatprep.subr.mxu0 0.0
    %176 = vmatpush1.msra.mxu0 %v148
    %177 = vmatprep.subr.mxu0 0.0
    %178 = vmatpush1.msra.mxu0 %v150
    %179 = vmatprep.subr.mxu0 0.0
    %180 = vmatpush1.msra.mxu0 %v152
    %181 = vmatprep.subr.mxu0 0.0
    %182 = vmatpush1.msra.mxu0 %v154
    %183 = vmatprep.subr.mxu0 0.0
    %184 = vmatpush1.msra.mxu0 0.0
    %185 = vmatprep.subr.mxu0 0.0
    %186 = vmatpush1.msra.mxu0 0.0
    %187 = vmatprep.subr.mxu0 0.0
    %188 = vmatpush1.msra.mxu0 0.0
    %189 = vmatprep.subr.mxu0 0.0
    %190 = vmatpush1.msra.mxu0 0.0
    %191 = vmatprep.subr.mxu0 0.0
    %192 = vmatpush1.msra.mxu0 0.0
    %193 = vmatprep.subr.mxu0 0.0
    %194 = vmatpush1.msra.mxu0 0.0
    %195 = vmatprep.subr.mxu0 0.0
    %196 = vmatpush1.msra.mxu0 0.0
    %197 = vmatprep.subr.mxu0 0.0
    %198 = vmatpush1.msra.mxu0 0.0
    %199 = vmatprep.subr.mxu0 0.0
    %200 = vmatpush1.msra.mxu0 0.0
    %201 = vmatprep.subr.mxu0 0.0
    %202 = vmatpush1.msra.mxu0 0.0
    %203 = vmatprep.subr.mxu0 0.0
    %204 = vmatpush1.msra.mxu0 0.0
    %205 = vmatprep.subr.mxu0 0.0
    %206 = vmatpush1.msra.mxu0 0.0
    %207 = vmatprep.subr.mxu0 0.0
    %208 = vmatpush1.msra.mxu0 0.0
    %209 = vmatprep.subr.mxu0 0.0
    %210 = vmatpush1.msra.mxu0 0.0
    %211 = vmatprep.subr.mxu0 0.0
    %212 = vmatpush1.msra.mxu0 0.0
    %213 = vmatprep.subr.mxu0 0.0
    %214 = vmatpush1.msra.mxu0 0.0
    %215 = vmatprep.subr.mxu0 0.0
    %216 = vmatpush1.msra.mxu0 0.0
    %217 = vmatprep.subr.mxu0 0.0
    %218 = vmatpush1.msra.mxu0 0.0
    %219 = vmatprep.subr.mxu0 0.0
    %220 = vmatpush1.msra.mxu0 0.0
    %221 = vmatprep.subr.mxu0 0.0
    %222 = vmatpush1.msra.mxu0 0.0
    %223 = vmatprep.subr.mxu0 0.0
    %224 = vmatpush1.msra.mxu0 0.0
    %225 = vmatprep.subr.mxu0 0.0
    %226 = vmatpush1.msra.mxu0 0.0
    %227 = vmatprep.subr.mxu0 0.0
    %228 = vmatpush1.msra.mxu0 0.0
    %229 = vmatprep.subr.mxu0 0.0
    %230 = vmatpush1.msra.mxu0 0.0
    %231 = vmatprep.subr.mxu0 0.0
    %232 = vmatpush1.msra.mxu0 0.0
    %233 = vmatprep.subr.mxu0 0.0
    %234 = vmatpush1.msra.mxu0 0.0
    %235 = vmatprep.subr.mxu0 0.0
    %236 = vmatpush1.msra.mxu0 0.0
    %237 = vmatprep.subr.mxu0 0.0
    %238 = vmatpush1.msra.mxu0 0.0
    %239 = vmatprep.mubr.f32.mxu0 0.0
    %240 = vmatmul.mubr.f32.gmra.mrb[0].mxu0 %v164
    %v241 = vpop.f32.mrb[0].mxu0
    %v242 = vadd.f32 %v161, %v241
    %v243 = vpop.f32.mrb[0].mxu0
    %244 = vmatprep.mubr.f32.mxu0 0.0
    %245 = vmatmul.mubr.f32.gmra.mrb[0].mxu0 %v167
    %v246 = vpop.f32.mrb[0].mxu0
    %v247 = vadd.f32 %v161, %v246
    %v248 = vpop.f32.mrb[0].mxu0
    %249 = vmatprep.mubr.f32.mxu0 0.0
    %250 = vmatmul.mubr.f32.gmra.mrb[0].mxu0 %v170
    %v251 = vpop.f32.mrb[0].mxu0
    %v252 = vadd.f32 %v161, %v251
    %v253 = vpop.f32.mrb[0].mxu0
    %254 = vmatprep.mubr.f32.mxu0 0.0
    %255 = vmatmul.mubr.f32.gmra.mrb[0].mxu0 %v173
    %v256 = vpop.f32.mrb[0].mxu0
    %v257 = vadd.f32 %v161, %v256
    %v258 = vpop.f32.mrb[0].mxu0
    %259 = vdwg.mxu0
    %v260 = vmul.f32 %v125, 0.35355338
    %v261 = vmul.f32 %v130, 0.35355338
    %v262 = vmul.f32 %v135, 0.35355338
    %v263 = vmul.f32 %v140, 0.35355338
    %266 = vrot.lane.b32.xlu0 %v125, 96
    %v267 = vpop.permute.xlu0 %266
    %268 = vrot.lane.b32.xlu0 %v130, 96
    %v269 = vpop.permute.xlu0 %268
    %vm270 = vcmask 64512
    %v272 = vsel %vm270, %v260, 0
    %v275 = vsel %vm270, %v261, 0
    %v277 = vsel %vm270, %v267, 0
    %v279 = vsel %vm270, %v269, 0
    %281 = vmatprep.subr.mxu0 0.0
    %282 = vmatpush1.xpose.msra.mxu0 %v277
    %283 = vmatprep.subr.mxu0 0.0
    %284 = vmatpush1.xpose.msra.mxu0 %v279
    %285 = vmatprep.subr.mxu0 0.0
    %286 = vmatpush1.xpose.msra.mxu0 0.0
    %287 = vmatprep.subr.mxu0 0.0
    %288 = vmatpush1.xpose.msra.mxu0 0.0
    %289 = vmatprep.subr.mxu0 0.0
    %290 = vmatpush1.xpose.msra.mxu0 0.0
    %291 = vmatprep.subr.mxu0 0.0
    %292 = vmatpush1.xpose.msra.mxu0 0.0
    %293 = vmatprep.subr.mxu0 0.0
    %294 = vmatpush1.xpose.msra.mxu0 0.0
    %295 = vmatprep.subr.mxu0 0.0
    %296 = vmatpush1.xpose.msra.mxu0 0.0
    %297 = vmatprep.subr.mxu0 0.0
    %298 = vmatpush1.xpose.msra.mxu0 0.0
    %299 = vmatprep.subr.mxu0 0.0
    %300 = vmatpush1.xpose.msra.mxu0 0.0
    %301 = vmatprep.subr.mxu0 0.0
    %302 = vmatpush1.xpose.msra.mxu0 0.0
    %303 = vmatprep.subr.mxu0 0.0
    %304 = vmatpush1.xpose.msra.mxu0 0.0
    %305 = vmatprep.subr.mxu0 0.0
    %306 = vmatpush1.xpose.msra.mxu0 0.0
    %307 = vmatprep.subr.mxu0 0.0
    %308 = vmatpush1.xpose.msra.mxu0 0.0
    %309 = vmatprep.subr.mxu0 0.0
    %310 = vmatpush1.xpose.msra.mxu0 0.0
    %311 = vmatprep.subr.mxu0 0.0
    %312 = vmatpush1.xpose.msra.mxu0 0.0
    %313 = vmatprep.subr.mxu0 0.0
    %314 = vmatpush1.xpose.msra.mxu0 0.0
    %315 = vmatprep.subr.mxu0 0.0
    %316 = vmatpush1.xpose.msra.mxu0 0.0
    %317 = vmatprep.subr.mxu0 0.0
    %318 = vmatpush1.xpose.msra.mxu0 0.0
    %319 = vmatprep.subr.mxu0 0.0
    %320 = vmatpush1.xpose.msra.mxu0 0.0
    %321 = vmatprep.subr.mxu0 0.0
    %322 = vmatpush1.xpose.msra.mxu0 0.0
    %323 = vmatprep.subr.mxu0 0.0
    %324 = vmatpush1.xpose.msra.mxu0 0.0
    %325 = vmatprep.subr.mxu0 0.0
    %326 = vmatpush1.xpose.msra.mxu0 0.0
    %327 = vmatprep.subr.mxu0 0.0
    %328 = vmatpush1.xpose.msra.mxu0 0.0
    %329 = vmatprep.subr.mxu0 0.0
    %330 = vmatpush1.xpose.msra.mxu0 0.0
    %331 = vmatprep.subr.mxu0 0.0
    %332 = vmatpush1.xpose.msra.mxu0 0.0
    %333 = vmatprep.subr.mxu0 0.0
    %334 = vmatpush1.xpose.msra.mxu0 0.0
    %335 = vmatprep.subr.mxu0 0.0
    %336 = vmatpush1.xpose.msra.mxu0 0.0
    %337 = vmatprep.subr.mxu0 0.0
    %338 = vmatpush1.xpose.msra.mxu0 0.0
    %339 = vmatprep.subr.mxu0 0.0
    %340 = vmatpush1.xpose.msra.mxu0 0.0
    %341 = vmatprep.subr.mxu0 0.0
    %342 = vmatpush1.xpose.msra.mxu0 0.0
    %343 = vmatprep.subr.mxu0 0.0
    %344 = vmatpush1.xpose.msra.mxu0 0.0
    %345 = vmatprep.mubr.f32.mxu0 0.0
    %346 = vmatmul.mubr.f32.gmra.mrb[0].mxu0 %v272
    %v347 = vpop.f32.mrb[0].mxu0
    %v348 = vadd.f32 0.0, %v347
    %v349 = vpop.f32.mrb[0].mxu0
    %350 = vmatprep.mubr.f32.mxu0 0.0
    %351 = vmatmul.mubr.f32.gmra.mrb[0].mxu0 %v275
    %v352 = vpop.f32.mrb[0].mxu0
    %v353 = vadd.f32 0.0, %v352
    %v354 = vpop.f32.mrb[0].mxu0
    %355 = vdwg.mxu0
    %358 = vrot.lane.b32.xlu0 %v135, 96
    %v359 = vpop.permute.xlu0 %358
    %360 = vrot.lane.b32.xlu0 %v140, 96
    %v361 = vpop.permute.xlu0 %360
    %v363 = vsel %vm270, %v262, 0
    %v366 = vsel %vm270, %v263, 0
    %v368 = vsel %vm270, %v359, 0
    %v370 = vsel %vm270, %v361, 0
    %372 = vmatprep.subr.mxu0 0.0
    %373 = vmatpush1.xpose.msra.mxu0 %v368
    %374 = vmatprep.subr.mxu0 0.0
    %375 = vmatpush1.xpose.msra.mxu0 %v370
    %376 = vmatprep.subr.mxu0 0.0
    %377 = vmatpush1.xpose.msra.mxu0 0.0
    %378 = vmatprep.subr.mxu0 0.0
    %379 = vmatpush1.xpose.msra.mxu0 0.0
    %380 = vmatprep.subr.mxu0 0.0
    %381 = vmatpush1.xpose.msra.mxu0 0.0
    %382 = vmatprep.subr.mxu0 0.0
    %383 = vmatpush1.xpose.msra.mxu0 0.0
    %384 = vmatprep.subr.mxu0 0.0
    %385 = vmatpush1.xpose.msra.mxu0 0.0
    %386 = vmatprep.subr.mxu0 0.0
    %387 = vmatpush1.xpose.msra.mxu0 0.0
    %388 = vmatprep.subr.mxu0 0.0
    %389 = vmatpush1.xpose.msra.mxu0 0.0
    %390 = vmatprep.subr.mxu0 0.0
    %391 = vmatpush1.xpose.msra.mxu0 0.0
    %392 = vmatprep.subr.mxu0 0.0
    %393 = vmatpush1.xpose.msra.mxu0 0.0
    %394 = vmatprep.subr.mxu0 0.0
    %395 = vmatpush1.xpose.msra.mxu0 0.0
    %396 = vmatprep.subr.mxu0 0.0
    %397 = vmatpush1.xpose.msra.mxu0 0.0
    %398 = vmatprep.subr.mxu0 0.0
    %399 = vmatpush1.xpose.msra.mxu0 0.0
    %400 = vmatprep.subr.mxu0 0.0
    %401 = vmatpush1.xpose.msra.mxu0 0.0
    %402 = vmatprep.subr.mxu0 0.0
    %403 = vmatpush1.xpose.msra.mxu0 0.0
    %404 = vmatprep.subr.mxu0 0.0
    %405 = vmatpush1.xpose.msra.mxu0 0.0
    %406 = vmatprep.subr.mxu0 0.0
    %407 = vmatpush1.xpose.msra.mxu0 0.0
    %408 = vmatprep.subr.mxu0 0.0
    %409 = vmatpush1.xpose.msra.mxu0 0.0
    %410 = vmatprep.subr.mxu0 0.0
    %411 = vmatpush1.xpose.msra.mxu0 0.0
    %412 = vmatprep.subr.mxu0 0.0
    %413 = vmatpush1.xpose.msra.mxu0 0.0
    %414 = vmatprep.subr.mxu0 0.0
    %415 = vmatpush1.xpose.msra.mxu0 0.0
    %416 = vmatprep.subr.mxu0 0.0
    %417 = vmatpush1.xpose.msra.mxu0 0.0
    %418 = vmatprep.subr.mxu0 0.0
    %419 = vmatpush1.xpose.msra.mxu0 0.0
    %420 = vmatprep.subr.mxu0 0.0
    %421 = vmatpush1.xpose.msra.mxu0 0.0
    %422 = vmatprep.subr.mxu0 0.0
    %423 = vmatpush1.xpose.msra.mxu0 0.0
    %424 = vmatprep.subr.mxu0 0.0
    %425 = vmatpush1.xpose.msra.mxu0 0.0
    %426 = vmatprep.subr.mxu0 0.0
    %427 = vmatpush1.xpose.msra.mxu0 0.0
    %428 = vmatprep.subr.mxu0 0.0
    %429 = vmatpush1.xpose.msra.mxu0 0.0
    %430 = vmatprep.subr.mxu0 0.0
    %431 = vmatpush1.xpose.msra.mxu0 0.0
    %432 = vmatprep.subr.mxu0 0.0
    %433 = vmatpush1.xpose.msra.mxu0 0.0
    %434 = vmatprep.subr.mxu0 0.0
    %435 = vmatpush1.xpose.msra.mxu0 0.0
    %436 = vmatprep.mubr.f32.mxu0 0.0
    %437 = vmatmul.mubr.f32.gmra.mrb[0].mxu0 %v363
    %v438 = vpop.f32.mrb[0].mxu0
    %v439 = vadd.f32 0.0, %v438
    %v440 = vpop.f32.mrb[0].mxu0
    %441 = vmatprep.mubr.f32.mxu0 0.0
    %442 = vmatmul.mubr.f32.gmra.mrb[0].mxu0 %v366
    %v443 = vpop.f32.mrb[0].mxu0
    %v444 = vadd.f32 0.0, %v443
    %v445 = vpop.f32.mrb[0].mxu0
    %446 = vdwg.mxu0
    %vm447 = vcmask 130048
    %v448 = vsel %vm447, %v348, -inf
    %449 = vmax.xlane.f32.xlu0 %v448
    %v450 = vpop.xlane.xlu0 %449
    %v451 = vsel %vm447, %v353, -inf
    %452 = vmax.xlane.f32.xlu0 %v451
    %v453 = vpop.xlane.xlu0 %452
    %v454 = vsel %vm447, %v439, -inf
    %455 = vmax.xlane.f32.xlu0 %v454
    %v456 = vpop.xlane.xlu0 %455
    %v457 = vsel %vm447, %v444, -inf
    %458 = vmax.xlane.f32.xlu0 %v457
    %v459 = vpop.xlane.xlu0 %458
    %v460 = vsub.f32 %v348, %v450
    %v461 = vsub.f32 %v353, %v453
    %v462 = vsub.f32 %v439, %v456
    %v463 = vsub.f32 %v444, %v459
    %v464 = vmul.f32 %v460, 1.442695
    %v465 = vpow.pop %v464
    %v466 = vmul.f32 %v461, 1.442695
    %v467 = vpow.pop %v466
    %v468 = vmul.f32 %v462, 1.442695
    %v469 = vpow.pop %v468
    %v470 = vmul.f32 %v463, 1.442695
    %v471 = vpow.pop %v470
    %v472 = vsel %vm447, %v465, 0.0
    %473 = vadd.xlane.f32.xlu0 %v472
    %v474 = vpop.xlane.xlu0 %473
    %v475 = vsel %vm447, %v467, 0.0
    %476 = vadd.xlane.f32.xlu0 %v475
    %v477 = vpop.xlane.xlu0 %476
    %v478 = vsel %vm447, %v469, 0.0
    %479 = vadd.xlane.f32.xlu0 %v478
    %v480 = vpop.xlane.xlu0 %479
    %v481 = vsel %vm447, %v471, 0.0
    %482 = vadd.xlane.f32.xlu0 %v481
    %v483 = vpop.xlane.xlu0 %482
    %v484 = vrcp.pop %v474
    %v485 = vrcp.pop %v477
    %v486 = vrcp.pop %v480
    %v487 = vrcp.pop %v483
    %v488 = vmul.f32 %v474, %v484
    %v489 = vmul.f32 %v477, %v485
    %v490 = vmul.f32 %v480, %v486
    %v491 = vmul.f32 %v483, %v487
    %v492 = vsub.f32 2.0, %v488
    %v493 = vsub.f32 2.0, %v489
    %v494 = vsub.f32 2.0, %v490
    %v495 = vsub.f32 2.0, %v491
    %v496 = vmul.f32 %v484, %v492
    %v497 = vmul.f32 %v485, %v493
    %v498 = vmul.f32 %v486, %v494
    %v499 = vmul.f32 %v487, %v495
    %v500 = vmul.f32 %v465, %v496
    %v501 = vmul.f32 %v467, %v497
    %v502 = vmul.f32 %v469, %v498
    %v503 = vmul.f32 %v471, %v499
    %v505 = vsel %vm447, %v500, 0
    %v508 = vsel %vm447, %v501, 0
    %510 = vmatprep.subr.mxu0 0.0
    %511 = vmatpush1.msra.mxu0 %v242
    %512 = vmatprep.subr.mxu0 0.0
    %513 = vmatpush1.msra.mxu0 %v247
    %514 = vmatprep.subr.mxu0 0.0
    %515 = vmatpush1.msra.mxu0 0.0
    %516 = vmatprep.subr.mxu0 0.0
    %517 = vmatpush1.msra.mxu0 0.0
    %518 = vmatprep.subr.mxu0 0.0
    %519 = vmatpush1.msra.mxu0 0.0
    %520 = vmatprep.subr.mxu0 0.0
    %521 = vmatpush1.msra.mxu0 0.0
    %522 = vmatprep.subr.mxu0 0.0
    %523 = vmatpush1.msra.mxu0 0.0
    %524 = vmatprep.subr.mxu0 0.0
    %525 = vmatpush1.msra.mxu0 0.0
    %526 = vmatprep.subr.mxu0 0.0
    %527 = vmatpush1.msra.mxu0 0.0
    %528 = vmatprep.subr.mxu0 0.0
    %529 = vmatpush1.msra.mxu0 0.0
    %530 = vmatprep.subr.mxu0 0.0
    %531 = vmatpush1.msra.mxu0 0.0
    %532 = vmatprep.subr.mxu0 0.0
    %533 = vmatpush1.msra.mxu0 0.0
    %534 = vmatprep.subr.mxu0 0.0
    %535 = vmatpush1.msra.mxu0 0.0
    %536 = vmatprep.subr.mxu0 0.0
    %537 = vmatpush1.msra.mxu0 0.0
    %538 = vmatprep.subr.mxu0 0.0
    %539 = vmatpush1.msra.mxu0 0.0
    %540 = vmatprep.subr.mxu0 0.0
    %541 = vmatpush1.msra.mxu0 0.0
    %542 = vmatprep.subr.mxu0 0.0
    %543 = vmatpush1.msra.mxu0 0.0
    %544 = vmatprep.subr.mxu0 0.0
    %545 = vmatpush1.msra.mxu0 0.0
    %546 = vmatprep.subr.mxu0 0.0
    %547 = vmatpush1.msra.mxu0 0.0
    %548 = vmatprep.subr.mxu0 0.0
    %549 = vmatpush1.msra.mxu0 0.0
    %550 = vmatprep.subr.mxu0 0.0
    %551 = vmatpush1.msra.mxu0 0.0
    %552 = vmatprep.subr.mxu0 0.0
    %553 = vmatpush1.msra.mxu0 0.0
    %554 = vmatprep.subr.mxu0 0.0
    %555 = vmatpush1.msra.mxu0 0.0
    %556 = vmatprep.subr.mxu0 0.0
    %557 = vmatpush1.msra.mxu0 0.0
    %558 = vmatprep.subr.mxu0 0.0
    %559 = vmatpush1.msra.mxu0 0.0
    %560 = vmatprep.subr.mxu0 0.0
    %561 = vmatpush1.msra.mxu0 0.0
    %562 = vmatprep.subr.mxu0 0.0
    %563 = vmatpush1.msra.mxu0 0.0
    %564 = vmatprep.subr.mxu0 0.0
    %565 = vmatpush1.msra.mxu0 0.0
    %566 = vmatprep.subr.mxu0 0.0
    %567 = vmatpush1.msra.mxu0 0.0
    %568 = vmatprep.subr.mxu0 0.0
    %569 = vmatpush1.msra.mxu0 0.0
    %570 = vmatprep.subr.mxu0 0.0
    %571 = vmatpush1.msra.mxu0 0.0
    %572 = vmatprep.subr.mxu0 0.0
    %573 = vmatpush1.msra.mxu0 0.0
    %574 = vmatprep.mubr.f32.mxu0 0.0
    %575 = vmatmul.mubr.f32.gmra.mrb[0].mxu0 %v505
    %v576 = vpop.f32.mrb[0].mxu0
    %v577 = vadd.f32 0.0, %v576
    %v578 = vpop.f32.mrb[0].mxu0
    %579 = vmatprep.mubr.f32.mxu0 0.0
    %580 = vmatmul.mubr.f32.gmra.mrb[0].mxu0 %v508
    %v581 = vpop.f32.mrb[0].mxu0
    %v582 = vadd.f32 0.0, %v581
    %v583 = vpop.f32.mrb[0].mxu0
    %584 = vdwg.mxu0
    %v586 = vsel %vm447, %v502, 0
    %v589 = vsel %vm447, %v503, 0
    %591 = vmatprep.subr.mxu0 0.0
    %592 = vmatpush1.msra.mxu0 %v252
    %593 = vmatprep.subr.mxu0 0.0
    %594 = vmatpush1.msra.mxu0 %v257
    %595 = vmatprep.subr.mxu0 0.0
    %596 = vmatpush1.msra.mxu0 0.0
    %597 = vmatprep.subr.mxu0 0.0
    %598 = vmatpush1.msra.mxu0 0.0
    %599 = vmatprep.subr.mxu0 0.0
    %600 = vmatpush1.msra.mxu0 0.0
    %601 = vmatprep.subr.mxu0 0.0
    %602 = vmatpush1.msra.mxu0 0.0
    %603 = vmatprep.subr.mxu0 0.0
    %604 = vmatpush1.msra.mxu0 0.0
    %605 = vmatprep.subr.mxu0 0.0
    %606 = vmatpush1.msra.mxu0 0.0
    %607 = vmatprep.subr.mxu0 0.0
    %608 = vmatpush1.msra.mxu0 0.0
    %609 = vmatprep.subr.mxu0 0.0
    %610 = vmatpush1.msra.mxu0 0.0
    %611 = vmatprep.subr.mxu0 0.0
    %612 = vmatpush1.msra.mxu0 0.0
    %613 = vmatprep.subr.mxu0 0.0
    %614 = vmatpush1.msra.mxu0 0.0
    %615 = vmatprep.subr.mxu0 0.0
    %616 = vmatpush1.msra.mxu0 0.0
    %617 = vmatprep.subr.mxu0 0.0
    %618 = vmatpush1.msra.mxu0 0.0
    %619 = vmatprep.subr.mxu0 0.0
    %620 = vmatpush1.msra.mxu0 0.0
    %621 = vmatprep.subr.mxu0 0.0
    %622 = vmatpush1.msra.mxu0 0.0
    %623 = vmatprep.subr.mxu0 0.0
    %624 = vmatpush1.msra.mxu0 0.0
    %625 = vmatprep.subr.mxu0 0.0
    %626 = vmatpush1.msra.mxu0 0.0
    %627 = vmatprep.subr.mxu0 0.0
    %628 = vmatpush1.msra.mxu0 0.0
    %629 = vmatprep.subr.mxu0 0.0
    %630 = vmatpush1.msra.mxu0 0.0
    %631 = vmatprep.subr.mxu0 0.0
    %632 = vmatpush1.msra.mxu0 0.0
    %633 = vmatprep.subr.mxu0 0.0
    %634 = vmatpush1.msra.mxu0 0.0
    %635 = vmatprep.subr.mxu0 0.0
    %636 = vmatpush1.msra.mxu0 0.0
    %637 = vmatprep.subr.mxu0 0.0
    %638 = vmatpush1.msra.mxu0 0.0
    %639 = vmatprep.subr.mxu0 0.0
    %640 = vmatpush1.msra.mxu0 0.0
    %641 = vmatprep.subr.mxu0 0.0
    %642 = vmatpush1.msra.mxu0 0.0
    %643 = vmatprep.subr.mxu0 0.0
    %644 = vmatpush1.msra.mxu0 0.0
    %645 = vmatprep.subr.mxu0 0.0
    %646 = vmatpush1.msra.mxu0 0.0
    %647 = vmatprep.subr.mxu0 0.0
    %648 = vmatpush1.msra.mxu0 0.0
    %649 = vmatprep.subr.mxu0 0.0
    %650 = vmatpush1.msra.mxu0 0.0
    %651 = vmatprep.subr.mxu0 0.0
    %652 = vmatpush1.msra.mxu0 0.0
    %653 = vmatprep.subr.mxu0 0.0
    %654 = vmatpush1.msra.mxu0 0.0
    %655 = vmatprep.mubr.f32.mxu0 0.0
    %656 = vmatmul.mubr.f32.gmra.mrb[0].mxu0 %v586
    %v657 = vpop.f32.mrb[0].mxu0
    %v658 = vadd.f32 0.0, %v657
    %v659 = vpop.f32.mrb[0].mxu0
    %660 = vmatprep.mubr.f32.mxu0 0.0
    %661 = vmatmul.mubr.f32.gmra.mrb[0].mxu0 %v589
    %v662 = vpop.f32.mrb[0].mxu0
    %v663 = vadd.f32 0.0, %v662
    %v664 = vpop.f32.mrb[0].mxu0
    %665 = vdwg.mxu0
    %666 = vrot.lane.b32.xlu0 %v260, 120
    %v667 = vpop.permute.xlu0 %666
    %668 = vrot.lane.b32.xlu0 %v261, 120
    %v669 = vpop.permute.xlu0 %668
    %670 = vrot.lane.b32.xlu0 %v125, 88
    %v671 = vpop.permute.xlu0 %670
    %672 = vrot.lane.b32.xlu0 %v130, 88
    %v673 = vpop.permute.xlu0 %672
    %v674 = vsel %vm270, %v667, 0
    %v676 = vsel %vm270, %v669, 0
    %v678 = vsel %vm270, %v671, 0
    %v680 = vsel %vm270, %v673, 0
    %682 = vmatprep.subr.mxu0 0.0
    %683 = vmatpush1.xpose.msra.mxu0 %v678
    %684 = vmatprep.subr.mxu0 0.0
    %685 = vmatpush1.xpose.msra.mxu0 %v680
    %686 = vmatprep.subr.mxu0 0.0
    %687 = vmatpush1.xpose.msra.mxu0 0.0
    %688 = vmatprep.subr.mxu0 0.0
    %689 = vmatpush1.xpose.msra.mxu0 0.0
    %690 = vmatprep.subr.mxu0 0.0
    %691 = vmatpush1.xpose.msra.mxu0 0.0
    %692 = vmatprep.subr.mxu0 0.0
    %693 = vmatpush1.xpose.msra.mxu0 0.0
    %694 = vmatprep.subr.mxu0 0.0
    %695 = vmatpush1.xpose.msra.mxu0 0.0
    %696 = vmatprep.subr.mxu0 0.0
    %697 = vmatpush1.xpose.msra.mxu0 0.0
    %698 = vmatprep.subr.mxu0 0.0
    %699 = vmatpush1.xpose.msra.mxu0 0.0
    %700 = vmatprep.subr.mxu0 0.0
    %701 = vmatpush1.xpose.msra.mxu0 0.0
    %702 = vmatprep.subr.mxu0 0.0
    %703 = vmatpush1.xpose.msra.mxu0 0.0
    %704 = vmatprep.subr.mxu0 0.0
    %705 = vmatpush1.xpose.msra.mxu0 0.0
    %706 = vmatprep.subr.mxu0 0.0
    %707 = vmatpush1.xpose.msra.mxu0 0.0
    %708 = vmatprep.subr.mxu0 0.0
    %709 = vmatpush1.xpose.msra.mxu0 0.0
    %710 = vmatprep.subr.mxu0 0.0
    %711 = vmatpush1.xpose.msra.mxu0 0.0
    %712 = vmatprep.subr.mxu0 0.0
    %713 = vmatpush1.xpose.msra.mxu0 0.0
    %714 = vmatprep.subr.mxu0 0.0
    %715 = vmatpush1.xpose.msra.mxu0 0.0
    %716 = vmatprep.subr.mxu0 0.0
    %717 = vmatpush1.xpose.msra.mxu0 0.0
    %718 = vmatprep.subr.mxu0 0.0
    %719 = vmatpush1.xpose.msra.mxu0 0.0
    %720 = vmatprep.subr.mxu0 0.0
    %721 = vmatpush1.xpose.msra.mxu0 0.0
    %722 = vmatprep.subr.mxu0 0.0
    %723 = vmatpush1.xpose.msra.mxu0 0.0
    %724 = vmatprep.subr.mxu0 0.0
    %725 = vmatpush1.xpose.msra.mxu0 0.0
    %726 = vmatprep.subr.mxu0 0.0
    %727 = vmatpush1.xpose.msra.mxu0 0.0
    %728 = vmatprep.subr.mxu0 0.0
    %729 = vmatpush1.xpose.msra.mxu0 0.0
    %730 = vmatprep.subr.mxu0 0.0
    %731 = vmatpush1.xpose.msra.mxu0 0.0
    %732 = vmatprep.subr.mxu0 0.0
    %733 = vmatpush1.xpose.msra.mxu0 0.0
    %734 = vmatprep.subr.mxu0 0.0
    %735 = vmatpush1.xpose.msra.mxu0 0.0
    %736 = vmatprep.subr.mxu0 0.0
    %737 = vmatpush1.xpose.msra.mxu0 0.0
    %738 = vmatprep.subr.mxu0 0.0
    %739 = vmatpush1.xpose.msra.mxu0 0.0
    %740 = vmatprep.subr.mxu0 0.0
    %741 = vmatpush1.xpose.msra.mxu0 0.0
    %742 = vmatprep.subr.mxu0 0.0
    %743 = vmatpush1.xpose.msra.mxu0 0.0
    %744 = vmatprep.subr.mxu0 0.0
    %745 = vmatpush1.xpose.msra.mxu0 0.0
    %746 = vmatprep.mubr.f32.mxu0 0.0
    %747 = vmatmul.mubr.f32.gmra.mrb[0].mxu0 %v674
    %v748 = vpop.f32.mrb[0].mxu0
    %v749 = vadd.f32 0.0, %v748
    %v750 = vpop.f32.mrb[0].mxu0
    %751 = vmatprep.mubr.f32.mxu0 0.0
    %752 = vmatmul.mubr.f32.gmra.mrb[0].mxu0 %v676
    %v753 = vpop.f32.mrb[0].mxu0
    %v754 = vadd.f32 0.0, %v753
    %v755 = vpop.f32.mrb[0].mxu0
    %756 = vdwg.mxu0
    %757 = vrot.lane.b32.xlu0 %v262, 120
    %v758 = vpop.permute.xlu0 %757
    %759 = vrot.lane.b32.xlu0 %v263, 120
    %v760 = vpop.permute.xlu0 %759
    %761 = vrot.lane.b32.xlu0 %v135, 88
    %v762 = vpop.permute.xlu0 %761
    %763 = vrot.lane.b32.xlu0 %v140, 88
    %v764 = vpop.permute.xlu0 %763
    %v765 = vsel %vm270, %v758, 0
    %v767 = vsel %vm270, %v760, 0
    %v769 = vsel %vm270, %v762, 0
    %v771 = vsel %vm270, %v764, 0
    %773 = vmatprep.subr.mxu0 0.0
    %774 = vmatpush1.xpose.msra.mxu0 %v769
    %775 = vmatprep.subr.mxu0 0.0
    %776 = vmatpush1.xpose.msra.mxu0 %v771
    %777 = vmatprep.subr.mxu0 0.0
    %778 = vmatpush1.xpose.msra.mxu0 0.0
    %779 = vmatprep.subr.mxu0 0.0
    %780 = vmatpush1.xpose.msra.mxu0 0.0
    %781 = vmatprep.subr.mxu0 0.0
    %782 = vmatpush1.xpose.msra.mxu0 0.0
    %783 = vmatprep.subr.mxu0 0.0
    %784 = vmatpush1.xpose.msra.mxu0 0.0
    %785 = vmatprep.subr.mxu0 0.0
    %786 = vmatpush1.xpose.msra.mxu0 0.0
    %787 = vmatprep.subr.mxu0 0.0
    %788 = vmatpush1.xpose.msra.mxu0 0.0
    %789 = vmatprep.subr.mxu0 0.0
    %790 = vmatpush1.xpose.msra.mxu0 0.0
    %791 = vmatprep.subr.mxu0 0.0
    %792 = vmatpush1.xpose.msra.mxu0 0.0
    %793 = vmatprep.subr.mxu0 0.0
    %794 = vmatpush1.xpose.msra.mxu0 0.0
    %795 = vmatprep.subr.mxu0 0.0
    %796 = vmatpush1.xpose.msra.mxu0 0.0
    %797 = vmatprep.subr.mxu0 0.0
    %798 = vmatpush1.xpose.msra.mxu0 0.0
    %799 = vmatprep.subr.mxu0 0.0
    %800 = vmatpush1.xpose.msra.mxu0 0.0
    %801 = vmatprep.subr.mxu0 0.0
    %802 = vmatpush1.xpose.msra.mxu0 0.0
    %803 = vmatprep.subr.mxu0 0.0
    %804 = vmatpush1.xpose.msra.mxu0 0.0
    %805 = vmatprep.subr.mxu0 0.0
    %806 = vmatpush1.xpose.msra.mxu0 0.0
    %807 = vmatprep.subr.mxu0 0.0
    %808 = vmatpush1.xpose.msra.mxu0 0.0
    %809 = vmatprep.subr.mxu0 0.0
    %810 = vmatpush1.xpose.msra.mxu0 0.0
    %811 = vmatprep.subr.mxu0 0.0
    %812 = vmatpush1.xpose.msra.mxu0 0.0
    %813 = vmatprep.subr.mxu0 0.0
    %814 = vmatpush1.xpose.msra.mxu0 0.0
    %815 = vmatprep.subr.mxu0 0.0
    %816 = vmatpush1.xpose.msra.mxu0 0.0
    %817 = vmatprep.subr.mxu0 0.0
    %818 = vmatpush1.xpose.msra.mxu0 0.0
    %819 = vmatprep.subr.mxu0 0.0
    %820 = vmatpush1.xpose.msra.mxu0 0.0
    %821 = vmatprep.subr.mxu0 0.0
    %822 = vmatpush1.xpose.msra.mxu0 0.0
    %823 = vmatprep.subr.mxu0 0.0
    %824 = vmatpush1.xpose.msra.mxu0 0.0
    %825 = vmatprep.subr.mxu0 0.0
    %826 = vmatpush1.xpose.msra.mxu0 0.0
    %827 = vmatprep.subr.mxu0 0.0
    %828 = vmatpush1.xpose.msra.mxu0 0.0
    %829 = vmatprep.subr.mxu0 0.0
    %830 = vmatpush1.xpose.msra.mxu0 0.0
    %831 = vmatprep.subr.mxu0 0.0
    %832 = vmatpush1.xpose.msra.mxu0 0.0
    %833 = vmatprep.subr.mxu0 0.0
    %834 = vmatpush1.xpose.msra.mxu0 0.0
    %835 = vmatprep.subr.mxu0 0.0
    %836 = vmatpush1.xpose.msra.mxu0 0.0
    %837 = vmatprep.mubr.f32.mxu0 0.0
    %838 = vmatmul.mubr.f32.gmra.mrb[0].mxu0 %v765
    %v839 = vpop.f32.mrb[0].mxu0
    %v840 = vadd.f32 0.0, %v839
    %v841 = vpop.f32.mrb[0].mxu0
    %842 = vmatprep.mubr.f32.mxu0 0.0
    %843 = vmatmul.mubr.f32.gmra.mrb[0].mxu0 %v767
    %v844 = vpop.f32.mrb[0].mxu0
    %v845 = vadd.f32 0.0, %v844
    %v846 = vpop.f32.mrb[0].mxu0
    %847 = vdwg.mxu0
    %v848 = vsel %vm447, %v749, -inf
    %849 = vmax.xlane.f32.xlu0 %v848
    %v850 = vpop.xlane.xlu0 %849
    %v851 = vsel %vm447, %v754, -inf
    %852 = vmax.xlane.f32.xlu0 %v851
    %v853 = vpop.xlane.xlu0 %852
    %v854 = vsel %vm447, %v840, -inf
    %855 = vmax.xlane.f32.xlu0 %v854
    %v856 = vpop.xlane.xlu0 %855
    %v857 = vsel %vm447, %v845, -inf
    %858 = vmax.xlane.f32.xlu0 %v857
    %v859 = vpop.xlane.xlu0 %858
    %v860 = vsub.f32 %v749, %v850
    %v861 = vsub.f32 %v754, %v853
    %v862 = vsub.f32 %v840, %v856
    %v863 = vsub.f32 %v845, %v859
    %v864 = vmul.f32 %v860, 1.442695
    %v865 = vpow.pop %v864
    %v866 = vmul.f32 %v861, 1.442695
    %v867 = vpow.pop %v866
    %v868 = vmul.f32 %v862, 1.442695
    %v869 = vpow.pop %v868
    %v870 = vmul.f32 %v863, 1.442695
    %v871 = vpow.pop %v870
    %v872 = vsel %vm447, %v865, 0.0
    %873 = vadd.xlane.f32.xlu0 %v872
    %v874 = vpop.xlane.xlu0 %873
    %v875 = vsel %vm447, %v867, 0.0
    %876 = vadd.xlane.f32.xlu0 %v875
    %v877 = vpop.xlane.xlu0 %876
    %v878 = vsel %vm447, %v869, 0.0
    %879 = vadd.xlane.f32.xlu0 %v878
    %v880 = vpop.xlane.xlu0 %879
    %v881 = vsel %vm447, %v871, 0.0
    %882 = vadd.xlane.f32.xlu0 %v881
    %v883 = vpop.xlane.xlu0 %882
    %v884 = vrcp.pop %v874
    %v885 = vrcp.pop %v877
    %v886 = vrcp.pop %v880
    %v887 = vrcp.pop %v883
    %v888 = vmul.f32 %v874, %v884
    %v889 = vmul.f32 %v877, %v885
    %v890 = vmul.f32 %v880, %v886
    %v891 = vmul.f32 %v883, %v887
    %v892 = vsub.f32 2.0, %v888
    %v893 = vsub.f32 2.0, %v889
    %v894 = vsub.f32 2.0, %v890
    %v895 = vsub.f32 2.0, %v891
    %v896 = vmul.f32 %v884, %v892
    %v897 = vmul.f32 %v885, %v893
    %v898 = vmul.f32 %v886, %v894
    %v899 = vmul.f32 %v887, %v895
    %v900 = vmul.f32 %v865, %v896
    %v901 = vmul.f32 %v867, %v897
    %v902 = vmul.f32 %v869, %v898
    %v903 = vmul.f32 %v871, %v899
    %906 = vrot.lane.b32.xlu0 %v242, 120
    %v907 = vpop.permute.xlu0 %906
    %908 = vrot.lane.b32.xlu0 %v247, 120
    %v909 = vpop.permute.xlu0 %908
    %v913 = vsel %vm447, %v900, 0
    %v916 = vsel %vm447, %v901, 0
    %918 = vmatprep.subr.mxu0 0.0
    %919 = vmatpush1.msra.mxu0 %v907
    %920 = vmatprep.subr.mxu0 0.0
    %921 = vmatpush1.msra.mxu0 %v909
    %922 = vmatprep.subr.mxu0 0.0
    %923 = vmatpush1.msra.mxu0 0.0
    %924 = vmatprep.subr.mxu0 0.0
    %925 = vmatpush1.msra.mxu0 0.0
    %926 = vmatprep.subr.mxu0 0.0
    %927 = vmatpush1.msra.mxu0 0.0
    %928 = vmatprep.subr.mxu0 0.0
    %929 = vmatpush1.msra.mxu0 0.0
    %930 = vmatprep.subr.mxu0 0.0
    %931 = vmatpush1.msra.mxu0 0.0
    %932 = vmatprep.subr.mxu0 0.0
    %933 = vmatpush1.msra.mxu0 0.0
    %934 = vmatprep.subr.mxu0 0.0
    %935 = vmatpush1.msra.mxu0 0.0
    %936 = vmatprep.subr.mxu0 0.0
    %937 = vmatpush1.msra.mxu0 0.0
    %938 = vmatprep.subr.mxu0 0.0
    %939 = vmatpush1.msra.mxu0 0.0
    %940 = vmatprep.subr.mxu0 0.0
    %941 = vmatpush1.msra.mxu0 0.0
    %942 = vmatprep.subr.mxu0 0.0
    %943 = vmatpush1.msra.mxu0 0.0
    %944 = vmatprep.subr.mxu0 0.0
    %945 = vmatpush1.msra.mxu0 0.0
    %946 = vmatprep.subr.mxu0 0.0
    %947 = vmatpush1.msra.mxu0 0.0
    %948 = vmatprep.subr.mxu0 0.0
    %949 = vmatpush1.msra.mxu0 0.0
    %950 = vmatprep.subr.mxu0 0.0
    %951 = vmatpush1.msra.mxu0 0.0
    %952 = vmatprep.subr.mxu0 0.0
    %953 = vmatpush1.msra.mxu0 0.0
    %954 = vmatprep.subr.mxu0 0.0
    %955 = vmatpush1.msra.mxu0 0.0
    %956 = vmatprep.subr.mxu0 0.0
    %957 = vmatpush1.msra.mxu0 0.0
    %958 = vmatprep.subr.mxu0 0.0
    %959 = vmatpush1.msra.mxu0 0.0
    %960 = vmatprep.subr.mxu0 0.0
    %961 = vmatpush1.msra.mxu0 0.0
    %962 = vmatprep.subr.mxu0 0.0
    %963 = vmatpush1.msra.mxu0 0.0
    %964 = vmatprep.subr.mxu0 0.0
    %965 = vmatpush1.msra.mxu0 0.0
    %966 = vmatprep.subr.mxu0 0.0
    %967 = vmatpush1.msra.mxu0 0.0
    %968 = vmatprep.subr.mxu0 0.0
    %969 = vmatpush1.msra.mxu0 0.0
    %970 = vmatprep.subr.mxu0 0.0
    %971 = vmatpush1.msra.mxu0 0.0
    %972 = vmatprep.subr.mxu0 0.0
    %973 = vmatpush1.msra.mxu0 0.0
    %974 = vmatprep.subr.mxu0 0.0
    %975 = vmatpush1.msra.mxu0 0.0
    %976 = vmatprep.subr.mxu0 0.0
    %977 = vmatpush1.msra.mxu0 0.0
    %978 = vmatprep.subr.mxu0 0.0
    %979 = vmatpush1.msra.mxu0 0.0
    %980 = vmatprep.subr.mxu0 0.0
    %981 = vmatpush1.msra.mxu0 0.0
    %982 = vmatprep.mubr.f32.mxu0 0.0
    %983 = vmatmul.mubr.f32.gmra.mrb[0].mxu0 %v913
    %v984 = vpop.f32.mrb[0].mxu0
    %v985 = vadd.f32 0.0, %v984
    %v986 = vpop.f32.mrb[0].mxu0
    %987 = vmatprep.mubr.f32.mxu0 0.0
    %988 = vmatmul.mubr.f32.gmra.mrb[0].mxu0 %v916
    %v989 = vpop.f32.mrb[0].mxu0
    %v990 = vadd.f32 0.0, %v989
    %v991 = vpop.f32.mrb[0].mxu0
    %992 = vdwg.mxu0
    %995 = vrot.lane.b32.xlu0 %v252, 120
    %v996 = vpop.permute.xlu0 %995
    %997 = vrot.lane.b32.xlu0 %v257, 120
    %v998 = vpop.permute.xlu0 %997
    %v1002 = vsel %vm447, %v902, 0
    %v1005 = vsel %vm447, %v903, 0
    %1007 = vmatprep.subr.mxu0 0.0
    %1008 = vmatpush1.msra.mxu0 %v996
    %1009 = vmatprep.subr.mxu0 0.0
    %1010 = vmatpush1.msra.mxu0 %v998
    %1011 = vmatprep.subr.mxu0 0.0
    %1012 = vmatpush1.msra.mxu0 0.0
    %1013 = vmatprep.subr.mxu0 0.0
    %1014 = vmatpush1.msra.mxu0 0.0
    %1015 = vmatprep.subr.mxu0 0.0
    %1016 = vmatpush1.msra.mxu0 0.0
    %1017 = vmatprep.subr.mxu0 0.0
    %1018 = vmatpush1.msra.mxu0 0.0
    %1019 = vmatprep.subr.mxu0 0.0
    %1020 = vmatpush1.msra.mxu0 0.0
    %1021 = vmatprep.subr.mxu0 0.0
    %1022 = vmatpush1.msra.mxu0 0.0
    %1023 = vmatprep.subr.mxu0 0.0
    %1024 = vmatpush1.msra.mxu0 0.0
    %1025 = vmatprep.subr.mxu0 0.0
    %1026 = vmatpush1.msra.mxu0 0.0
    %1027 = vmatprep.subr.mxu0 0.0
    %1028 = vmatpush1.msra.mxu0 0.0
    %1029 = vmatprep.subr.mxu0 0.0
    %1030 = vmatpush1.msra.mxu0 0.0
    %1031 = vmatprep.subr.mxu0 0.0
    %1032 = vmatpush1.msra.mxu0 0.0
    %1033 = vmatprep.subr.mxu0 0.0
    %1034 = vmatpush1.msra.mxu0 0.0
    %1035 = vmatprep.subr.mxu0 0.0
    %1036 = vmatpush1.msra.mxu0 0.0
    %1037 = vmatprep.subr.mxu0 0.0
    %1038 = vmatpush1.msra.mxu0 0.0
    %1039 = vmatprep.subr.mxu0 0.0
    %1040 = vmatpush1.msra.mxu0 0.0
    %1041 = vmatprep.subr.mxu0 0.0
    %1042 = vmatpush1.msra.mxu0 0.0
    %1043 = vmatprep.subr.mxu0 0.0
    %1044 = vmatpush1.msra.mxu0 0.0
    %1045 = vmatprep.subr.mxu0 0.0
    %1046 = vmatpush1.msra.mxu0 0.0
    %1047 = vmatprep.subr.mxu0 0.0
    %1048 = vmatpush1.msra.mxu0 0.0
    %1049 = vmatprep.subr.mxu0 0.0
    %1050 = vmatpush1.msra.mxu0 0.0
    %1051 = vmatprep.subr.mxu0 0.0
    %1052 = vmatpush1.msra.mxu0 0.0
    %1053 = vmatprep.subr.mxu0 0.0
    %1054 = vmatpush1.msra.mxu0 0.0
    %1055 = vmatprep.subr.mxu0 0.0
    %1056 = vmatpush1.msra.mxu0 0.0
    %1057 = vmatprep.subr.mxu0 0.0
    %1058 = vmatpush1.msra.mxu0 0.0
    %1059 = vmatprep.subr.mxu0 0.0
    %1060 = vmatpush1.msra.mxu0 0.0
    %1061 = vmatprep.subr.mxu0 0.0
    %1062 = vmatpush1.msra.mxu0 0.0
    %1063 = vmatprep.subr.mxu0 0.0
    %1064 = vmatpush1.msra.mxu0 0.0
    %1065 = vmatprep.subr.mxu0 0.0
    %1066 = vmatpush1.msra.mxu0 0.0
    %1067 = vmatprep.subr.mxu0 0.0
    %1068 = vmatpush1.msra.mxu0 0.0
    %1069 = vmatprep.subr.mxu0 0.0
    %1070 = vmatpush1.msra.mxu0 0.0
    %1071 = vmatprep.mubr.f32.mxu0 0.0
    %1072 = vmatmul.mubr.f32.gmra.mrb[0].mxu0 %v1002
    %v1073 = vpop.f32.mrb[0].mxu0
    %v1074 = vadd.f32 0.0, %v1073
    %v1075 = vpop.f32.mrb[0].mxu0
    %1076 = vmatprep.mubr.f32.mxu0 0.0
    %1077 = vmatmul.mubr.f32.gmra.mrb[0].mxu0 %v1005
    %v1078 = vpop.f32.mrb[0].mxu0
    %v1079 = vadd.f32 0.0, %v1078
    %v1080 = vpop.f32.mrb[0].mxu0
    %1081 = vdwg.mxu0
    %1082 = vrot.lane.b32.xlu0 %v260, 112
    %v1083 = vpop.permute.xlu0 %1082
    %1084 = vrot.lane.b32.xlu0 %v261, 112
    %v1085 = vpop.permute.xlu0 %1084
    %1086 = vrot.lane.b32.xlu0 %v125, 80
    %v1087 = vpop.permute.xlu0 %1086
    %1088 = vrot.lane.b32.xlu0 %v130, 80
    %v1089 = vpop.permute.xlu0 %1088
    %v1090 = vsel %vm270, %v1083, 0
    %v1092 = vsel %vm270, %v1085, 0
    %v1094 = vsel %vm270, %v1087, 0
    %v1096 = vsel %vm270, %v1089, 0
    %1098 = vmatprep.subr.mxu0 0.0
    %1099 = vmatpush1.xpose.msra.mxu0 %v1094
    %1100 = vmatprep.subr.mxu0 0.0
    %1101 = vmatpush1.xpose.msra.mxu0 %v1096
    %1102 = vmatprep.subr.mxu0 0.0
    %1103 = vmatpush1.xpose.msra.mxu0 0.0
    %1104 = vmatprep.subr.mxu0 0.0
    %1105 = vmatpush1.xpose.msra.mxu0 0.0
    %1106 = vmatprep.subr.mxu0 0.0
    %1107 = vmatpush1.xpose.msra.mxu0 0.0
    %1108 = vmatprep.subr.mxu0 0.0
    %1109 = vmatpush1.xpose.msra.mxu0 0.0
    %1110 = vmatprep.subr.mxu0 0.0
    %1111 = vmatpush1.xpose.msra.mxu0 0.0
    %1112 = vmatprep.subr.mxu0 0.0
    %1113 = vmatpush1.xpose.msra.mxu0 0.0
    %1114 = vmatprep.subr.mxu0 0.0
    %1115 = vmatpush1.xpose.msra.mxu0 0.0
    %1116 = vmatprep.subr.mxu0 0.0
    %1117 = vmatpush1.xpose.msra.mxu0 0.0
    %1118 = vmatprep.subr.mxu0 0.0
    %1119 = vmatpush1.xpose.msra.mxu0 0.0
    %1120 = vmatprep.subr.mxu0 0.0
    %1121 = vmatpush1.xpose.msra.mxu0 0.0
    %1122 = vmatprep.subr.mxu0 0.0
    %1123 = vmatpush1.xpose.msra.mxu0 0.0
    %1124 = vmatprep.subr.mxu0 0.0
    %1125 = vmatpush1.xpose.msra.mxu0 0.0
    %1126 = vmatprep.subr.mxu0 0.0
    %1127 = vmatpush1.xpose.msra.mxu0 0.0
    %1128 = vmatprep.subr.mxu0 0.0
    %1129 = vmatpush1.xpose.msra.mxu0 0.0
    %1130 = vmatprep.subr.mxu0 0.0
    %1131 = vmatpush1.xpose.msra.mxu0 0.0
    %1132 = vmatprep.subr.mxu0 0.0
    %1133 = vmatpush1.xpose.msra.mxu0 0.0
    %1134 = vmatprep.subr.mxu0 0.0
    %1135 = vmatpush1.xpose.msra.mxu0 0.0
    %1136 = vmatprep.subr.mxu0 0.0
    %1137 = vmatpush1.xpose.msra.mxu0 0.0
    %1138 = vmatprep.subr.mxu0 0.0
    %1139 = vmatpush1.xpose.msra.mxu0 0.0
    %1140 = vmatprep.subr.mxu0 0.0
    %1141 = vmatpush1.xpose.msra.mxu0 0.0
    %1142 = vmatprep.subr.mxu0 0.0
    %1143 = vmatpush1.xpose.msra.mxu0 0.0
    %1144 = vmatprep.subr.mxu0 0.0
    %1145 = vmatpush1.xpose.msra.mxu0 0.0
    %1146 = vmatprep.subr.mxu0 0.0
    %1147 = vmatpush1.xpose.msra.mxu0 0.0
    %1148 = vmatprep.subr.mxu0 0.0
    %1149 = vmatpush1.xpose.msra.mxu0 0.0
    %1150 = vmatprep.subr.mxu0 0.0
    %1151 = vmatpush1.xpose.msra.mxu0 0.0
    %1152 = vmatprep.subr.mxu0 0.0
    %1153 = vmatpush1.xpose.msra.mxu0 0.0
    %1154 = vmatprep.subr.mxu0 0.0
    %1155 = vmatpush1.xpose.msra.mxu0 0.0
    %1156 = vmatprep.subr.mxu0 0.0
    %1157 = vmatpush1.xpose.msra.mxu0 0.0
    %1158 = vmatprep.subr.mxu0 0.0
    %1159 = vmatpush1.xpose.msra.mxu0 0.0
    %1160 = vmatprep.subr.mxu0 0.0
    %1161 = vmatpush1.xpose.msra.mxu0 0.0
    %1162 = vmatprep.mubr.f32.mxu0 0.0
    %1163 = vmatmul.mubr.f32.gmra.mrb[0].mxu0 %v1090
    %v1164 = vpop.f32.mrb[0].mxu0
    %v1165 = vadd.f32 0.0, %v1164
    %v1166 = vpop.f32.mrb[0].mxu0
    %1167 = vmatprep.mubr.f32.mxu0 0.0
    %1168 = vmatmul.mubr.f32.gmra.mrb[0].mxu0 %v1092
    %v1169 = vpop.f32.mrb[0].mxu0
    %v1170 = vadd.f32 0.0, %v1169
    %v1171 = vpop.f32.mrb[0].mxu0
    %1172 = vdwg.mxu0
    %1173 = vrot.lane.b32.xlu0 %v262, 112
    %v1174 = vpop.permute.xlu0 %1173
    %1175 = vrot.lane.b32.xlu0 %v263, 112
    %v1176 = vpop.permute.xlu0 %1175
    %1177 = vrot.lane.b32.xlu0 %v135, 80
    %v1178 = vpop.permute.xlu0 %1177
    %1179 = vrot.lane.b32.xlu0 %v140, 80
    %v1180 = vpop.permute.xlu0 %1179
    %v1181 = vsel %vm270, %v1174, 0
    %v1183 = vsel %vm270, %v1176, 0
    %v1185 = vsel %vm270, %v1178, 0
    %v1187 = vsel %vm270, %v1180, 0
    %1189 = vmatprep.subr.mxu0 0.0
    %1190 = vmatpush1.xpose.msra.mxu0 %v1185
    %1191 = vmatprep.subr.mxu0 0.0
    %1192 = vmatpush1.xpose.msra.mxu0 %v1187
    %1193 = vmatprep.subr.mxu0 0.0
    %1194 = vmatpush1.xpose.msra.mxu0 0.0
    %1195 = vmatprep.subr.mxu0 0.0
    %1196 = vmatpush1.xpose.msra.mxu0 0.0
    %1197 = vmatprep.subr.mxu0 0.0
    %1198 = vmatpush1.xpose.msra.mxu0 0.0
    %1199 = vmatprep.subr.mxu0 0.0
    %1200 = vmatpush1.xpose.msra.mxu0 0.0
    %1201 = vmatprep.subr.mxu0 0.0
    %1202 = vmatpush1.xpose.msra.mxu0 0.0
    %1203 = vmatprep.subr.mxu0 0.0
    %1204 = vmatpush1.xpose.msra.mxu0 0.0
    %1205 = vmatprep.subr.mxu0 0.0
    %1206 = vmatpush1.xpose.msra.mxu0 0.0
    %1207 = vmatprep.subr.mxu0 0.0
    %1208 = vmatpush1.xpose.msra.mxu0 0.0
    %1209 = vmatprep.subr.mxu0 0.0
    %1210 = vmatpush1.xpose.msra.mxu0 0.0
    %1211 = vmatprep.subr.mxu0 0.0
    %1212 = vmatpush1.xpose.msra.mxu0 0.0
    %1213 = vmatprep.subr.mxu0 0.0
    %1214 = vmatpush1.xpose.msra.mxu0 0.0
    %1215 = vmatprep.subr.mxu0 0.0
    %1216 = vmatpush1.xpose.msra.mxu0 0.0
    %1217 = vmatprep.subr.mxu0 0.0
    %1218 = vmatpush1.xpose.msra.mxu0 0.0
    %1219 = vmatprep.subr.mxu0 0.0
    %1220 = vmatpush1.xpose.msra.mxu0 0.0
    %1221 = vmatprep.subr.mxu0 0.0
    %1222 = vmatpush1.xpose.msra.mxu0 0.0
    %1223 = vmatprep.subr.mxu0 0.0
    %1224 = vmatpush1.xpose.msra.mxu0 0.0
    %1225 = vmatprep.subr.mxu0 0.0
    %1226 = vmatpush1.xpose.msra.mxu0 0.0
    %1227 = vmatprep.subr.mxu0 0.0
    %1228 = vmatpush1.xpose.msra.mxu0 0.0
    %1229 = vmatprep.subr.mxu0 0.0
    %1230 = vmatpush1.xpose.msra.mxu0 0.0
    %1231 = vmatprep.subr.mxu0 0.0
    %1232 = vmatpush1.xpose.msra.mxu0 0.0
    %1233 = vmatprep.subr.mxu0 0.0
    %1234 = vmatpush1.xpose.msra.mxu0 0.0
    %1235 = vmatprep.subr.mxu0 0.0
    %1236 = vmatpush1.xpose.msra.mxu0 0.0
    %1237 = vmatprep.subr.mxu0 0.0
    %1238 = vmatpush1.xpose.msra.mxu0 0.0
    %1239 = vmatprep.subr.mxu0 0.0
    %1240 = vmatpush1.xpose.msra.mxu0 0.0
    %1241 = vmatprep.subr.mxu0 0.0
    %1242 = vmatpush1.xpose.msra.mxu0 0.0
    %1243 = vmatprep.subr.mxu0 0.0
    %1244 = vmatpush1.xpose.msra.mxu0 0.0
    %1245 = vmatprep.subr.mxu0 0.0
    %1246 = vmatpush1.xpose.msra.mxu0 0.0
    %1247 = vmatprep.subr.mxu0 0.0
    %1248 = vmatpush1.xpose.msra.mxu0 0.0
    %1249 = vmatprep.subr.mxu0 0.0
    %1250 = vmatpush1.xpose.msra.mxu0 0.0
    %1251 = vmatprep.subr.mxu0 0.0
    %1252 = vmatpush1.xpose.msra.mxu0 0.0
    %1253 = vmatprep.mubr.f32.mxu0 0.0
    %1254 = vmatmul.mubr.f32.gmra.mrb[0].mxu0 %v1181
    %v1255 = vpop.f32.mrb[0].mxu0
    %v1256 = vadd.f32 0.0, %v1255
    %v1257 = vpop.f32.mrb[0].mxu0
    %1258 = vmatprep.mubr.f32.mxu0 0.0
    %1259 = vmatmul.mubr.f32.gmra.mrb[0].mxu0 %v1183
    %v1260 = vpop.f32.mrb[0].mxu0
    %v1261 = vadd.f32 0.0, %v1260
    %v1262 = vpop.f32.mrb[0].mxu0
    %1263 = vdwg.mxu0
    %v1264 = vsel %vm447, %v1165, -inf
    %1265 = vmax.xlane.f32.xlu0 %v1264
    %v1266 = vpop.xlane.xlu0 %1265
    %v1267 = vsel %vm447, %v1170, -inf
    %1268 = vmax.xlane.f32.xlu0 %v1267
    %v1269 = vpop.xlane.xlu0 %1268
    %v1270 = vsel %vm447, %v1256, -inf
    %1271 = vmax.xlane.f32.xlu0 %v1270
    %v1272 = vpop.xlane.xlu0 %1271
    %v1273 = vsel %vm447, %v1261, -inf
    %1274 = vmax.xlane.f32.xlu0 %v1273
    %v1275 = vpop.xlane.xlu0 %1274
    %v1276 = vsub.f32 %v1165, %v1266
    %v1277 = vsub.f32 %v1170, %v1269
    %v1278 = vsub.f32 %v1256, %v1272
    %v1279 = vsub.f32 %v1261, %v1275
    %v1280 = vmul.f32 %v1276, 1.442695
    %v1281 = vpow.pop %v1280
    %v1282 = vmul.f32 %v1277, 1.442695
    %v1283 = vpow.pop %v1282
    %v1284 = vmul.f32 %v1278, 1.442695
    %v1285 = vpow.pop %v1284
    %v1286 = vmul.f32 %v1279, 1.442695
    %v1287 = vpow.pop %v1286
    %v1288 = vsel %vm447, %v1281, 0.0
    %1289 = vadd.xlane.f32.xlu0 %v1288
    %v1290 = vpop.xlane.xlu0 %1289
    %v1291 = vsel %vm447, %v1283, 0.0
    %1292 = vadd.xlane.f32.xlu0 %v1291
    %v1293 = vpop.xlane.xlu0 %1292
    %v1294 = vsel %vm447, %v1285, 0.0
    %1295 = vadd.xlane.f32.xlu0 %v1294
    %v1296 = vpop.xlane.xlu0 %1295
    %v1297 = vsel %vm447, %v1287, 0.0
    %1298 = vadd.xlane.f32.xlu0 %v1297
    %v1299 = vpop.xlane.xlu0 %1298
    %v1300 = vrcp.pop %v1290
    %v1301 = vrcp.pop %v1293
    %v1302 = vrcp.pop %v1296
    %v1303 = vrcp.pop %v1299
    %v1304 = vmul.f32 %v1290, %v1300
    %v1305 = vmul.f32 %v1293, %v1301
    %v1306 = vmul.f32 %v1296, %v1302
    %v1307 = vmul.f32 %v1299, %v1303
    %v1308 = vsub.f32 2.0, %v1304
    %v1309 = vsub.f32 2.0, %v1305
    %v1310 = vsub.f32 2.0, %v1306
    %v1311 = vsub.f32 2.0, %v1307
    %v1312 = vmul.f32 %v1300, %v1308
    %v1313 = vmul.f32 %v1301, %v1309
    %v1314 = vmul.f32 %v1302, %v1310
    %v1315 = vmul.f32 %v1303, %v1311
    %v1316 = vmul.f32 %v1281, %v1312
    %v1317 = vmul.f32 %v1283, %v1313
    %v1318 = vmul.f32 %v1285, %v1314
    %v1319 = vmul.f32 %v1287, %v1315
    %1320 = vrot.lane.b32.xlu0 %v242, 112
    %v1321 = vpop.permute.xlu0 %1320
    %1322 = vrot.lane.b32.xlu0 %v247, 112
    %v1323 = vpop.permute.xlu0 %1322
    %v1327 = vsel %vm447, %v1316, 0
    %v1330 = vsel %vm447, %v1317, 0
    %1332 = vmatprep.subr.mxu0 0.0
    %1333 = vmatpush1.msra.mxu0 %v1321
    %1334 = vmatprep.subr.mxu0 0.0
    %1335 = vmatpush1.msra.mxu0 %v1323
    %1336 = vmatprep.subr.mxu0 0.0
    %1337 = vmatpush1.msra.mxu0 0.0
    %1338 = vmatprep.subr.mxu0 0.0
    %1339 = vmatpush1.msra.mxu0 0.0
    %1340 = vmatprep.subr.mxu0 0.0
    %1341 = vmatpush1.msra.mxu0 0.0
    %1342 = vmatprep.subr.mxu0 0.0
    %1343 = vmatpush1.msra.mxu0 0.0
    %1344 = vmatprep.subr.mxu0 0.0
    %1345 = vmatpush1.msra.mxu0 0.0
    %1346 = vmatprep.subr.mxu0 0.0
    %1347 = vmatpush1.msra.mxu0 0.0
    %1348 = vmatprep.subr.mxu0 0.0
    %1349 = vmatpush1.msra.mxu0 0.0
    %1350 = vmatprep.subr.mxu0 0.0
    %1351 = vmatpush1.msra.mxu0 0.0
    %1352 = vmatprep.subr.mxu0 0.0
    %1353 = vmatpush1.msra.mxu0 0.0
    %1354 = vmatprep.subr.mxu0 0.0
    %1355 = vmatpush1.msra.mxu0 0.0
    %1356 = vmatprep.subr.mxu0 0.0
    %1357 = vmatpush1.msra.mxu0 0.0
    %1358 = vmatprep.subr.mxu0 0.0
    %1359 = vmatpush1.msra.mxu0 0.0
    %1360 = vmatprep.subr.mxu0 0.0
    %1361 = vmatpush1.msra.mxu0 0.0
    %1362 = vmatprep.subr.mxu0 0.0
    %1363 = vmatpush1.msra.mxu0 0.0
    %1364 = vmatprep.subr.mxu0 0.0
    %1365 = vmatpush1.msra.mxu0 0.0
    %1366 = vmatprep.subr.mxu0 0.0
    %1367 = vmatpush1.msra.mxu0 0.0
    %1368 = vmatprep.subr.mxu0 0.0
    %1369 = vmatpush1.msra.mxu0 0.0
    %1370 = vmatprep.subr.mxu0 0.0
    %1371 = vmatpush1.msra.mxu0 0.0
    %1372 = vmatprep.subr.mxu0 0.0
    %1373 = vmatpush1.msra.mxu0 0.0
    %1374 = vmatprep.subr.mxu0 0.0
    %1375 = vmatpush1.msra.mxu0 0.0
    %1376 = vmatprep.subr.mxu0 0.0
    %1377 = vmatpush1.msra.mxu0 0.0
    %1378 = vmatprep.subr.mxu0 0.0
    %1379 = vmatpush1.msra.mxu0 0.0
    %1380 = vmatprep.subr.mxu0 0.0
    %1381 = vmatpush1.msra.mxu0 0.0
    %1382 = vmatprep.subr.mxu0 0.0
    %1383 = vmatpush1.msra.mxu0 0.0
    %1384 = vmatprep.subr.mxu0 0.0
    %1385 = vmatpush1.msra.mxu0 0.0
    %1386 = vmatprep.subr.mxu0 0.0
    %1387 = vmatpush1.msra.mxu0 0.0
    %1388 = vmatprep.subr.mxu0 0.0
    %1389 = vmatpush1.msra.mxu0 0.0
    %1390 = vmatprep.subr.mxu0 0.0
    %1391 = vmatpush1.msra.mxu0 0.0
    %1392 = vmatprep.subr.mxu0 0.0
    %1393 = vmatpush1.msra.mxu0 0.0
    %1394 = vmatprep.subr.mxu0 0.0
    %1395 = vmatpush1.msra.mxu0 0.0
    %1396 = vmatprep.mubr.f32.mxu0 0.0
    %1397 = vmatmul.mubr.f32.gmra.mrb[0].mxu0 %v1327
    %v1398 = vpop.f32.mrb[0].mxu0
    %v1399 = vadd.f32 0.0, %v1398
    %v1400 = vpop.f32.mrb[0].mxu0
    %1401 = vmatprep.mubr.f32.mxu0 0.0
    %1402 = vmatmul.mubr.f32.gmra.mrb[0].mxu0 %v1330
    %v1403 = vpop.f32.mrb[0].mxu0
    %v1404 = vadd.f32 0.0, %v1403
    %v1405 = vpop.f32.mrb[0].mxu0
    %1406 = vdwg.mxu0
    %1407 = vrot.lane.b32.xlu0 %v252, 112
    %v1408 = vpop.permute.xlu0 %1407
    %1409 = vrot.lane.b32.xlu0 %v257, 112
    %v1410 = vpop.permute.xlu0 %1409
    %v1414 = vsel %vm447, %v1318, 0
    %v1417 = vsel %vm447, %v1319, 0
    %1419 = vmatprep.subr.mxu0 0.0
    %1420 = vmatpush1.msra.mxu0 %v1408
    %1421 = vmatprep.subr.mxu0 0.0
    %1422 = vmatpush1.msra.mxu0 %v1410
    %1423 = vmatprep.subr.mxu0 0.0
    %1424 = vmatpush1.msra.mxu0 0.0
    %1425 = vmatprep.subr.mxu0 0.0
    %1426 = vmatpush1.msra.mxu0 0.0
    %1427 = vmatprep.subr.mxu0 0.0
    %1428 = vmatpush1.msra.mxu0 0.0
    %1429 = vmatprep.subr.mxu0 0.0
    %1430 = vmatpush1.msra.mxu0 0.0
    %1431 = vmatprep.subr.mxu0 0.0
    %1432 = vmatpush1.msra.mxu0 0.0
    %1433 = vmatprep.subr.mxu0 0.0
    %1434 = vmatpush1.msra.mxu0 0.0
    %1435 = vmatprep.subr.mxu0 0.0
    %1436 = vmatpush1.msra.mxu0 0.0
    %1437 = vmatprep.subr.mxu0 0.0
    %1438 = vmatpush1.msra.mxu0 0.0
    %1439 = vmatprep.subr.mxu0 0.0
    %1440 = vmatpush1.msra.mxu0 0.0
    %1441 = vmatprep.subr.mxu0 0.0
    %1442 = vmatpush1.msra.mxu0 0.0
    %1443 = vmatprep.subr.mxu0 0.0
    %1444 = vmatpush1.msra.mxu0 0.0
    %1445 = vmatprep.subr.mxu0 0.0
    %1446 = vmatpush1.msra.mxu0 0.0
    %1447 = vmatprep.subr.mxu0 0.0
    %1448 = vmatpush1.msra.mxu0 0.0
    %1449 = vmatprep.subr.mxu0 0.0
    %1450 = vmatpush1.msra.mxu0 0.0
    %1451 = vmatprep.subr.mxu0 0.0
    %1452 = vmatpush1.msra.mxu0 0.0
    %1453 = vmatprep.subr.mxu0 0.0
    %1454 = vmatpush1.msra.mxu0 0.0
    %1455 = vmatprep.subr.mxu0 0.0
    %1456 = vmatpush1.msra.mxu0 0.0
    %1457 = vmatprep.subr.mxu0 0.0
    %1458 = vmatpush1.msra.mxu0 0.0
    %1459 = vmatprep.subr.mxu0 0.0
    %1460 = vmatpush1.msra.mxu0 0.0
    %1461 = vmatprep.subr.mxu0 0.0
    %1462 = vmatpush1.msra.mxu0 0.0
    %1463 = vmatprep.subr.mxu0 0.0
    %1464 = vmatpush1.msra.mxu0 0.0
    %1465 = vmatprep.subr.mxu0 0.0
    %1466 = vmatpush1.msra.mxu0 0.0
    %1467 = vmatprep.subr.mxu0 0.0
    %1468 = vmatpush1.msra.mxu0 0.0
    %1469 = vmatprep.subr.mxu0 0.0
    %1470 = vmatpush1.msra.mxu0 0.0
    %1471 = vmatprep.subr.mxu0 0.0
    %1472 = vmatpush1.msra.mxu0 0.0
    %1473 = vmatprep.subr.mxu0 0.0
    %1474 = vmatpush1.msra.mxu0 0.0
    %1475 = vmatprep.subr.mxu0 0.0
    %1476 = vmatpush1.msra.mxu0 0.0
    %1477 = vmatprep.subr.mxu0 0.0
    %1478 = vmatpush1.msra.mxu0 0.0
    %1479 = vmatprep.subr.mxu0 0.0
    %1480 = vmatpush1.msra.mxu0 0.0
    %1481 = vmatprep.subr.mxu0 0.0
    %1482 = vmatpush1.msra.mxu0 0.0
    %1483 = vmatprep.mubr.f32.mxu0 0.0
    %1484 = vmatmul.mubr.f32.gmra.mrb[0].mxu0 %v1414
    %v1485 = vpop.f32.mrb[0].mxu0
    %v1486 = vadd.f32 0.0, %v1485
    %v1487 = vpop.f32.mrb[0].mxu0
    %1488 = vmatprep.mubr.f32.mxu0 0.0
    %1489 = vmatmul.mubr.f32.gmra.mrb[0].mxu0 %v1417
    %v1490 = vpop.f32.mrb[0].mxu0
    %v1491 = vadd.f32 0.0, %v1490
    %v1492 = vpop.f32.mrb[0].mxu0
    %1493 = vdwg.mxu0
    %1494 = vrot.lane.b32.xlu0 %v260, 104
    %v1495 = vpop.permute.xlu0 %1494
    %1496 = vrot.lane.b32.xlu0 %v261, 104
    %v1497 = vpop.permute.xlu0 %1496
    %1498 = vrot.lane.b32.xlu0 %v125, 72
    %v1499 = vpop.permute.xlu0 %1498
    %1500 = vrot.lane.b32.xlu0 %v130, 72
    %v1501 = vpop.permute.xlu0 %1500
    %v1502 = vsel %vm270, %v1495, 0
    %v1504 = vsel %vm270, %v1497, 0
    %v1506 = vsel %vm270, %v1499, 0
    %v1508 = vsel %vm270, %v1501, 0
    %1510 = vmatprep.subr.mxu0 0.0
    %1511 = vmatpush1.xpose.msra.mxu0 %v1506
    %1512 = vmatprep.subr.mxu0 0.0
    %1513 = vmatpush1.xpose.msra.mxu0 %v1508
    %1514 = vmatprep.subr.mxu0 0.0
    %1515 = vmatpush1.xpose.msra.mxu0 0.0
    %1516 = vmatprep.subr.mxu0 0.0
    %1517 = vmatpush1.xpose.msra.mxu0 0.0
    %1518 = vmatprep.subr.mxu0 0.0
    %1519 = vmatpush1.xpose.msra.mxu0 0.0
    %1520 = vmatprep.subr.mxu0 0.0
    %1521 = vmatpush1.xpose.msra.mxu0 0.0
    %1522 = vmatprep.subr.mxu0 0.0
    %1523 = vmatpush1.xpose.msra.mxu0 0.0
    %1524 = vmatprep.subr.mxu0 0.0
    %1525 = vmatpush1.xpose.msra.mxu0 0.0
    %1526 = vmatprep.subr.mxu0 0.0
    %1527 = vmatpush1.xpose.msra.mxu0 0.0
    %1528 = vmatprep.subr.mxu0 0.0
    %1529 = vmatpush1.xpose.msra.mxu0 0.0
    %1530 = vmatprep.subr.mxu0 0.0
    %1531 = vmatpush1.xpose.msra.mxu0 0.0
    %1532 = vmatprep.subr.mxu0 0.0
    %1533 = vmatpush1.xpose.msra.mxu0 0.0
    %1534 = vmatprep.subr.mxu0 0.0
    %1535 = vmatpush1.xpose.msra.mxu0 0.0
    %1536 = vmatprep.subr.mxu0 0.0
    %1537 = vmatpush1.xpose.msra.mxu0 0.0
    %1538 = vmatprep.subr.mxu0 0.0
    %1539 = vmatpush1.xpose.msra.mxu0 0.0
    %1540 = vmatprep.subr.mxu0 0.0
    %1541 = vmatpush1.xpose.msra.mxu0 0.0
    %1542 = vmatprep.subr.mxu0 0.0
    %1543 = vmatpush1.xpose.msra.mxu0 0.0
    %1544 = vmatprep.subr.mxu0 0.0
    %1545 = vmatpush1.xpose.msra.mxu0 0.0
    %1546 = vmatprep.subr.mxu0 0.0
    %1547 = vmatpush1.xpose.msra.mxu0 0.0
    %1548 = vmatprep.subr.mxu0 0.0
    %1549 = vmatpush1.xpose.msra.mxu0 0.0
    %1550 = vmatprep.subr.mxu0 0.0
    %1551 = vmatpush1.xpose.msra.mxu0 0.0
    %1552 = vmatprep.subr.mxu0 0.0
    %1553 = vmatpush1.xpose.msra.mxu0 0.0
    %1554 = vmatprep.subr.mxu0 0.0
    %1555 = vmatpush1.xpose.msra.mxu0 0.0
    %1556 = vmatprep.subr.mxu0 0.0
    %1557 = vmatpush1.xpose.msra.mxu0 0.0
    %1558 = vmatprep.subr.mxu0 0.0
    %1559 = vmatpush1.xpose.msra.mxu0 0.0
    %1560 = vmatprep.subr.mxu0 0.0
    %1561 = vmatpush1.xpose.msra.mxu0 0.0
    %1562 = vmatprep.subr.mxu0 0.0
    %1563 = vmatpush1.xpose.msra.mxu0 0.0
    %1564 = vmatprep.subr.mxu0 0.0
    %1565 = vmatpush1.xpose.msra.mxu0 0.0
    %1566 = vmatprep.subr.mxu0 0.0
    %1567 = vmatpush1.xpose.msra.mxu0 0.0
    %1568 = vmatprep.subr.mxu0 0.0
    %1569 = vmatpush1.xpose.msra.mxu0 0.0
    %1570 = vmatprep.subr.mxu0 0.0
    %1571 = vmatpush1.xpose.msra.mxu0 0.0
    %1572 = vmatprep.subr.mxu0 0.0
    %1573 = vmatpush1.xpose.msra.mxu0 0.0
    %1574 = vmatprep.mubr.f32.mxu0 0.0
    %1575 = vmatmul.mubr.f32.gmra.mrb[0].mxu0 %v1502
    %v1576 = vpop.f32.mrb[0].mxu0
    %v1577 = vadd.f32 0.0, %v1576
    %v1578 = vpop.f32.mrb[0].mxu0
    %1579 = vmatprep.mubr.f32.mxu0 0.0
    %1580 = vmatmul.mubr.f32.gmra.mrb[0].mxu0 %v1504
    %v1581 = vpop.f32.mrb[0].mxu0
    %v1582 = vadd.f32 0.0, %v1581
    %v1583 = vpop.f32.mrb[0].mxu0
    %1584 = vdwg.mxu0
    %1585 = vrot.lane.b32.xlu0 %v262, 104
    %v1586 = vpop.permute.xlu0 %1585
    %1587 = vrot.lane.b32.xlu0 %v263, 104
    %v1588 = vpop.permute.xlu0 %1587
    %1589 = vrot.lane.b32.xlu0 %v135, 72
    %v1590 = vpop.permute.xlu0 %1589
    %1591 = vrot.lane.b32.xlu0 %v140, 72
    %v1592 = vpop.permute.xlu0 %1591
    %v1593 = vsel %vm270, %v1586, 0
    %v1595 = vsel %vm270, %v1588, 0
    %v1597 = vsel %vm270, %v1590, 0
    %v1599 = vsel %vm270, %v1592, 0
    %1601 = vmatprep.subr.mxu0 0.0
    %1602 = vmatpush1.xpose.msra.mxu0 %v1597
    %1603 = vmatprep.subr.mxu0 0.0
    %1604 = vmatpush1.xpose.msra.mxu0 %v1599
    %1605 = vmatprep.subr.mxu0 0.0
    %1606 = vmatpush1.xpose.msra.mxu0 0.0
    %1607 = vmatprep.subr.mxu0 0.0
    %1608 = vmatpush1.xpose.msra.mxu0 0.0
    %1609 = vmatprep.subr.mxu0 0.0
    %1610 = vmatpush1.xpose.msra.mxu0 0.0
    %1611 = vmatprep.subr.mxu0 0.0
    %1612 = vmatpush1.xpose.msra.mxu0 0.0
    %1613 = vmatprep.subr.mxu0 0.0
    %1614 = vmatpush1.xpose.msra.mxu0 0.0
    %1615 = vmatprep.subr.mxu0 0.0
    %1616 = vmatpush1.xpose.msra.mxu0 0.0
    %1617 = vmatprep.subr.mxu0 0.0
    %1618 = vmatpush1.xpose.msra.mxu0 0.0
    %1619 = vmatprep.subr.mxu0 0.0
    %1620 = vmatpush1.xpose.msra.mxu0 0.0
    %1621 = vmatprep.subr.mxu0 0.0
    %1622 = vmatpush1.xpose.msra.mxu0 0.0
    %1623 = vmatprep.subr.mxu0 0.0
    %1624 = vmatpush1.xpose.msra.mxu0 0.0
    %1625 = vmatprep.subr.mxu0 0.0
    %1626 = vmatpush1.xpose.msra.mxu0 0.0
    %1627 = vmatprep.subr.mxu0 0.0
    %1628 = vmatpush1.xpose.msra.mxu0 0.0
    %1629 = vmatprep.subr.mxu0 0.0
    %1630 = vmatpush1.xpose.msra.mxu0 0.0
    %1631 = vmatprep.subr.mxu0 0.0
    %1632 = vmatpush1.xpose.msra.mxu0 0.0
    %1633 = vmatprep.subr.mxu0 0.0
    %1634 = vmatpush1.xpose.msra.mxu0 0.0
    %1635 = vmatprep.subr.mxu0 0.0
    %1636 = vmatpush1.xpose.msra.mxu0 0.0
    %1637 = vmatprep.subr.mxu0 0.0
    %1638 = vmatpush1.xpose.msra.mxu0 0.0
    %1639 = vmatprep.subr.mxu0 0.0
    %1640 = vmatpush1.xpose.msra.mxu0 0.0
    %1641 = vmatprep.subr.mxu0 0.0
    %1642 = vmatpush1.xpose.msra.mxu0 0.0
    %1643 = vmatprep.subr.mxu0 0.0
    %1644 = vmatpush1.xpose.msra.mxu0 0.0
    %1645 = vmatprep.subr.mxu0 0.0
    %1646 = vmatpush1.xpose.msra.mxu0 0.0
    %1647 = vmatprep.subr.mxu0 0.0
    %1648 = vmatpush1.xpose.msra.mxu0 0.0
    %1649 = vmatprep.subr.mxu0 0.0
    %1650 = vmatpush1.xpose.msra.mxu0 0.0
    %1651 = vmatprep.subr.mxu0 0.0
    %1652 = vmatpush1.xpose.msra.mxu0 0.0
    %1653 = vmatprep.subr.mxu0 0.0
    %1654 = vmatpush1.xpose.msra.mxu0 0.0
    %1655 = vmatprep.subr.mxu0 0.0
    %1656 = vmatpush1.xpose.msra.mxu0 0.0
    %1657 = vmatprep.subr.mxu0 0.0
    %1658 = vmatpush1.xpose.msra.mxu0 0.0
    %1659 = vmatprep.subr.mxu0 0.0
    %1660 = vmatpush1.xpose.msra.mxu0 0.0
    %1661 = vmatprep.subr.mxu0 0.0
    %1662 = vmatpush1.xpose.msra.mxu0 0.0
    %1663 = vmatprep.subr.mxu0 0.0
    %1664 = vmatpush1.xpose.msra.mxu0 0.0
    %1665 = vmatprep.mubr.f32.mxu0 0.0
    %1666 = vmatmul.mubr.f32.gmra.mrb[0].mxu0 %v1593
    %v1667 = vpop.f32.mrb[0].mxu0
    %v1668 = vadd.f32 0.0, %v1667
    %v1669 = vpop.f32.mrb[0].mxu0
    %1670 = vmatprep.mubr.f32.mxu0 0.0
    %1671 = vmatmul.mubr.f32.gmra.mrb[0].mxu0 %v1595
    %v1672 = vpop.f32.mrb[0].mxu0
    %v1673 = vadd.f32 0.0, %v1672
    %v1674 = vpop.f32.mrb[0].mxu0
    %1675 = vdwg.mxu0
    %v1676 = vsel %vm447, %v1577, -inf
    %1677 = vmax.xlane.f32.xlu0 %v1676
    %v1678 = vpop.xlane.xlu0 %1677
    %v1679 = vsel %vm447, %v1582, -inf
    %1680 = vmax.xlane.f32.xlu0 %v1679
    %v1681 = vpop.xlane.xlu0 %1680
    %v1682 = vsel %vm447, %v1668, -inf
    %1683 = vmax.xlane.f32.xlu0 %v1682
    %v1684 = vpop.xlane.xlu0 %1683
    %v1685 = vsel %vm447, %v1673, -inf
    %1686 = vmax.xlane.f32.xlu0 %v1685
    %v1687 = vpop.xlane.xlu0 %1686
    %v1688 = vsub.f32 %v1577, %v1678
    %v1689 = vsub.f32 %v1582, %v1681
    %v1690 = vsub.f32 %v1668, %v1684
    %v1691 = vsub.f32 %v1673, %v1687
    %v1692 = vmul.f32 %v1688, 1.442695
    %v1693 = vpow.pop %v1692
    %v1694 = vmul.f32 %v1689, 1.442695
    %v1695 = vpow.pop %v1694
    %v1696 = vmul.f32 %v1690, 1.442695
    %v1697 = vpow.pop %v1696
    %v1698 = vmul.f32 %v1691, 1.442695
    %v1699 = vpow.pop %v1698
    %v1700 = vsel %vm447, %v1693, 0.0
    %1701 = vadd.xlane.f32.xlu0 %v1700
    %v1702 = vpop.xlane.xlu0 %1701
    %v1703 = vsel %vm447, %v1695, 0.0
    %1704 = vadd.xlane.f32.xlu0 %v1703
    %v1705 = vpop.xlane.xlu0 %1704
    %v1706 = vsel %vm447, %v1697, 0.0
    %1707 = vadd.xlane.f32.xlu0 %v1706
    %v1708 = vpop.xlane.xlu0 %1707
    %v1709 = vsel %vm447, %v1699, 0.0
    %1710 = vadd.xlane.f32.xlu0 %v1709
    %v1711 = vpop.xlane.xlu0 %1710
    %v1712 = vrcp.pop %v1702
    %v1713 = vrcp.pop %v1705
    %v1714 = vrcp.pop %v1708
    %v1715 = vrcp.pop %v1711
    %v1716 = vmul.f32 %v1702, %v1712
    %v1717 = vmul.f32 %v1705, %v1713
    %v1718 = vmul.f32 %v1708, %v1714
    %v1719 = vmul.f32 %v1711, %v1715
    %v1720 = vsub.f32 2.0, %v1716
    %v1721 = vsub.f32 2.0, %v1717
    %v1722 = vsub.f32 2.0, %v1718
    %v1723 = vsub.f32 2.0, %v1719
    %v1724 = vmul.f32 %v1712, %v1720
    %v1725 = vmul.f32 %v1713, %v1721
    %v1726 = vmul.f32 %v1714, %v1722
    %v1727 = vmul.f32 %v1715, %v1723
    %v1728 = vmul.f32 %v1693, %v1724
    %v1729 = vmul.f32 %v1695, %v1725
    %v1730 = vmul.f32 %v1697, %v1726
    %v1731 = vmul.f32 %v1699, %v1727
    %1732 = vrot.lane.b32.xlu0 %v242, 104
    %v1733 = vpop.permute.xlu0 %1732
    %1734 = vrot.lane.b32.xlu0 %v247, 104
    %v1735 = vpop.permute.xlu0 %1734
    %v1739 = vsel %vm447, %v1728, 0
    %v1742 = vsel %vm447, %v1729, 0
    %1744 = vmatprep.subr.mxu0 0.0
    %1745 = vmatpush1.msra.mxu0 %v1733
    %1746 = vmatprep.subr.mxu0 0.0
    %1747 = vmatpush1.msra.mxu0 %v1735
    %1748 = vmatprep.subr.mxu0 0.0
    %1749 = vmatpush1.msra.mxu0 0.0
    %1750 = vmatprep.subr.mxu0 0.0
    %1751 = vmatpush1.msra.mxu0 0.0
    %1752 = vmatprep.subr.mxu0 0.0
    %1753 = vmatpush1.msra.mxu0 0.0
    %1754 = vmatprep.subr.mxu0 0.0
    %1755 = vmatpush1.msra.mxu0 0.0
    %1756 = vmatprep.subr.mxu0 0.0
    %1757 = vmatpush1.msra.mxu0 0.0
    %1758 = vmatprep.subr.mxu0 0.0
    %1759 = vmatpush1.msra.mxu0 0.0
    %1760 = vmatprep.subr.mxu0 0.0
    %1761 = vmatpush1.msra.mxu0 0.0
    %1762 = vmatprep.subr.mxu0 0.0
    %1763 = vmatpush1.msra.mxu0 0.0
    %1764 = vmatprep.subr.mxu0 0.0
    %1765 = vmatpush1.msra.mxu0 0.0
    %1766 = vmatprep.subr.mxu0 0.0
    %1767 = vmatpush1.msra.mxu0 0.0
    %1768 = vmatprep.subr.mxu0 0.0
    %1769 = vmatpush1.msra.mxu0 0.0
    %1770 = vmatprep.subr.mxu0 0.0
    %1771 = vmatpush1.msra.mxu0 0.0
    %1772 = vmatprep.subr.mxu0 0.0
    %1773 = vmatpush1.msra.mxu0 0.0
    %1774 = vmatprep.subr.mxu0 0.0
    %1775 = vmatpush1.msra.mxu0 0.0
    %1776 = vmatprep.subr.mxu0 0.0
    %1777 = vmatpush1.msra.mxu0 0.0
    %1778 = vmatprep.subr.mxu0 0.0
    %1779 = vmatpush1.msra.mxu0 0.0
    %1780 = vmatprep.subr.mxu0 0.0
    %1781 = vmatpush1.msra.mxu0 0.0
    %1782 = vmatprep.subr.mxu0 0.0
    %1783 = vmatpush1.msra.mxu0 0.0
    %1784 = vmatprep.subr.mxu0 0.0
    %1785 = vmatpush1.msra.mxu0 0.0
    %1786 = vmatprep.subr.mxu0 0.0
    %1787 = vmatpush1.msra.mxu0 0.0
    %1788 = vmatprep.subr.mxu0 0.0
    %1789 = vmatpush1.msra.mxu0 0.0
    %1790 = vmatprep.subr.mxu0 0.0
    %1791 = vmatpush1.msra.mxu0 0.0
    %1792 = vmatprep.subr.mxu0 0.0
    %1793 = vmatpush1.msra.mxu0 0.0
    %1794 = vmatprep.subr.mxu0 0.0
    %1795 = vmatpush1.msra.mxu0 0.0
    %1796 = vmatprep.subr.mxu0 0.0
    %1797 = vmatpush1.msra.mxu0 0.0
    %1798 = vmatprep.subr.mxu0 0.0
    %1799 = vmatpush1.msra.mxu0 0.0
    %1800 = vmatprep.subr.mxu0 0.0
    %1801 = vmatpush1.msra.mxu0 0.0
    %1802 = vmatprep.subr.mxu0 0.0
    %1803 = vmatpush1.msra.mxu0 0.0
    %1804 = vmatprep.subr.mxu0 0.0
    %1805 = vmatpush1.msra.mxu0 0.0
    %1806 = vmatprep.subr.mxu0 0.0
    %1807 = vmatpush1.msra.mxu0 0.0
    %1808 = vmatprep.mubr.f32.mxu0 0.0
    %1809 = vmatmul.mubr.f32.gmra.mrb[0].mxu0 %v1739
    %v1810 = vpop.f32.mrb[0].mxu0
    %v1811 = vadd.f32 0.0, %v1810
    %v1812 = vpop.f32.mrb[0].mxu0
    %1813 = vmatprep.mubr.f32.mxu0 0.0
    %1814 = vmatmul.mubr.f32.gmra.mrb[0].mxu0 %v1742
    %v1815 = vpop.f32.mrb[0].mxu0
    %v1816 = vadd.f32 0.0, %v1815
    %v1817 = vpop.f32.mrb[0].mxu0
    %1818 = vdwg.mxu0
    %1819 = vrot.lane.b32.xlu0 %v252, 104
    %v1820 = vpop.permute.xlu0 %1819
    %1821 = vrot.lane.b32.xlu0 %v257, 104
    %v1822 = vpop.permute.xlu0 %1821
    %v1826 = vsel %vm447, %v1730, 0
    %v1829 = vsel %vm447, %v1731, 0
    %1831 = vmatprep.subr.mxu0 0.0
    %1832 = vmatpush1.msra.mxu0 %v1820
    %1833 = vmatprep.subr.mxu0 0.0
    %1834 = vmatpush1.msra.mxu0 %v1822
    %1835 = vmatprep.subr.mxu0 0.0
    %1836 = vmatpush1.msra.mxu0 0.0
    %1837 = vmatprep.subr.mxu0 0.0
    %1838 = vmatpush1.msra.mxu0 0.0
    %1839 = vmatprep.subr.mxu0 0.0
    %1840 = vmatpush1.msra.mxu0 0.0
    %1841 = vmatprep.subr.mxu0 0.0
    %1842 = vmatpush1.msra.mxu0 0.0
    %1843 = vmatprep.subr.mxu0 0.0
    %1844 = vmatpush1.msra.mxu0 0.0
    %1845 = vmatprep.subr.mxu0 0.0
    %1846 = vmatpush1.msra.mxu0 0.0
    %1847 = vmatprep.subr.mxu0 0.0
    %1848 = vmatpush1.msra.mxu0 0.0
    %1849 = vmatprep.subr.mxu0 0.0
    %1850 = vmatpush1.msra.mxu0 0.0
    %1851 = vmatprep.subr.mxu0 0.0
    %1852 = vmatpush1.msra.mxu0 0.0
    %1853 = vmatprep.subr.mxu0 0.0
    %1854 = vmatpush1.msra.mxu0 0.0
    %1855 = vmatprep.subr.mxu0 0.0
    %1856 = vmatpush1.msra.mxu0 0.0
    %1857 = vmatprep.subr.mxu0 0.0
    %1858 = vmatpush1.msra.mxu0 0.0
    %1859 = vmatprep.subr.mxu0 0.0
    %1860 = vmatpush1.msra.mxu0 0.0
    %1861 = vmatprep.subr.mxu0 0.0
    %1862 = vmatpush1.msra.mxu0 0.0
    %1863 = vmatprep.subr.mxu0 0.0
    %1864 = vmatpush1.msra.mxu0 0.0
    %1865 = vmatprep.subr.mxu0 0.0
    %1866 = vmatpush1.msra.mxu0 0.0
    %1867 = vmatprep.subr.mxu0 0.0
    %1868 = vmatpush1.msra.mxu0 0.0
    %1869 = vmatprep.subr.mxu0 0.0
    %1870 = vmatpush1.msra.mxu0 0.0
    %1871 = vmatprep.subr.mxu0 0.0
    %1872 = vmatpush1.msra.mxu0 0.0
    %1873 = vmatprep.subr.mxu0 0.0
    %1874 = vmatpush1.msra.mxu0 0.0
    %1875 = vmatprep.subr.mxu0 0.0
    %1876 = vmatpush1.msra.mxu0 0.0
    %1877 = vmatprep.subr.mxu0 0.0
    %1878 = vmatpush1.msra.mxu0 0.0
    %1879 = vmatprep.subr.mxu0 0.0
    %1880 = vmatpush1.msra.mxu0 0.0
    %1881 = vmatprep.subr.mxu0 0.0
    %1882 = vmatpush1.msra.mxu0 0.0
    %1883 = vmatprep.subr.mxu0 0.0
    %1884 = vmatpush1.msra.mxu0 0.0
    %1885 = vmatprep.subr.mxu0 0.0
    %1886 = vmatpush1.msra.mxu0 0.0
    %1887 = vmatprep.subr.mxu0 0.0
    %1888 = vmatpush1.msra.mxu0 0.0
    %1889 = vmatprep.subr.mxu0 0.0
    %1890 = vmatpush1.msra.mxu0 0.0
    %1891 = vmatprep.subr.mxu0 0.0
    %1892 = vmatpush1.msra.mxu0 0.0
    %1893 = vmatprep.subr.mxu0 0.0
    %1894 = vmatpush1.msra.mxu0 0.0
    %1895 = vmatprep.mubr.f32.mxu0 0.0
    %1896 = vmatmul.mubr.f32.gmra.mrb[0].mxu0 %v1826
    %v1897 = vpop.f32.mrb[0].mxu0
    %v1898 = vadd.f32 0.0, %v1897
    %v1899 = vpop.f32.mrb[0].mxu0
    %1900 = vmatprep.mubr.f32.mxu0 0.0
    %1901 = vmatmul.mubr.f32.gmra.mrb[0].mxu0 %v1829
    %v1902 = vpop.f32.mrb[0].mxu0
    %v1903 = vadd.f32 0.0, %v1902
    %v1904 = vpop.f32.mrb[0].mxu0
    %1905 = vdwg.mxu0
    %1910 = vrot.lane.b32.xlu0 %v985, 8
    %v1911 = vpop.permute.xlu0 %1910
    %1912 = vrot.lane.b32.xlu0 %v990, 8
    %v1913 = vpop.permute.xlu0 %1912
    %1914 = vrot.lane.b32.xlu0 %v1074, 8
    %v1915 = vpop.permute.xlu0 %1914
    %1916 = vrot.lane.b32.xlu0 %v1079, 8
    %v1917 = vpop.permute.xlu0 %1916
    %1926 = vrot.lane.b32.xlu0 %v1399, 16
    %v1927 = vpop.permute.xlu0 %1926
    %1928 = vrot.lane.b32.xlu0 %v1404, 16
    %v1929 = vpop.permute.xlu0 %1928
    %1930 = vrot.lane.b32.xlu0 %v1486, 16
    %v1931 = vpop.permute.xlu0 %1930
    %1932 = vrot.lane.b32.xlu0 %v1491, 16
    %v1933 = vpop.permute.xlu0 %1932
    %1942 = vrot.lane.b32.xlu0 %v1811, 24
    %v1943 = vpop.permute.xlu0 %1942
    %1944 = vrot.lane.b32.xlu0 %v1816, 24
    %v1945 = vpop.permute.xlu0 %1944
    %1946 = vrot.lane.b32.xlu0 %v1898, 24
    %v1947 = vpop.permute.xlu0 %1946
    %1948 = vrot.lane.b32.xlu0 %v1903, 24
    %v1949 = vpop.permute.xlu0 %1948
    %v1954 = vsel %vm270, %v577, %v1911
    %v1955 = vsel %vm270, %v582, %v1913
    %v1956 = vsel %vm270, %v658, %v1915
    %v1957 = vsel %vm270, %v663, %v1917
    %v1958 = vsel %vm447, %v1954, %v1927
    %v1959 = vsel %vm447, %v1955, %v1929
    %v1960 = vsel %vm447, %v1956, %v1931
    %v1961 = vsel %vm447, %v1957, %v1933
    %vm1962 = vcmask 195584
    %v1963 = vsel %vm1962, %v1958, %v1943
    %v1964 = vsel %vm1962, %v1959, %v1945
    %v1965 = vsel %vm1962, %v1960, %v1947
    %v1966 = vsel %vm1962, %v1961, %v1949
    %v1967 = vld [vmem:[%s3] sm:$0xff]
    %v1968 = vld [vmem:[%s3 + $0x8] sm:$0xff]
    %v1969 = vld [vmem:[%s3 + $0x10] sm:$0xff]
    %v1970 = vld [vmem:[%s3 + $0x18] sm:$0xff]
    %v1971 = vld [vmem:[%s5 + $0x1] sm:$0x1]
    %v1972 = vlaneseq
    %v1973 = vshrl.u32 %v1972, 7
    %v1974 = vsub.s32 0, %v1973
    %v1975 = vrot.slane %v1971, %v1974
    %v1977 = vsel %vm45, %v1963, 0
    %v1980 = vsel %vm45, %v1964, 0
    %v1983 = vsel %vm45, %v1965, 0
    %v1986 = vsel %vm45, %v1966, 0
    %1988 = vmatprep.subr.mxu0 0.0
    %1989 = vmatpush1.msra.mxu0 %v1967
    %1990 = vmatprep.subr.mxu0 0.0
    %1991 = vmatpush1.msra.mxu0 %v1968
    %1992 = vmatprep.subr.mxu0 0.0
    %1993 = vmatpush1.msra.mxu0 %v1969
    %1994 = vmatprep.subr.mxu0 0.0
    %1995 = vmatpush1.msra.mxu0 %v1970
    %1996 = vmatprep.subr.mxu0 0.0
    %1997 = vmatpush1.msra.mxu0 0.0
    %1998 = vmatprep.subr.mxu0 0.0
    %1999 = vmatpush1.msra.mxu0 0.0
    %2000 = vmatprep.subr.mxu0 0.0
    %2001 = vmatpush1.msra.mxu0 0.0
    %2002 = vmatprep.subr.mxu0 0.0
    %2003 = vmatpush1.msra.mxu0 0.0
    %2004 = vmatprep.subr.mxu0 0.0
    %2005 = vmatpush1.msra.mxu0 0.0
    %2006 = vmatprep.subr.mxu0 0.0
    %2007 = vmatpush1.msra.mxu0 0.0
    %2008 = vmatprep.subr.mxu0 0.0
    %2009 = vmatpush1.msra.mxu0 0.0
    %2010 = vmatprep.subr.mxu0 0.0
    %2011 = vmatpush1.msra.mxu0 0.0
    %2012 = vmatprep.subr.mxu0 0.0
    %2013 = vmatpush1.msra.mxu0 0.0
    %2014 = vmatprep.subr.mxu0 0.0
    %2015 = vmatpush1.msra.mxu0 0.0
    %2016 = vmatprep.subr.mxu0 0.0
    %2017 = vmatpush1.msra.mxu0 0.0
    %2018 = vmatprep.subr.mxu0 0.0
    %2019 = vmatpush1.msra.mxu0 0.0
    %2020 = vmatprep.subr.mxu0 0.0
    %2021 = vmatpush1.msra.mxu0 0.0
    %2022 = vmatprep.subr.mxu0 0.0
    %2023 = vmatpush1.msra.mxu0 0.0
    %2024 = vmatprep.subr.mxu0 0.0
    %2025 = vmatpush1.msra.mxu0 0.0
    %2026 = vmatprep.subr.mxu0 0.0
    %2027 = vmatpush1.msra.mxu0 0.0
    %2028 = vmatprep.subr.mxu0 0.0
    %2029 = vmatpush1.msra.mxu0 0.0
    %2030 = vmatprep.subr.mxu0 0.0
    %2031 = vmatpush1.msra.mxu0 0.0
    %2032 = vmatprep.subr.mxu0 0.0
    %2033 = vmatpush1.msra.mxu0 0.0
    %2034 = vmatprep.subr.mxu0 0.0
    %2035 = vmatpush1.msra.mxu0 0.0
    %2036 = vmatprep.subr.mxu0 0.0
    %2037 = vmatpush1.msra.mxu0 0.0
    %2038 = vmatprep.subr.mxu0 0.0
    %2039 = vmatpush1.msra.mxu0 0.0
    %2040 = vmatprep.subr.mxu0 0.0
    %2041 = vmatpush1.msra.mxu0 0.0
    %2042 = vmatprep.subr.mxu0 0.0
    %2043 = vmatpush1.msra.mxu0 0.0
    %2044 = vmatprep.subr.mxu0 0.0
    %2045 = vmatpush1.msra.mxu0 0.0
    %2046 = vmatprep.subr.mxu0 0.0
    %2047 = vmatpush1.msra.mxu0 0.0
    %2048 = vmatprep.subr.mxu0 0.0
    %2049 = vmatpush1.msra.mxu0 0.0
    %2050 = vmatprep.subr.mxu0 0.0
    %2051 = vmatpush1.msra.mxu0 0.0
    %2052 = vmatprep.mubr.f32.mxu0 0.0
    %2053 = vmatmul.mubr.f32.gmra.mrb[0].mxu0 %v1977
    %v2054 = vpop.f32.mrb[0].mxu0
    %v2055 = vadd.f32 %v1975, %v2054
    %v2056 = vpop.f32.mrb[0].mxu0
    %2057 = vmatprep.mubr.f32.mxu0 0.0
    %2058 = vmatmul.mubr.f32.gmra.mrb[0].mxu0 %v1980
    %v2059 = vpop.f32.mrb[0].mxu0
    %v2060 = vadd.f32 %v1975, %v2059
    %v2061 = vpop.f32.mrb[0].mxu0
    %2062 = vmatprep.mubr.f32.mxu0 0.0
    %2063 = vmatmul.mubr.f32.gmra.mrb[0].mxu0 %v1983
    %v2064 = vpop.f32.mrb[0].mxu0
    %v2065 = vadd.f32 %v1975, %v2064
    %v2066 = vpop.f32.mrb[0].mxu0
    %2067 = vmatprep.mubr.f32.mxu0 0.0
    %2068 = vmatmul.mubr.f32.gmra.mrb[0].mxu0 %v1986
    %v2069 = vpop.f32.mrb[0].mxu0
    %v2070 = vadd.f32 %v1975, %v2069
    %v2071 = vpop.f32.mrb[0].mxu0
    %2072 = vdwg.mxu0
    %v2073 = vadd.f32 %v24, %v2055
    %v2074 = vadd.f32 %v25, %v2060
    %v2075 = vadd.f32 %v26, %v2065
    %v2076 = vadd.f32 %v27, %v2070
    %v2077 = vld [vmem:[%s5 + $0x4] sm:$0x1]
    %v2078 = vld [vmem:[%s5 + $0x5] sm:$0x1]
    %v2079 = vsel %vm45, %v2073, 0.0
    %2080 = vadd.xlane.f32.xlu0 %v2079
    %v2081 = vpop.xlane.xlu0 %2080
    %v2082 = vsel %vm45, %v2074, 0.0
    %2083 = vadd.xlane.f32.xlu0 %v2082
    %v2084 = vpop.xlane.xlu0 %2083
    %v2085 = vsel %vm45, %v2075, 0.0
    %2086 = vadd.xlane.f32.xlu0 %v2085
    %v2087 = vpop.xlane.xlu0 %2086
    %v2088 = vsel %vm45, %v2076, 0.0
    %2089 = vadd.xlane.f32.xlu0 %v2088
    %v2090 = vpop.xlane.xlu0 %2089
    %v2091 = vrcp.pop 32.0
    %v2092 = vmul.f32 %v2081, %v2091
    %v2093 = vmul.f32 %v2084, %v2091
    %v2094 = vmul.f32 %v2087, %v2091
    %v2095 = vmul.f32 %v2090, %v2091
    %v2096 = vsub.f32 %v2073, %v2092
    %v2097 = vsub.f32 %v2074, %v2093
    %v2098 = vsub.f32 %v2075, %v2094
    %v2099 = vsub.f32 %v2076, %v2095
    %v2100 = vmul.f32 %v2096, %v2096
    %v2101 = vmul.f32 %v2097, %v2097
    %v2102 = vmul.f32 %v2098, %v2098
    %v2103 = vmul.f32 %v2099, %v2099
    %v2104 = vsel %vm45, %v2100, 0.0
    %2105 = vadd.xlane.f32.xlu0 %v2104
    %v2106 = vpop.xlane.xlu0 %2105
    %v2107 = vsel %vm45, %v2101, 0.0
    %2108 = vadd.xlane.f32.xlu0 %v2107
    %v2109 = vpop.xlane.xlu0 %2108
    %v2110 = vsel %vm45, %v2102, 0.0
    %2111 = vadd.xlane.f32.xlu0 %v2110
    %v2112 = vpop.xlane.xlu0 %2111
    %v2113 = vsel %vm45, %v2103, 0.0
    %2114 = vadd.xlane.f32.xlu0 %v2113
    %v2115 = vpop.xlane.xlu0 %2114
    %v2116 = vmul.f32 %v2106, %v2091
    %v2117 = vmul.f32 %v2109, %v2091
    %v2118 = vmul.f32 %v2112, %v2091
    %v2119 = vmul.f32 %v2115, %v2091
    %v2120 = vadd.f32 %v2116, 1e-05
    %v2121 = vadd.f32 %v2117, 1e-05
    %v2122 = vadd.f32 %v2118, 1e-05
    %v2123 = vadd.f32 %v2119, 1e-05
    %v2124 = vrsqrt.pop %v2120
    %v2125 = vrsqrt.pop %v2121
    %v2126 = vrsqrt.pop %v2122
    %v2127 = vrsqrt.pop %v2123
    %v2128 = vmul.f32 %v2096, %v2124
    %v2129 = vmul.f32 %v2097, %v2125
    %v2130 = vmul.f32 %v2098, %v2126
    %v2131 = vmul.f32 %v2099, %v2127
    %v2132 = vlaneseq
    %v2133 = vshrl.u32 %v2132, 7
    %v2134 = vsub.s32 0, %v2133
    %v2135 = vrot.slane %v2077, %v2134
    %v2136 = vmul.f32 %v2128, %v2135
    %v2137 = vmul.f32 %v2129, %v2135
    %v2138 = vmul.f32 %v2130, %v2135
    %v2139 = vmul.f32 %v2131, %v2135
    %v2140 = vlaneseq
    %v2141 = vshrl.u32 %v2140, 7
    %v2142 = vsub.s32 0, %v2141
    %v2143 = vrot.slane %v2078, %v2142
    %v2144 = vadd.f32 %v2136, %v2143
    %v2145 = vadd.f32 %v2137, %v2143
    %v2146 = vadd.f32 %v2138, %v2143
    %v2147 = vadd.f32 %v2139, %v2143
    %v2148 = vld [vmem:[%s4] sm:$0xff]
    %v2149 = vld [vmem:[%s4 + $0x8] sm:$0xff]
    %v2150 = vld [vmem:[%s4 + $0x10] sm:$0xff]
    %v2151 = vld [vmem:[%s4 + $0x18] sm:$0xff]
    %v2152 = vld [vmem:[%s5 + $0x2] sm:$0x1]
    %v2153 = vlaneseq
    %v2154 = vshrl.u32 %v2153, 7
    %v2155 = vsub.s32 0, %v2154
    %v2156 = vrot.slane %v2152, %v2155
    %v2158 = vsel %vm45, %v2144, 0
    %v2161 = vsel %vm45, %v2145, 0
    %v2164 = vsel %vm45, %v2146, 0
    %v2167 = vsel %vm45, %v2147, 0
    %2169 = vmatprep.subr.mxu0 0.0
    %2170 = vmatpush1.msra.mxu0 %v2148
    %2171 = vmatprep.subr.mxu0 0.0
    %2172 = vmatpush1.msra.mxu0 %v2149
    %2173 = vmatprep.subr.mxu0 0.0
    %2174 = vmatpush1.msra.mxu0 %v2150
    %2175 = vmatprep.subr.mxu0 0.0
    %2176 = vmatpush1.msra.mxu0 %v2151
    %2177 = vmatprep.subr.mxu0 0.0
    %2178 = vmatpush1.msra.mxu0 0.0
    %2179 = vmatprep.subr.mxu0 0.0
    %2180 = vmatpush1.msra.mxu0 0.0
    %2181 = vmatprep.subr.mxu0 0.0
    %2182 = vmatpush1.msra.mxu0 0.0
    %2183 = vmatprep.subr.mxu0 0.0
    %2184 = vmatpush1.msra.mxu0 0.0
    %2185 = vmatprep.subr.mxu0 0.0
    %2186 = vmatpush1.msra.mxu0 0.0
    %2187 = vmatprep.subr.mxu0 0.0
    %2188 = vmatpush1.msra.mxu0 0.0
    %2189 = vmatprep.subr.mxu0 0.0
    %2190 = vmatpush1.msra.mxu0 0.0
    %2191 = vmatprep.subr.mxu0 0.0
    %2192 = vmatpush1.msra.mxu0 0.0
    %2193 = vmatprep.subr.mxu0 0.0
    %2194 = vmatpush1.msra.mxu0 0.0
    %2195 = vmatprep.subr.mxu0 0.0
    %2196 = vmatpush1.msra.mxu0 0.0
    %2197 = vmatprep.subr.mxu0 0.0
    %2198 = vmatpush1.msra.mxu0 0.0
    %2199 = vmatprep.subr.mxu0 0.0
    %2200 = vmatpush1.msra.mxu0 0.0
    %2201 = vmatprep.subr.mxu0 0.0
    %2202 = vmatpush1.msra.mxu0 0.0
    %2203 = vmatprep.subr.mxu0 0.0
    %2204 = vmatpush1.msra.mxu0 0.0
    %2205 = vmatprep.subr.mxu0 0.0
    %2206 = vmatpush1.msra.mxu0 0.0
    %2207 = vmatprep.subr.mxu0 0.0
    %2208 = vmatpush1.msra.mxu0 0.0
    %2209 = vmatprep.subr.mxu0 0.0
    %2210 = vmatpush1.msra.mxu0 0.0
    %2211 = vmatprep.subr.mxu0 0.0
    %2212 = vmatpush1.msra.mxu0 0.0
    %2213 = vmatprep.subr.mxu0 0.0
    %2214 = vmatpush1.msra.mxu0 0.0
    %2215 = vmatprep.subr.mxu0 0.0
    %2216 = vmatpush1.msra.mxu0 0.0
    %2217 = vmatprep.subr.mxu0 0.0
    %2218 = vmatpush1.msra.mxu0 0.0
    %2219 = vmatprep.subr.mxu0 0.0
    %2220 = vmatpush1.msra.mxu0 0.0
    %2221 = vmatprep.subr.mxu0 0.0
    %2222 = vmatpush1.msra.mxu0 0.0
    %2223 = vmatprep.subr.mxu0 0.0
    %2224 = vmatpush1.msra.mxu0 0.0
    %2225 = vmatprep.subr.mxu0 0.0
    %2226 = vmatpush1.msra.mxu0 0.0
    %2227 = vmatprep.subr.mxu0 0.0
    %2228 = vmatpush1.msra.mxu0 0.0
    %2229 = vmatprep.subr.mxu0 0.0
    %2230 = vmatpush1.msra.mxu0 0.0
    %2231 = vmatprep.subr.mxu0 0.0
    %2232 = vmatpush1.msra.mxu0 0.0
    %2233 = vmatprep.mubr.f32.mxu0 0.0
    %2234 = vmatmul.mubr.f32.gmra.mrb[0].mxu0 %v2158
    %v2235 = vpop.f32.mrb[0].mxu0
    %v2236 = vadd.f32 %v2156, %v2235
    %v2237 = vpop.f32.mrb[0].mxu0
    %2238 = vmatprep.mubr.f32.mxu0 0.0
    %2239 = vmatmul.mubr.f32.gmra.mrb[0].mxu0 %v2161
    %v2240 = vpop.f32.mrb[0].mxu0
    %v2241 = vadd.f32 %v2156, %v2240
    %v2242 = vpop.f32.mrb[0].mxu0
    %2243 = vmatprep.mubr.f32.mxu0 0.0
    %2244 = vmatmul.mubr.f32.gmra.mrb[0].mxu0 %v2164
    %v2245 = vpop.f32.mrb[0].mxu0
    %v2246 = vadd.f32 %v2156, %v2245
    %v2247 = vpop.f32.mrb[0].mxu0
    %2248 = vmatprep.mubr.f32.mxu0 0.0
    %2249 = vmatmul.mubr.f32.gmra.mrb[0].mxu0 %v2167
    %v2250 = vpop.f32.mrb[0].mxu0
    %v2251 = vadd.f32 %v2156, %v2250
    %v2252 = vpop.f32.mrb[0].mxu0
    %2253 = vdwg.mxu0
    %v2254 = vmax.f32 %v2236, 0.0
    %v2255 = vmax.f32 %v2241, 0.0
    %v2256 = vmax.f32 %v2246, 0.0
    %v2257 = vmax.f32 %v2251, 0.0
    %v2258 = vld [vmem:[%s4 + $0x20] sm:$0xff]
    %v2259 = vld [vmem:[%s4 + $0x28] sm:$0xff]
    %v2260 = vld [vmem:[%s4 + $0x30] sm:$0xff]
    %v2261 = vld [vmem:[%s4 + $0x38] sm:$0xff]
    %v2262 = vld [vmem:[%s4 + $0x40] sm:$0xff]
    %v2263 = vld [vmem:[%s4 + $0x48] sm:$0xff]
    %v2264 = vld [vmem:[%s4 + $0x50] sm:$0xff]
    %v2265 = vld [vmem:[%s4 + $0x58] sm:$0xff]
    %vm2266 = vcmask 523264
    %v2268 = vsel %vm2266, %v2254, 0
    %v2271 = vsel %vm2266, %v2255, 0
    %v2274 = vsel %vm2266, %v2256, 0
    %v2277 = vsel %vm2266, %v2257, 0
    %2279 = vmatprep.subr.mxu0 0.0
    %2280 = vmatpush1.msra.mxu0 %v2258
    %2281 = vmatprep.subr.mxu0 0.0
    %2282 = vmatpush1.msra.mxu0 %v2259
    %2283 = vmatprep.subr.mxu0 0.0
    %2284 = vmatpush1.msra.mxu0 %v2260
    %2285 = vmatprep.subr.mxu0 0.0
    %2286 = vmatpush1.msra.mxu0 %v2261
    %2287 = vmatprep.subr.mxu0 0.0
    %2288 = vmatpush1.msra.mxu0 %v2262
    %2289 = vmatprep.subr.mxu0 0.0
    %2290 = vmatpush1.msra.mxu0 %v2263
    %2291 = vmatprep.subr.mxu0 0.0
    %2292 = vmatpush1.msra.mxu0 %v2264
    %2293 = vmatprep.subr.mxu0 0.0
    %2294 = vmatpush1.msra.mxu0 %v2265
    %2295 = vmatprep.subr.mxu0 0.0
    %2296 = vmatpush1.msra.mxu0 0.0
    %2297 = vmatprep.subr.mxu0 0.0
    %2298 = vmatpush1.msra.mxu0 0.0
    %2299 = vmatprep.subr.mxu0 0.0
    %2300 = vmatpush1.msra.mxu0 0.0
    %2301 = vmatprep.subr.mxu0 0.0
    %2302 = vmatpush1.msra.mxu0 0.0
    %2303 = vmatprep.subr.mxu0 0.0
    %2304 = vmatpush1.msra.mxu0 0.0
    %2305 = vmatprep.subr.mxu0 0.0
    %2306 = vmatpush1.msra.mxu0 0.0
    %2307 = vmatprep.subr.mxu0 0.0
    %2308 = vmatpush1.msra.mxu0 0.0
    %2309 = vmatprep.subr.mxu0 0.0
    %2310 = vmatpush1.msra.mxu0 0.0
    %2311 = vmatprep.subr.mxu0 0.0
    %2312 = vmatpush1.msra.mxu0 0.0
    %2313 = vmatprep.subr.mxu0 0.0
    %2314 = vmatpush1.msra.mxu0 0.0
    %2315 = vmatprep.subr.mxu0 0.0
    %2316 = vmatpush1.msra.mxu0 0.0
    %2317 = vmatprep.subr.mxu0 0.0
    %2318 = vmatpush1.msra.mxu0 0.0
    %2319 = vmatprep.subr.mxu0 0.0
    %2320 = vmatpush1.msra.mxu0 0.0
    %2321 = vmatprep.subr.mxu0 0.0
    %2322 = vmatpush1.msra.mxu0 0.0
    %2323 = vmatprep.subr.mxu0 0.0
    %2324 = vmatpush1.msra.mxu0 0.0
    %2325 = vmatprep.subr.mxu0 0.0
    %2326 = vmatpush1.msra.mxu0 0.0
    %2327 = vmatprep.subr.mxu0 0.0
    %2328 = vmatpush1.msra.mxu0 0.0
    %2329 = vmatprep.subr.mxu0 0.0
    %2330 = vmatpush1.msra.mxu0 0.0
    %2331 = vmatprep.subr.mxu0 0.0
    %2332 = vmatpush1.msra.mxu0 0.0
    %2333 = vmatprep.subr.mxu0 0.0
    %2334 = vmatpush1.msra.mxu0 0.0
    %2335 = vmatprep.subr.mxu0 0.0
    %2336 = vmatpush1.msra.mxu0 0.0
    %2337 = vmatprep.subr.mxu0 0.0
    %2338 = vmatpush1.msra.mxu0 0.0
    %2339 = vmatprep.subr.mxu0 0.0
    %2340 = vmatpush1.msra.mxu0 0.0
    %2341 = vmatprep.subr.mxu0 0.0
    %2342 = vmatpush1.msra.mxu0 0.0
    %2343 = vmatprep.mubr.f32.mxu0 0.0
    %2344 = vmatmul.mubr.f32.gmra.mrb[0].mxu0 %v2268
    %v2345 = vpop.f32.mrb[0].mxu0
    %v2346 = vadd.f32 0.0, %v2345
    %v2347 = vpop.f32.mrb[0].mxu0
    %2348 = vmatprep.mubr.f32.mxu0 0.0
    %2349 = vmatmul.mubr.f32.gmra.mrb[0].mxu0 %v2271
    %v2350 = vpop.f32.mrb[0].mxu0
    %v2351 = vadd.f32 0.0, %v2350
    %v2352 = vpop.f32.mrb[0].mxu0
    %2353 = vmatprep.mubr.f32.mxu0 0.0
    %2354 = vmatmul.mubr.f32.gmra.mrb[0].mxu0 %v2274
    %v2355 = vpop.f32.mrb[0].mxu0
    %v2356 = vadd.f32 0.0, %v2355
    %v2357 = vpop.f32.mrb[0].mxu0
    %2358 = vmatprep.mubr.f32.mxu0 0.0
    %2359 = vmatmul.mubr.f32.gmra.mrb[0].mxu0 %v2277
    %v2360 = vpop.f32.mrb[0].mxu0
    %v2361 = vadd.f32 0.0, %v2360
    %v2362 = vpop.f32.mrb[0].mxu0
    %2363 = vdwg.mxu0
    %v2364 = vld [vmem:[%s5 + $0x3] sm:$0x1]
    %v2365 = vlaneseq
    %v2366 = vshrl.u32 %v2365, 7
    %v2367 = vsub.s32 0, %v2366
    %v2368 = vrot.slane %v2364, %v2367
    %v2369 = vadd.f32 %v2346, %v2368
    %v2370 = vadd.f32 %v2351, %v2368
    %v2371 = vadd.f32 %v2356, %v2368
    %v2372 = vadd.f32 %v2361, %v2368
    %v2373 = vadd.f32 %v2144, %v2369
    %v2374 = vadd.f32 %v2145, %v2370
    %v2375 = vadd.f32 %v2146, %v2371
    %v2376 = vadd.f32 %v2147, %v2372
    %v2377 = vld [vmem:[%s5 + $0x6] sm:$0x1]
    %v2378 = vld [vmem:[%s5 + $0x7] sm:$0x1]
    %v2379 = vsel %vm45, %v2373, 0.0
    %2380 = vadd.xlane.f32.xlu0 %v2379
    %v2381 = vpop.xlane.xlu0 %2380
    %v2382 = vsel %vm45, %v2374, 0.0
    %2383 = vadd.xlane.f32.xlu0 %v2382
    %v2384 = vpop.xlane.xlu0 %2383
    %v2385 = vsel %vm45, %v2375, 0.0
    %2386 = vadd.xlane.f32.xlu0 %v2385
    %v2387 = vpop.xlane.xlu0 %2386
    %v2388 = vsel %vm45, %v2376, 0.0
    %2389 = vadd.xlane.f32.xlu0 %v2388
    %v2390 = vpop.xlane.xlu0 %2389
    %v2391 = vmul.f32 %v2381, %v2091
    %v2392 = vmul.f32 %v2384, %v2091
    %v2393 = vmul.f32 %v2387, %v2091
    %v2394 = vmul.f32 %v2390, %v2091
    %v2395 = vsub.f32 %v2373, %v2391
    %v2396 = vsub.f32 %v2374, %v2392
    %v2397 = vsub.f32 %v2375, %v2393
    %v2398 = vsub.f32 %v2376, %v2394
    %v2399 = vmul.f32 %v2395, %v2395
    %v2400 = vmul.f32 %v2396, %v2396
    %v2401 = vmul.f32 %v2397, %v2397
    %v2402 = vmul.f32 %v2398, %v2398
    %v2403 = vsel %vm45, %v2399, 0.0
    %2404 = vadd.xlane.f32.xlu0 %v2403
    %v2405 = vpop.xlane.xlu0 %2404
    %v2406 = vsel %vm45, %v2400, 0.0
    %2407 = vadd.xlane.f32.xlu0 %v2406
    %v2408 = vpop.xlane.xlu0 %2407
    %v2409 = vsel %vm45, %v2401, 0.0
    %2410 = vadd.xlane.f32.xlu0 %v2409
    %v2411 = vpop.xlane.xlu0 %2410
    %v2412 = vsel %vm45, %v2402, 0.0
    %2413 = vadd.xlane.f32.xlu0 %v2412
    %v2414 = vpop.xlane.xlu0 %2413
    %v2415 = vmul.f32 %v2405, %v2091
    %v2416 = vmul.f32 %v2408, %v2091
    %v2417 = vmul.f32 %v2411, %v2091
    %v2418 = vmul.f32 %v2414, %v2091
    %v2419 = vadd.f32 %v2415, 1e-05
    %v2420 = vadd.f32 %v2416, 1e-05
    %v2421 = vadd.f32 %v2417, 1e-05
    %v2422 = vadd.f32 %v2418, 1e-05
    %v2423 = vrsqrt.pop %v2419
    %v2424 = vrsqrt.pop %v2420
    %v2425 = vrsqrt.pop %v2421
    %v2426 = vrsqrt.pop %v2422
    %v2427 = vmul.f32 %v2395, %v2423
    %v2428 = vmul.f32 %v2396, %v2424
    %v2429 = vmul.f32 %v2397, %v2425
    %v2430 = vmul.f32 %v2398, %v2426
    %v2431 = vlaneseq
    %v2432 = vshrl.u32 %v2431, 7
    %v2433 = vsub.s32 0, %v2432
    %v2434 = vrot.slane %v2377, %v2433
    %v2435 = vmul.f32 %v2427, %v2434
    %v2436 = vmul.f32 %v2428, %v2434
    %v2437 = vmul.f32 %v2429, %v2434
    %v2438 = vmul.f32 %v2430, %v2434
    %v2439 = vlaneseq
    %v2440 = vshrl.u32 %v2439, 7
    %v2441 = vsub.s32 0, %v2440
    %v2442 = vrot.slane %v2378, %v2441
    %v2443 = vadd.f32 %v2435, %v2442
    %v2444 = vadd.f32 %v2436, %v2442
    %v2445 = vadd.f32 %v2437, %v2442
    %v2446 = vadd.f32 %v2438, %v2442
    %s2447 = scalar_lea.vmem %s5, 8
    %v2448 = vld [vmem:[%s2447] sm:$0x1]
    %v2449 = vadd.f32 %v2443, %v28
    %v2450 = vadd.f32 %v2444, %v29
    %v2451 = vadd.f32 %v2445, %v30
    %v2452 = vadd.f32 %v2446, %v31
    %s2453 = scalar_lea.vmem %s2, 32
    %v2454 = vld [vmem:[%s2453] sm:$0xff]
    %v2455 = vld [vmem:[%s2453 + $0x8] sm:$0xff]
    %v2456 = vld [vmem:[%s2453 + $0x10] sm:$0xff]
    %v2457 = vld [vmem:[%s2453 + $0x18] sm:$0xff]
    %v2458 = vlaneseq
    %v2459 = vshrl.u32 %v2458, 7
    %v2460 = vsub.s32 0, %v2459
    %v2461 = vrot.slane %v2448, %v2460
    %v2463 = vsel %vm45, %v2449, 0
    %v2466 = vsel %vm45, %v2450, 0
    %v2469 = vsel %vm45, %v2451, 0
    %v2472 = vsel %vm45, %v2452, 0
    %2474 = vmatprep.subr.mxu0 0.0
    %2475 = vmatpush1.msra.mxu0 %v2454
    %2476 = vmatprep.subr.mxu0 0.0
    %2477 = vmatpush1.msra.mxu0 %v2455
    %2478 = vmatprep.subr.mxu0 0.0
    %2479 = vmatpush1.msra.mxu0 %v2456
    %2480 = vmatprep.subr.mxu0 0.0
    %2481 = vmatpush1.msra.mxu0 %v2457
    %2482 = vmatprep.subr.mxu0 0.0
    %2483 = vmatpush1.msra.mxu0 0.0
    %2484 = vmatprep.subr.mxu0 0.0
    %2485 = vmatpush1.msra.mxu0 0.0
    %2486 = vmatprep.subr.mxu0 0.0
    %2487 = vmatpush1.msra.mxu0 0.0
    %2488 = vmatprep.subr.mxu0 0.0
    %2489 = vmatpush1.msra.mxu0 0.0
    %2490 = vmatprep.subr.mxu0 0.0
    %2491 = vmatpush1.msra.mxu0 0.0
    %2492 = vmatprep.subr.mxu0 0.0
    %2493 = vmatpush1.msra.mxu0 0.0
    %2494 = vmatprep.subr.mxu0 0.0
    %2495 = vmatpush1.msra.mxu0 0.0
    %2496 = vmatprep.subr.mxu0 0.0
    %2497 = vmatpush1.msra.mxu0 0.0
    %2498 = vmatprep.subr.mxu0 0.0
    %2499 = vmatpush1.msra.mxu0 0.0
    %2500 = vmatprep.subr.mxu0 0.0
    %2501 = vmatpush1.msra.mxu0 0.0
    %2502 = vmatprep.subr.mxu0 0.0
    %2503 = vmatpush1.msra.mxu0 0.0
    %2504 = vmatprep.subr.mxu0 0.0
    %2505 = vmatpush1.msra.mxu0 0.0
    %2506 = vmatprep.subr.mxu0 0.0
    %2507 = vmatpush1.msra.mxu0 0.0
    %2508 = vmatprep.subr.mxu0 0.0
    %2509 = vmatpush1.msra.mxu0 0.0
    %2510 = vmatprep.subr.mxu0 0.0
    %2511 = vmatpush1.msra.mxu0 0.0
    %2512 = vmatprep.subr.mxu0 0.0
    %2513 = vmatpush1.msra.mxu0 0.0
    %2514 = vmatprep.subr.mxu0 0.0
    %2515 = vmatpush1.msra.mxu0 0.0
    %2516 = vmatprep.subr.mxu0 0.0
    %2517 = vmatpush1.msra.mxu0 0.0
    %2518 = vmatprep.subr.mxu0 0.0
    %2519 = vmatpush1.msra.mxu0 0.0
    %2520 = vmatprep.subr.mxu0 0.0
    %2521 = vmatpush1.msra.mxu0 0.0
    %2522 = vmatprep.subr.mxu0 0.0
    %2523 = vmatpush1.msra.mxu0 0.0
    %2524 = vmatprep.subr.mxu0 0.0
    %2525 = vmatpush1.msra.mxu0 0.0
    %2526 = vmatprep.subr.mxu0 0.0
    %2527 = vmatpush1.msra.mxu0 0.0
    %2528 = vmatprep.subr.mxu0 0.0
    %2529 = vmatpush1.msra.mxu0 0.0
    %2530 = vmatprep.subr.mxu0 0.0
    %2531 = vmatpush1.msra.mxu0 0.0
    %2532 = vmatprep.subr.mxu0 0.0
    %2533 = vmatpush1.msra.mxu0 0.0
    %2534 = vmatprep.subr.mxu0 0.0
    %2535 = vmatpush1.msra.mxu0 0.0
    %2536 = vmatprep.subr.mxu0 0.0
    %2537 = vmatpush1.msra.mxu0 0.0
    %2538 = vmatprep.mubr.f32.mxu0 0.0
    %2539 = vmatmul.mubr.f32.gmra.mrb[0].mxu0 %v2463
    %v2540 = vpop.f32.mrb[0].mxu0
    %v2541 = vadd.f32 %v2461, %v2540
    %v2542 = vpop.f32.mrb[0].mxu0
    %2543 = vmatprep.mubr.f32.mxu0 0.0
    %2544 = vmatmul.mubr.f32.gmra.mrb[0].mxu0 %v2466
    %v2545 = vpop.f32.mrb[0].mxu0
    %v2546 = vadd.f32 %v2461, %v2545
    %v2547 = vpop.f32.mrb[0].mxu0
    %2548 = vmatprep.mubr.f32.mxu0 0.0
    %2549 = vmatmul.mubr.f32.gmra.mrb[0].mxu0 %v2469
    %v2550 = vpop.f32.mrb[0].mxu0
    %v2551 = vadd.f32 %v2461, %v2550
    %v2552 = vpop.f32.mrb[0].mxu0
    %2553 = vmatprep.mubr.f32.mxu0 0.0
    %2554 = vmatmul.mubr.f32.gmra.mrb[0].mxu0 %v2472
    %v2555 = vpop.f32.mrb[0].mxu0
    %v2556 = vadd.f32 %v2461, %v2555
    %v2557 = vpop.f32.mrb[0].mxu0
    %2558 = vdwg.mxu0
    %2563 = vrot.lane.b32.xlu0 %v2454, 64
    %v2564 = vpop.permute.xlu0 %2563
    %2565 = vrot.lane.b32.xlu0 %v2455, 64
    %v2566 = vpop.permute.xlu0 %2565
    %2567 = vrot.lane.b32.xlu0 %v2456, 64
    %v2568 = vpop.permute.xlu0 %2567
    %2569 = vrot.lane.b32.xlu0 %v2457, 64
    %v2570 = vpop.permute.xlu0 %2569
    %2576 = vrot.lane.b32.xlu0 %v2461, 64
    %v2577 = vpop.permute.xlu0 %2576
    %v2580 = vsel %vm45, %v2443, 0
    %v2583 = vsel %vm45, %v2444, 0
    %v2586 = vsel %vm45, %v2445, 0
    %v2589 = vsel %vm45, %v2446, 0
    %2591 = vmatprep.subr.mxu0 0.0
    %2592 = vmatpush1.msra.mxu0 %v2564
    %2593 = vmatprep.subr.mxu0 0.0
    %2594 = vmatpush1.msra.mxu0 %v2566
    %2595 = vmatprep.subr.mxu0 0.0
    %2596 = vmatpush1.msra.mxu0 %v2568
    %2597 = vmatprep.subr.mxu0 0.0
    %2598 = vmatpush1.msra.mxu0 %v2570
    %2599 = vmatprep.subr.mxu0 0.0
    %2600 = vmatpush1.msra.mxu0 0.0
    %2601 = vmatprep.subr.mxu0 0.0
    %2602 = vmatpush1.msra.mxu0 0.0
    %2603 = vmatprep.subr.mxu0 0.0
    %2604 = vmatpush1.msra.mxu0 0.0
    %2605 = vmatprep.subr.mxu0 0.0
    %2606 = vmatpush1.msra.mxu0 0.0
    %2607 = vmatprep.subr.mxu0 0.0
    %2608 = vmatpush1.msra.mxu0 0.0
    %2609 = vmatprep.subr.mxu0 0.0
    %2610 = vmatpush1.msra.mxu0 0.0
    %2611 = vmatprep.subr.mxu0 0.0
    %2612 = vmatpush1.msra.mxu0 0.0
    %2613 = vmatprep.subr.mxu0 0.0
    %2614 = vmatpush1.msra.mxu0 0.0
    %2615 = vmatprep.subr.mxu0 0.0
    %2616 = vmatpush1.msra.mxu0 0.0
    %2617 = vmatprep.subr.mxu0 0.0
    %2618 = vmatpush1.msra.mxu0 0.0
    %2619 = vmatprep.subr.mxu0 0.0
    %2620 = vmatpush1.msra.mxu0 0.0
    %2621 = vmatprep.subr.mxu0 0.0
    %2622 = vmatpush1.msra.mxu0 0.0
    %2623 = vmatprep.subr.mxu0 0.0
    %2624 = vmatpush1.msra.mxu0 0.0
    %2625 = vmatprep.subr.mxu0 0.0
    %2626 = vmatpush1.msra.mxu0 0.0
    %2627 = vmatprep.subr.mxu0 0.0
    %2628 = vmatpush1.msra.mxu0 0.0
    %2629 = vmatprep.subr.mxu0 0.0
    %2630 = vmatpush1.msra.mxu0 0.0
    %2631 = vmatprep.subr.mxu0 0.0
    %2632 = vmatpush1.msra.mxu0 0.0
    %2633 = vmatprep.subr.mxu0 0.0
    %2634 = vmatpush1.msra.mxu0 0.0
    %2635 = vmatprep.subr.mxu0 0.0
    %2636 = vmatpush1.msra.mxu0 0.0
    %2637 = vmatprep.subr.mxu0 0.0
    %2638 = vmatpush1.msra.mxu0 0.0
    %2639 = vmatprep.subr.mxu0 0.0
    %2640 = vmatpush1.msra.mxu0 0.0
    %2641 = vmatprep.subr.mxu0 0.0
    %2642 = vmatpush1.msra.mxu0 0.0
    %2643 = vmatprep.subr.mxu0 0.0
    %2644 = vmatpush1.msra.mxu0 0.0
    %2645 = vmatprep.subr.mxu0 0.0
    %2646 = vmatpush1.msra.mxu0 0.0
    %2647 = vmatprep.subr.mxu0 0.0
    %2648 = vmatpush1.msra.mxu0 0.0
    %2649 = vmatprep.subr.mxu0 0.0
    %2650 = vmatpush1.msra.mxu0 0.0
    %2651 = vmatprep.subr.mxu0 0.0
    %2652 = vmatpush1.msra.mxu0 0.0
    %2653 = vmatprep.subr.mxu0 0.0
    %2654 = vmatpush1.msra.mxu0 0.0
    %2655 = vmatprep.mubr.f32.mxu0 0.0
    %2656 = vmatmul.mubr.f32.gmra.mrb[0].mxu0 %v2580
    %v2657 = vpop.f32.mrb[0].mxu0
    %v2658 = vadd.f32 %v2577, %v2657
    %v2659 = vpop.f32.mrb[0].mxu0
    %2660 = vmatprep.mubr.f32.mxu0 0.0
    %2661 = vmatmul.mubr.f32.gmra.mrb[0].mxu0 %v2583
    %v2662 = vpop.f32.mrb[0].mxu0
    %v2663 = vadd.f32 %v2577, %v2662
    %v2664 = vpop.f32.mrb[0].mxu0
    %2665 = vmatprep.mubr.f32.mxu0 0.0
    %2666 = vmatmul.mubr.f32.gmra.mrb[0].mxu0 %v2586
    %v2667 = vpop.f32.mrb[0].mxu0
    %v2668 = vadd.f32 %v2577, %v2667
    %v2669 = vpop.f32.mrb[0].mxu0
    %2670 = vmatprep.mubr.f32.mxu0 0.0
    %2671 = vmatmul.mubr.f32.gmra.mrb[0].mxu0 %v2589
    %v2672 = vpop.f32.mrb[0].mxu0
    %v2673 = vadd.f32 %v2577, %v2672
    %v2674 = vpop.f32.mrb[0].mxu0
    %2675 = vdwg.mxu0
    %v2676 = vmul.f32 %v2541, 0.35355338
    %v2677 = vmul.f32 %v2546, 0.35355338
    %v2678 = vmul.f32 %v2551, 0.35355338
    %v2679 = vmul.f32 %v2556, 0.35355338
    %2682 = vrot.lane.b32.xlu0 %v2541, 96
    %v2683 = vpop.permute.xlu0 %2682
    %2684 = vrot.lane.b32.xlu0 %v2546, 96
    %v2685 = vpop.permute.xlu0 %2684
    %v2687 = vsel %vm270, %v2676, 0
    %v2690 = vsel %vm270, %v2677, 0
    %v2692 = vsel %vm270, %v2683, 0
    %v2694 = vsel %vm270, %v2685, 0
    %2696 = vmatprep.subr.mxu0 0.0
    %2697 = vmatpush1.xpose.msra.mxu0 %v2692
    %2698 = vmatprep.subr.mxu0 0.0
    %2699 = vmatpush1.xpose.msra.mxu0 %v2694
    %2700 = vmatprep.subr.mxu0 0.0
    %2701 = vmatpush1.xpose.msra.mxu0 0.0
    %2702 = vmatprep.subr.mxu0 0.0
    %2703 = vmatpush1.xpose.msra.mxu0 0.0
    %2704 = vmatprep.subr.mxu0 0.0
    %2705 = vmatpush1.xpose.msra.mxu0 0.0
    %2706 = vmatprep.subr.mxu0 0.0
    %2707 = vmatpush1.xpose.msra.mxu0 0.0
    %2708 = vmatprep.subr.mxu0 0.0
    %2709 = vmatpush1.xpose.msra.mxu0 0.0
    %2710 = vmatprep.subr.mxu0 0.0
    %2711 = vmatpush1.xpose.msra.mxu0 0.0
    %2712 = vmatprep.subr.mxu0 0.0
    %2713 = vmatpush1.xpose.msra.mxu0 0.0
    %2714 = vmatprep.subr.mxu0 0.0
    %2715 = vmatpush1.xpose.msra.mxu0 0.0
    %2716 = vmatprep.subr.mxu0 0.0
    %2717 = vmatpush1.xpose.msra.mxu0 0.0
    %2718 = vmatprep.subr.mxu0 0.0
    %2719 = vmatpush1.xpose.msra.mxu0 0.0
    %2720 = vmatprep.subr.mxu0 0.0
    %2721 = vmatpush1.xpose.msra.mxu0 0.0
    %2722 = vmatprep.subr.mxu0 0.0
    %2723 = vmatpush1.xpose.msra.mxu0 0.0
    %2724 = vmatprep.subr.mxu0 0.0
    %2725 = vmatpush1.xpose.msra.mxu0 0.0
    %2726 = vmatprep.subr.mxu0 0.0
    %2727 = vmatpush1.xpose.msra.mxu0 0.0
    %2728 = vmatprep.subr.mxu0 0.0
    %2729 = vmatpush1.xpose.msra.mxu0 0.0
    %2730 = vmatprep.subr.mxu0 0.0
    %2731 = vmatpush1.xpose.msra.mxu0 0.0
    %2732 = vmatprep.subr.mxu0 0.0
    %2733 = vmatpush1.xpose.msra.mxu0 0.0
    %2734 = vmatprep.subr.mxu0 0.0
    %2735 = vmatpush1.xpose.msra.mxu0 0.0
    %2736 = vmatprep.subr.mxu0 0.0
    %2737 = vmatpush1.xpose.msra.mxu0 0.0
    %2738 = vmatprep.subr.mxu0 0.0
    %2739 = vmatpush1.xpose.msra.mxu0 0.0
    %2740 = vmatprep.subr.mxu0 0.0
    %2741 = vmatpush1.xpose.msra.mxu0 0.0
    %2742 = vmatprep.subr.mxu0 0.0
    %2743 = vmatpush1.xpose.msra.mxu0 0.0
    %2744 = vmatprep.subr.mxu0 0.0
    %2745 = vmatpush1.xpose.msra.mxu0 0.0
    %2746 = vmatprep.subr.mxu0 0.0
    %2747 = vmatpush1.xpose.msra.mxu0 0.0
    %2748 = vmatprep.subr.mxu0 0.0
    %2749 = vmatpush1.xpose.msra.mxu0 0.0
    %2750 = vmatprep.subr.mxu0 0.0
    %2751 = vmatpush1.xpose.msra.mxu0 0.0
    %2752 = vmatprep.subr.mxu0 0.0
    %2753 = vmatpush1.xpose.msra.mxu0 0.0
    %2754 = vmatprep.subr.mxu0 0.0
    %2755 = vmatpush1.xpose.msra.mxu0 0.0
    %2756 = vmatprep.subr.mxu0 0.0
    %2757 = vmatpush1.xpose.msra.mxu0 0.0
    %2758 = vmatprep.subr.mxu0 0.0
    %2759 = vmatpush1.xpose.msra.mxu0 0.0
    %2760 = vmatprep.mubr.f32.mxu0 0.0
    %2761 = vmatmul.mubr.f32.gmra.mrb[0].mxu0 %v2687
    %v2762 = vpop.f32.mrb[0].mxu0
    %v2763 = vadd.f32 0.0, %v2762
    %v2764 = vpop.f32.mrb[0].mxu0
    %2765 = vmatprep.mubr.f32.mxu0 0.0
    %2766 = vmatmul.mubr.f32.gmra.mrb[0].mxu0 %v2690
    %v2767 = vpop.f32.mrb[0].mxu0
    %v2768 = vadd.f32 0.0, %v2767
    %v2769 = vpop.f32.mrb[0].mxu0
    %2770 = vdwg.mxu0
    %2773 = vrot.lane.b32.xlu0 %v2551, 96
    %v2774 = vpop.permute.xlu0 %2773
    %2775 = vrot.lane.b32.xlu0 %v2556, 96
    %v2776 = vpop.permute.xlu0 %2775
    %v2778 = vsel %vm270, %v2678, 0
    %v2781 = vsel %vm270, %v2679, 0
    %v2783 = vsel %vm270, %v2774, 0
    %v2785 = vsel %vm270, %v2776, 0
    %2787 = vmatprep.subr.mxu0 0.0
    %2788 = vmatpush1.xpose.msra.mxu0 %v2783
    %2789 = vmatprep.subr.mxu0 0.0
    %2790 = vmatpush1.xpose.msra.mxu0 %v2785
    %2791 = vmatprep.subr.mxu0 0.0
    %2792 = vmatpush1.xpose.msra.mxu0 0.0
    %2793 = vmatprep.subr.mxu0 0.0
    %2794 = vmatpush1.xpose.msra.mxu0 0.0
    %2795 = vmatprep.subr.mxu0 0.0
    %2796 = vmatpush1.xpose.msra.mxu0 0.0
    %2797 = vmatprep.subr.mxu0 0.0
    %2798 = vmatpush1.xpose.msra.mxu0 0.0
    %2799 = vmatprep.subr.mxu0 0.0
    %2800 = vmatpush1.xpose.msra.mxu0 0.0
    %2801 = vmatprep.subr.mxu0 0.0
    %2802 = vmatpush1.xpose.msra.mxu0 0.0
    %2803 = vmatprep.subr.mxu0 0.0
    %2804 = vmatpush1.xpose.msra.mxu0 0.0
    %2805 = vmatprep.subr.mxu0 0.0
    %2806 = vmatpush1.xpose.msra.mxu0 0.0
    %2807 = vmatprep.subr.mxu0 0.0
    %2808 = vmatpush1.xpose.msra.mxu0 0.0
    %2809 = vmatprep.subr.mxu0 0.0
    %2810 = vmatpush1.xpose.msra.mxu0 0.0
    %2811 = vmatprep.subr.mxu0 0.0
    %2812 = vmatpush1.xpose.msra.mxu0 0.0
    %2813 = vmatprep.subr.mxu0 0.0
    %2814 = vmatpush1.xpose.msra.mxu0 0.0
    %2815 = vmatprep.subr.mxu0 0.0
    %2816 = vmatpush1.xpose.msra.mxu0 0.0
    %2817 = vmatprep.subr.mxu0 0.0
    %2818 = vmatpush1.xpose.msra.mxu0 0.0
    %2819 = vmatprep.subr.mxu0 0.0
    %2820 = vmatpush1.xpose.msra.mxu0 0.0
    %2821 = vmatprep.subr.mxu0 0.0
    %2822 = vmatpush1.xpose.msra.mxu0 0.0
    %2823 = vmatprep.subr.mxu0 0.0
    %2824 = vmatpush1.xpose.msra.mxu0 0.0
    %2825 = vmatprep.subr.mxu0 0.0
    %2826 = vmatpush1.xpose.msra.mxu0 0.0
    %2827 = vmatprep.subr.mxu0 0.0
    %2828 = vmatpush1.xpose.msra.mxu0 0.0
    %2829 = vmatprep.subr.mxu0 0.0
    %2830 = vmatpush1.xpose.msra.mxu0 0.0
    %2831 = vmatprep.subr.mxu0 0.0
    %2832 = vmatpush1.xpose.msra.mxu0 0.0
    %2833 = vmatprep.subr.mxu0 0.0
    %2834 = vmatpush1.xpose.msra.mxu0 0.0
    %2835 = vmatprep.subr.mxu0 0.0
    %2836 = vmatpush1.xpose.msra.mxu0 0.0
    %2837 = vmatprep.subr.mxu0 0.0
    %2838 = vmatpush1.xpose.msra.mxu0 0.0
    %2839 = vmatprep.subr.mxu0 0.0
    %2840 = vmatpush1.xpose.msra.mxu0 0.0
    %2841 = vmatprep.subr.mxu0 0.0
    %2842 = vmatpush1.xpose.msra.mxu0 0.0
    %2843 = vmatprep.subr.mxu0 0.0
    %2844 = vmatpush1.xpose.msra.mxu0 0.0
    %2845 = vmatprep.subr.mxu0 0.0
    %2846 = vmatpush1.xpose.msra.mxu0 0.0
    %2847 = vmatprep.subr.mxu0 0.0
    %2848 = vmatpush1.xpose.msra.mxu0 0.0
    %2849 = vmatprep.subr.mxu0 0.0
    %2850 = vmatpush1.xpose.msra.mxu0 0.0
    %2851 = vmatprep.mubr.f32.mxu0 0.0
    %2852 = vmatmul.mubr.f32.gmra.mrb[0].mxu0 %v2778
    %v2853 = vpop.f32.mrb[0].mxu0
    %v2854 = vadd.f32 0.0, %v2853
    %v2855 = vpop.f32.mrb[0].mxu0
    %2856 = vmatprep.mubr.f32.mxu0 0.0
    %2857 = vmatmul.mubr.f32.gmra.mrb[0].mxu0 %v2781
    %v2858 = vpop.f32.mrb[0].mxu0
    %v2859 = vadd.f32 0.0, %v2858
    %v2860 = vpop.f32.mrb[0].mxu0
    %2861 = vdwg.mxu0
    %v2862 = vsel %vm447, %v2763, -inf
    %2863 = vmax.xlane.f32.xlu0 %v2862
    %v2864 = vpop.xlane.xlu0 %2863
    %v2865 = vsel %vm447, %v2768, -inf
    %2866 = vmax.xlane.f32.xlu0 %v2865
    %v2867 = vpop.xlane.xlu0 %2866
    %v2868 = vsel %vm447, %v2854, -inf
    %2869 = vmax.xlane.f32.xlu0 %v2868
    %v2870 = vpop.xlane.xlu0 %2869
    %v2871 = vsel %vm447, %v2859, -inf
    %2872 = vmax.xlane.f32.xlu0 %v2871
    %v2873 = vpop.xlane.xlu0 %2872
    %v2874 = vsub.f32 %v2763, %v2864
    %v2875 = vsub.f32 %v2768, %v2867
    %v2876 = vsub.f32 %v2854, %v2870
    %v2877 = vsub.f32 %v2859, %v2873
    %v2878 = vmul.f32 %v2874, 1.442695
    %v2879 = vpow.pop %v2878
    %v2880 = vmul.f32 %v2875, 1.442695
    %v2881 = vpow.pop %v2880
    %v2882 = vmul.f32 %v2876, 1.442695
    %v2883 = vpow.pop %v2882
    %v2884 = vmul.f32 %v2877, 1.442695
    %v2885 = vpow.pop %v2884
    %v2886 = vsel %vm447, %v2879, 0.0
    %2887 = vadd.xlane.f32.xlu0 %v2886
    %v2888 = vpop.xlane.xlu0 %2887
    %v2889 = vsel %vm447, %v2881, 0.0
    %2890 = vadd.xlane.f32.xlu0 %v2889
    %v2891 = vpop.xlane.xlu0 %2890
    %v2892 = vsel %vm447, %v2883, 0.0
    %2893 = vadd.xlane.f32.xlu0 %v2892
    %v2894 = vpop.xlane.xlu0 %2893
    %v2895 = vsel %vm447, %v2885, 0.0
    %2896 = vadd.xlane.f32.xlu0 %v2895
    %v2897 = vpop.xlane.xlu0 %2896
    %v2898 = vrcp.pop %v2888
    %v2899 = vrcp.pop %v2891
    %v2900 = vrcp.pop %v2894
    %v2901 = vrcp.pop %v2897
    %v2902 = vmul.f32 %v2888, %v2898
    %v2903 = vmul.f32 %v2891, %v2899
    %v2904 = vmul.f32 %v2894, %v2900
    %v2905 = vmul.f32 %v2897, %v2901
    %v2906 = vsub.f32 2.0, %v2902
    %v2907 = vsub.f32 2.0, %v2903
    %v2908 = vsub.f32 2.0, %v2904
    %v2909 = vsub.f32 2.0, %v2905
    %v2910 = vmul.f32 %v2898, %v2906
    %v2911 = vmul.f32 %v2899, %v2907
    %v2912 = vmul.f32 %v2900, %v2908
    %v2913 = vmul.f32 %v2901, %v2909
    %v2914 = vmul.f32 %v2879, %v2910
    %v2915 = vmul.f32 %v2881, %v2911
    %v2916 = vmul.f32 %v2883, %v2912
    %v2917 = vmul.f32 %v2885, %v2913
    %v2919 = vsel %vm447, %v2914, 0
    %v2922 = vsel %vm447, %v2915, 0
    %2924 = vmatprep.subr.mxu0 0.0
    %2925 = vmatpush1.msra.mxu0 %v2658
    %2926 = vmatprep.subr.mxu0 0.0
    %2927 = vmatpush1.msra.mxu0 %v2663
    %2928 = vmatprep.subr.mxu0 0.0
    %2929 = vmatpush1.msra.mxu0 0.0
    %2930 = vmatprep.subr.mxu0 0.0
    %2931 = vmatpush1.msra.mxu0 0.0
    %2932 = vmatprep.subr.mxu0 0.0
    %2933 = vmatpush1.msra.mxu0 0.0
    %2934 = vmatprep.subr.mxu0 0.0
    %2935 = vmatpush1.msra.mxu0 0.0
    %2936 = vmatprep.subr.mxu0 0.0
    %2937 = vmatpush1.msra.mxu0 0.0
    %2938 = vmatprep.subr.mxu0 0.0
    %2939 = vmatpush1.msra.mxu0 0.0
    %2940 = vmatprep.subr.mxu0 0.0
    %2941 = vmatpush1.msra.mxu0 0.0
    %2942 = vmatprep.subr.mxu0 0.0
    %2943 = vmatpush1.msra.mxu0 0.0
    %2944 = vmatprep.subr.mxu0 0.0
    %2945 = vmatpush1.msra.mxu0 0.0
    %2946 = vmatprep.subr.mxu0 0.0
    %2947 = vmatpush1.msra.mxu0 0.0
    %2948 = vmatprep.subr.mxu0 0.0
    %2949 = vmatpush1.msra.mxu0 0.0
    %2950 = vmatprep.subr.mxu0 0.0
    %2951 = vmatpush1.msra.mxu0 0.0
    %2952 = vmatprep.subr.mxu0 0.0
    %2953 = vmatpush1.msra.mxu0 0.0
    %2954 = vmatprep.subr.mxu0 0.0
    %2955 = vmatpush1.msra.mxu0 0.0
    %2956 = vmatprep.subr.mxu0 0.0
    %2957 = vmatpush1.msra.mxu0 0.0
    %2958 = vmatprep.subr.mxu0 0.0
    %2959 = vmatpush1.msra.mxu0 0.0
    %2960 = vmatprep.subr.mxu0 0.0
    %2961 = vmatpush1.msra.mxu0 0.0
    %2962 = vmatprep.subr.mxu0 0.0
    %2963 = vmatpush1.msra.mxu0 0.0
    %2964 = vmatprep.subr.mxu0 0.0
    %2965 = vmatpush1.msra.mxu0 0.0
    %2966 = vmatprep.subr.mxu0 0.0
    %2967 = vmatpush1.msra.mxu0 0.0
    %2968 = vmatprep.subr.mxu0 0.0
    %2969 = vmatpush1.msra.mxu0 0.0
    %2970 = vmatprep.subr.mxu0 0.0
    %2971 = vmatpush1.msra.mxu0 0.0
    %2972 = vmatprep.subr.mxu0 0.0
    %2973 = vmatpush1.msra.mxu0 0.0
    %2974 = vmatprep.subr.mxu0 0.0
    %2975 = vmatpush1.msra.mxu0 0.0
    %2976 = vmatprep.subr.mxu0 0.0
    %2977 = vmatpush1.msra.mxu0 0.0
    %2978 = vmatprep.subr.mxu0 0.0
    %2979 = vmatpush1.msra.mxu0 0.0
    %2980 = vmatprep.subr.mxu0 0.0
    %2981 = vmatpush1.msra.mxu0 0.0
    %2982 = vmatprep.subr.mxu0 0.0
    %2983 = vmatpush1.msra.mxu0 0.0
    %2984 = vmatprep.subr.mxu0 0.0
    %2985 = vmatpush1.msra.mxu0 0.0
    %2986 = vmatprep.subr.mxu0 0.0
    %2987 = vmatpush1.msra.mxu0 0.0
    %2988 = vmatprep.mubr.f32.mxu0 0.0
    %2989 = vmatmul.mubr.f32.gmra.mrb[0].mxu0 %v2919
    %v2990 = vpop.f32.mrb[0].mxu0
    %v2991 = vadd.f32 0.0, %v2990
    %v2992 = vpop.f32.mrb[0].mxu0
    %2993 = vmatprep.mubr.f32.mxu0 0.0
    %2994 = vmatmul.mubr.f32.gmra.mrb[0].mxu0 %v2922
    %v2995 = vpop.f32.mrb[0].mxu0
    %v2996 = vadd.f32 0.0, %v2995
    %v2997 = vpop.f32.mrb[0].mxu0
    %2998 = vdwg.mxu0
    %v3000 = vsel %vm447, %v2916, 0
    %v3003 = vsel %vm447, %v2917, 0
    %3005 = vmatprep.subr.mxu0 0.0
    %3006 = vmatpush1.msra.mxu0 %v2668
    %3007 = vmatprep.subr.mxu0 0.0
    %3008 = vmatpush1.msra.mxu0 %v2673
    %3009 = vmatprep.subr.mxu0 0.0
    %3010 = vmatpush1.msra.mxu0 0.0
    %3011 = vmatprep.subr.mxu0 0.0
    %3012 = vmatpush1.msra.mxu0 0.0
    %3013 = vmatprep.subr.mxu0 0.0
    %3014 = vmatpush1.msra.mxu0 0.0
    %3015 = vmatprep.subr.mxu0 0.0
    %3016 = vmatpush1.msra.mxu0 0.0
    %3017 = vmatprep.subr.mxu0 0.0
    %3018 = vmatpush1.msra.mxu0 0.0
    %3019 = vmatprep.subr.mxu0 0.0
    %3020 = vmatpush1.msra.mxu0 0.0
    %3021 = vmatprep.subr.mxu0 0.0
    %3022 = vmatpush1.msra.mxu0 0.0
    %3023 = vmatprep.subr.mxu0 0.0
    %3024 = vmatpush1.msra.mxu0 0.0
    %3025 = vmatprep.subr.mxu0 0.0
    %3026 = vmatpush1.msra.mxu0 0.0
    %3027 = vmatprep.subr.mxu0 0.0
    %3028 = vmatpush1.msra.mxu0 0.0
    %3029 = vmatprep.subr.mxu0 0.0
    %3030 = vmatpush1.msra.mxu0 0.0
    %3031 = vmatprep.subr.mxu0 0.0
    %3032 = vmatpush1.msra.mxu0 0.0
    %3033 = vmatprep.subr.mxu0 0.0
    %3034 = vmatpush1.msra.mxu0 0.0
    %3035 = vmatprep.subr.mxu0 0.0
    %3036 = vmatpush1.msra.mxu0 0.0
    %3037 = vmatprep.subr.mxu0 0.0
    %3038 = vmatpush1.msra.mxu0 0.0
    %3039 = vmatprep.subr.mxu0 0.0
    %3040 = vmatpush1.msra.mxu0 0.0
    %3041 = vmatprep.subr.mxu0 0.0
    %3042 = vmatpush1.msra.mxu0 0.0
    %3043 = vmatprep.subr.mxu0 0.0
    %3044 = vmatpush1.msra.mxu0 0.0
    %3045 = vmatprep.subr.mxu0 0.0
    %3046 = vmatpush1.msra.mxu0 0.0
    %3047 = vmatprep.subr.mxu0 0.0
    %3048 = vmatpush1.msra.mxu0 0.0
    %3049 = vmatprep.subr.mxu0 0.0
    %3050 = vmatpush1.msra.mxu0 0.0
    %3051 = vmatprep.subr.mxu0 0.0
    %3052 = vmatpush1.msra.mxu0 0.0
    %3053 = vmatprep.subr.mxu0 0.0
    %3054 = vmatpush1.msra.mxu0 0.0
    %3055 = vmatprep.subr.mxu0 0.0
    %3056 = vmatpush1.msra.mxu0 0.0
    %3057 = vmatprep.subr.mxu0 0.0
    %3058 = vmatpush1.msra.mxu0 0.0
    %3059 = vmatprep.subr.mxu0 0.0
    %3060 = vmatpush1.msra.mxu0 0.0
    %3061 = vmatprep.subr.mxu0 0.0
    %3062 = vmatpush1.msra.mxu0 0.0
    %3063 = vmatprep.subr.mxu0 0.0
    %3064 = vmatpush1.msra.mxu0 0.0
    %3065 = vmatprep.subr.mxu0 0.0
    %3066 = vmatpush1.msra.mxu0 0.0
    %3067 = vmatprep.subr.mxu0 0.0
    %3068 = vmatpush1.msra.mxu0 0.0
    %3069 = vmatprep.mubr.f32.mxu0 0.0
    %3070 = vmatmul.mubr.f32.gmra.mrb[0].mxu0 %v3000
    %v3071 = vpop.f32.mrb[0].mxu0
    %v3072 = vadd.f32 0.0, %v3071
    %v3073 = vpop.f32.mrb[0].mxu0
    %3074 = vmatprep.mubr.f32.mxu0 0.0
    %3075 = vmatmul.mubr.f32.gmra.mrb[0].mxu0 %v3003
    %v3076 = vpop.f32.mrb[0].mxu0
    %v3077 = vadd.f32 0.0, %v3076
    %v3078 = vpop.f32.mrb[0].mxu0
    %3079 = vdwg.mxu0
    %3080 = vrot.lane.b32.xlu0 %v2676, 120
    %v3081 = vpop.permute.xlu0 %3080
    %3082 = vrot.lane.b32.xlu0 %v2677, 120
    %v3083 = vpop.permute.xlu0 %3082
    %3084 = vrot.lane.b32.xlu0 %v2541, 88
    %v3085 = vpop.permute.xlu0 %3084
    %3086 = vrot.lane.b32.xlu0 %v2546, 88
    %v3087 = vpop.permute.xlu0 %3086
    %v3088 = vsel %vm270, %v3081, 0
    %v3090 = vsel %vm270, %v3083, 0
    %v3092 = vsel %vm270, %v3085, 0
    %v3094 = vsel %vm270, %v3087, 0
    %3096 = vmatprep.subr.mxu0 0.0
    %3097 = vmatpush1.xpose.msra.mxu0 %v3092
    %3098 = vmatprep.subr.mxu0 0.0
    %3099 = vmatpush1.xpose.msra.mxu0 %v3094
    %3100 = vmatprep.subr.mxu0 0.0
    %3101 = vmatpush1.xpose.msra.mxu0 0.0
    %3102 = vmatprep.subr.mxu0 0.0
    %3103 = vmatpush1.xpose.msra.mxu0 0.0
    %3104 = vmatprep.subr.mxu0 0.0
    %3105 = vmatpush1.xpose.msra.mxu0 0.0
    %3106 = vmatprep.subr.mxu0 0.0
    %3107 = vmatpush1.xpose.msra.mxu0 0.0
    %3108 = vmatprep.subr.mxu0 0.0
    %3109 = vmatpush1.xpose.msra.mxu0 0.0
    %3110 = vmatprep.subr.mxu0 0.0
    %3111 = vmatpush1.xpose.msra.mxu0 0.0
    %3112 = vmatprep.subr.mxu0 0.0
    %3113 = vmatpush1.xpose.msra.mxu0 0.0
    %3114 = vmatprep.subr.mxu0 0.0
    %3115 = vmatpush1.xpose.msra.mxu0 0.0
    %3116 = vmatprep.subr.mxu0 0.0
    %3117 = vmatpush1.xpose.msra.mxu0 0.0
    %3118 = vmatprep.subr.mxu0 0.0
    %3119 = vmatpush1.xpose.msra.mxu0 0.0
    %3120 = vmatprep.subr.mxu0 0.0
    %3121 = vmatpush1.xpose.msra.mxu0 0.0
    %3122 = vmatprep.subr.mxu0 0.0
    %3123 = vmatpush1.xpose.msra.mxu0 0.0
    %3124 = vmatprep.subr.mxu0 0.0
    %3125 = vmatpush1.xpose.msra.mxu0 0.0
    %3126 = vmatprep.subr.mxu0 0.0
    %3127 = vmatpush1.xpose.msra.mxu0 0.0
    %3128 = vmatprep.subr.mxu0 0.0
    %3129 = vmatpush1.xpose.msra.mxu0 0.0
    %3130 = vmatprep.subr.mxu0 0.0
    %3131 = vmatpush1.xpose.msra.mxu0 0.0
    %3132 = vmatprep.subr.mxu0 0.0
    %3133 = vmatpush1.xpose.msra.mxu0 0.0
    %3134 = vmatprep.subr.mxu0 0.0
    %3135 = vmatpush1.xpose.msra.mxu0 0.0
    %3136 = vmatprep.subr.mxu0 0.0
    %3137 = vmatpush1.xpose.msra.mxu0 0.0
    %3138 = vmatprep.subr.mxu0 0.0
    %3139 = vmatpush1.xpose.msra.mxu0 0.0
    %3140 = vmatprep.subr.mxu0 0.0
    %3141 = vmatpush1.xpose.msra.mxu0 0.0
    %3142 = vmatprep.subr.mxu0 0.0
    %3143 = vmatpush1.xpose.msra.mxu0 0.0
    %3144 = vmatprep.subr.mxu0 0.0
    %3145 = vmatpush1.xpose.msra.mxu0 0.0
    %3146 = vmatprep.subr.mxu0 0.0
    %3147 = vmatpush1.xpose.msra.mxu0 0.0
    %3148 = vmatprep.subr.mxu0 0.0
    %3149 = vmatpush1.xpose.msra.mxu0 0.0
    %3150 = vmatprep.subr.mxu0 0.0
    %3151 = vmatpush1.xpose.msra.mxu0 0.0
    %3152 = vmatprep.subr.mxu0 0.0
    %3153 = vmatpush1.xpose.msra.mxu0 0.0
    %3154 = vmatprep.subr.mxu0 0.0
    %3155 = vmatpush1.xpose.msra.mxu0 0.0
    %3156 = vmatprep.subr.mxu0 0.0
    %3157 = vmatpush1.xpose.msra.mxu0 0.0
    %3158 = vmatprep.subr.mxu0 0.0
    %3159 = vmatpush1.xpose.msra.mxu0 0.0
    %3160 = vmatprep.mubr.f32.mxu0 0.0
    %3161 = vmatmul.mubr.f32.gmra.mrb[0].mxu0 %v3088
    %v3162 = vpop.f32.mrb[0].mxu0
    %v3163 = vadd.f32 0.0, %v3162
    %v3164 = vpop.f32.mrb[0].mxu0
    %3165 = vmatprep.mubr.f32.mxu0 0.0
    %3166 = vmatmul.mubr.f32.gmra.mrb[0].mxu0 %v3090
    %v3167 = vpop.f32.mrb[0].mxu0
    %v3168 = vadd.f32 0.0, %v3167
    %v3169 = vpop.f32.mrb[0].mxu0
    %3170 = vdwg.mxu0
    %3171 = vrot.lane.b32.xlu0 %v2678, 120
    %v3172 = vpop.permute.xlu0 %3171
    %3173 = vrot.lane.b32.xlu0 %v2679, 120
    %v3174 = vpop.permute.xlu0 %3173
    %3175 = vrot.lane.b32.xlu0 %v2551, 88
    %v3176 = vpop.permute.xlu0 %3175
    %3177 = vrot.lane.b32.xlu0 %v2556, 88
    %v3178 = vpop.permute.xlu0 %3177
    %v3179 = vsel %vm270, %v3172, 0
    %v3181 = vsel %vm270, %v3174, 0
    %v3183 = vsel %vm270, %v3176, 0
    %v3185 = vsel %vm270, %v3178, 0
    %3187 = vmatprep.subr.mxu0 0.0
    %3188 = vmatpush1.xpose.msra.mxu0 %v3183
    %3189 = vmatprep.subr.mxu0 0.0
    %3190 = vmatpush1.xpose.msra.mxu0 %v3185
    %3191 = vmatprep.subr.mxu0 0.0
    %3192 = vmatpush1.xpose.msra.mxu0 0.0
    %3193 = vmatprep.subr.mxu0 0.0
    %3194 = vmatpush1.xpose.msra.mxu0 0.0
    %3195 = vmatprep.subr.mxu0 0.0
    %3196 = vmatpush1.xpose.msra.mxu0 0.0
    %3197 = vmatprep.subr.mxu0 0.0
    %3198 = vmatpush1.xpose.msra.mxu0 0.0
    %3199 = vmatprep.subr.mxu0 0.0
    %3200 = vmatpush1.xpose.msra.mxu0 0.0
    %3201 = vmatprep.subr.mxu0 0.0
    %3202 = vmatpush1.xpose.msra.mxu0 0.0
    %3203 = vmatprep.subr.mxu0 0.0
    %3204 = vmatpush1.xpose.msra.mxu0 0.0
    %3205 = vmatprep.subr.mxu0 0.0
    %3206 = vmatpush1.xpose.msra.mxu0 0.0
    %3207 = vmatprep.subr.mxu0 0.0
    %3208 = vmatpush1.xpose.msra.mxu0 0.0
    %3209 = vmatprep.subr.mxu0 0.0
    %3210 = vmatpush1.xpose.msra.mxu0 0.0
    %3211 = vmatprep.subr.mxu0 0.0
    %3212 = vmatpush1.xpose.msra.mxu0 0.0
    %3213 = vmatprep.subr.mxu0 0.0
    %3214 = vmatpush1.xpose.msra.mxu0 0.0
    %3215 = vmatprep.subr.mxu0 0.0
    %3216 = vmatpush1.xpose.msra.mxu0 0.0
    %3217 = vmatprep.subr.mxu0 0.0
    %3218 = vmatpush1.xpose.msra.mxu0 0.0
    %3219 = vmatprep.subr.mxu0 0.0
    %3220 = vmatpush1.xpose.msra.mxu0 0.0
    %3221 = vmatprep.subr.mxu0 0.0
    %3222 = vmatpush1.xpose.msra.mxu0 0.0
    %3223 = vmatprep.subr.mxu0 0.0
    %3224 = vmatpush1.xpose.msra.mxu0 0.0
    %3225 = vmatprep.subr.mxu0 0.0
    %3226 = vmatpush1.xpose.msra.mxu0 0.0
    %3227 = vmatprep.subr.mxu0 0.0
    %3228 = vmatpush1.xpose.msra.mxu0 0.0
    %3229 = vmatprep.subr.mxu0 0.0
    %3230 = vmatpush1.xpose.msra.mxu0 0.0
    %3231 = vmatprep.subr.mxu0 0.0
    %3232 = vmatpush1.xpose.msra.mxu0 0.0
    %3233 = vmatprep.subr.mxu0 0.0
    %3234 = vmatpush1.xpose.msra.mxu0 0.0
    %3235 = vmatprep.subr.mxu0 0.0
    %3236 = vmatpush1.xpose.msra.mxu0 0.0
    %3237 = vmatprep.subr.mxu0 0.0
    %3238 = vmatpush1.xpose.msra.mxu0 0.0
    %3239 = vmatprep.subr.mxu0 0.0
    %3240 = vmatpush1.xpose.msra.mxu0 0.0
    %3241 = vmatprep.subr.mxu0 0.0
    %3242 = vmatpush1.xpose.msra.mxu0 0.0
    %3243 = vmatprep.subr.mxu0 0.0
    %3244 = vmatpush1.xpose.msra.mxu0 0.0
    %3245 = vmatprep.subr.mxu0 0.0
    %3246 = vmatpush1.xpose.msra.mxu0 0.0
    %3247 = vmatprep.subr.mxu0 0.0
    %3248 = vmatpush1.xpose.msra.mxu0 0.0
    %3249 = vmatprep.subr.mxu0 0.0
    %3250 = vmatpush1.xpose.msra.mxu0 0.0
    %3251 = vmatprep.mubr.f32.mxu0 0.0
    %3252 = vmatmul.mubr.f32.gmra.mrb[0].mxu0 %v3179
    %v3253 = vpop.f32.mrb[0].mxu0
    %v3254 = vadd.f32 0.0, %v3253
    %v3255 = vpop.f32.mrb[0].mxu0
    %3256 = vmatprep.mubr.f32.mxu0 0.0
    %3257 = vmatmul.mubr.f32.gmra.mrb[0].mxu0 %v3181
    %v3258 = vpop.f32.mrb[0].mxu0
    %v3259 = vadd.f32 0.0, %v3258
    %v3260 = vpop.f32.mrb[0].mxu0
    %3261 = vdwg.mxu0
    %v3262 = vsel %vm447, %v3163, -inf
    %3263 = vmax.xlane.f32.xlu0 %v3262
    %v3264 = vpop.xlane.xlu0 %3263
    %v3265 = vsel %vm447, %v3168, -inf
    %3266 = vmax.xlane.f32.xlu0 %v3265
    %v3267 = vpop.xlane.xlu0 %3266
    %v3268 = vsel %vm447, %v3254, -inf
    %3269 = vmax.xlane.f32.xlu0 %v3268
    %v3270 = vpop.xlane.xlu0 %3269
    %v3271 = vsel %vm447, %v3259, -inf
    %3272 = vmax.xlane.f32.xlu0 %v3271
    %v3273 = vpop.xlane.xlu0 %3272
    %v3274 = vsub.f32 %v3163, %v3264
    %v3275 = vsub.f32 %v3168, %v3267
    %v3276 = vsub.f32 %v3254, %v3270
    %v3277 = vsub.f32 %v3259, %v3273
    %v3278 = vmul.f32 %v3274, 1.442695
    %v3279 = vpow.pop %v3278
    %v3280 = vmul.f32 %v3275, 1.442695
    %v3281 = vpow.pop %v3280
    %v3282 = vmul.f32 %v3276, 1.442695
    %v3283 = vpow.pop %v3282
    %v3284 = vmul.f32 %v3277, 1.442695
    %v3285 = vpow.pop %v3284
    %v3286 = vsel %vm447, %v3279, 0.0
    %3287 = vadd.xlane.f32.xlu0 %v3286
    %v3288 = vpop.xlane.xlu0 %3287
    %v3289 = vsel %vm447, %v3281, 0.0
    %3290 = vadd.xlane.f32.xlu0 %v3289
    %v3291 = vpop.xlane.xlu0 %3290
    %v3292 = vsel %vm447, %v3283, 0.0
    %3293 = vadd.xlane.f32.xlu0 %v3292
    %v3294 = vpop.xlane.xlu0 %3293
    %v3295 = vsel %vm447, %v3285, 0.0
    %3296 = vadd.xlane.f32.xlu0 %v3295
    %v3297 = vpop.xlane.xlu0 %3296
    %v3298 = vrcp.pop %v3288
    %v3299 = vrcp.pop %v3291
    %v3300 = vrcp.pop %v3294
    %v3301 = vrcp.pop %v3297
    %v3302 = vmul.f32 %v3288, %v3298
    %v3303 = vmul.f32 %v3291, %v3299
    %v3304 = vmul.f32 %v3294, %v3300
    %v3305 = vmul.f32 %v3297, %v3301
    %v3306 = vsub.f32 2.0, %v3302
    %v3307 = vsub.f32 2.0, %v3303
    %v3308 = vsub.f32 2.0, %v3304
    %v3309 = vsub.f32 2.0, %v3305
    %v3310 = vmul.f32 %v3298, %v3306
    %v3311 = vmul.f32 %v3299, %v3307
    %v3312 = vmul.f32 %v3300, %v3308
    %v3313 = vmul.f32 %v3301, %v3309
    %v3314 = vmul.f32 %v3279, %v3310
    %v3315 = vmul.f32 %v3281, %v3311
    %v3316 = vmul.f32 %v3283, %v3312
    %v3317 = vmul.f32 %v3285, %v3313
    %3320 = vrot.lane.b32.xlu0 %v2658, 120
    %v3321 = vpop.permute.xlu0 %3320
    %3322 = vrot.lane.b32.xlu0 %v2663, 120
    %v3323 = vpop.permute.xlu0 %3322
    %v3327 = vsel %vm447, %v3314, 0
    %v3330 = vsel %vm447, %v3315, 0
    %3332 = vmatprep.subr.mxu0 0.0
    %3333 = vmatpush1.msra.mxu0 %v3321
    %3334 = vmatprep.subr.mxu0 0.0
    %3335 = vmatpush1.msra.mxu0 %v3323
    %3336 = vmatprep.subr.mxu0 0.0
    %3337 = vmatpush1.msra.mxu0 0.0
    %3338 = vmatprep.subr.mxu0 0.0
    %3339 = vmatpush1.msra.mxu0 0.0
    %3340 = vmatprep.subr.mxu0 0.0
    %3341 = vmatpush1.msra.mxu0 0.0
    %3342 = vmatprep.subr.mxu0 0.0
    %3343 = vmatpush1.msra.mxu0 0.0
    %3344 = vmatprep.subr.mxu0 0.0
    %3345 = vmatpush1.msra.mxu0 0.0
    %3346 = vmatprep.subr.mxu0 0.0
    %3347 = vmatpush1.msra.mxu0 0.0
    %3348 = vmatprep.subr.mxu0 0.0
    %3349 = vmatpush1.msra.mxu0 0.0
    %3350 = vmatprep.subr.mxu0 0.0
    %3351 = vmatpush1.msra.mxu0 0.0
    %3352 = vmatprep.subr.mxu0 0.0
    %3353 = vmatpush1.msra.mxu0 0.0
    %3354 = vmatprep.subr.mxu0 0.0
    %3355 = vmatpush1.msra.mxu0 0.0
    %3356 = vmatprep.subr.mxu0 0.0
    %3357 = vmatpush1.msra.mxu0 0.0
    %3358 = vmatprep.subr.mxu0 0.0
    %3359 = vmatpush1.msra.mxu0 0.0
    %3360 = vmatprep.subr.mxu0 0.0
    %3361 = vmatpush1.msra.mxu0 0.0
    %3362 = vmatprep.subr.mxu0 0.0
    %3363 = vmatpush1.msra.mxu0 0.0
    %3364 = vmatprep.subr.mxu0 0.0
    %3365 = vmatpush1.msra.mxu0 0.0
    %3366 = vmatprep.subr.mxu0 0.0
    %3367 = vmatpush1.msra.mxu0 0.0
    %3368 = vmatprep.subr.mxu0 0.0
    %3369 = vmatpush1.msra.mxu0 0.0
    %3370 = vmatprep.subr.mxu0 0.0
    %3371 = vmatpush1.msra.mxu0 0.0
    %3372 = vmatprep.subr.mxu0 0.0
    %3373 = vmatpush1.msra.mxu0 0.0
    %3374 = vmatprep.subr.mxu0 0.0
    %3375 = vmatpush1.msra.mxu0 0.0
    %3376 = vmatprep.subr.mxu0 0.0
    %3377 = vmatpush1.msra.mxu0 0.0
    %3378 = vmatprep.subr.mxu0 0.0
    %3379 = vmatpush1.msra.mxu0 0.0
    %3380 = vmatprep.subr.mxu0 0.0
    %3381 = vmatpush1.msra.mxu0 0.0
    %3382 = vmatprep.subr.mxu0 0.0
    %3383 = vmatpush1.msra.mxu0 0.0
    %3384 = vmatprep.subr.mxu0 0.0
    %3385 = vmatpush1.msra.mxu0 0.0
    %3386 = vmatprep.subr.mxu0 0.0
    %3387 = vmatpush1.msra.mxu0 0.0
    %3388 = vmatprep.subr.mxu0 0.0
    %3389 = vmatpush1.msra.mxu0 0.0
    %3390 = vmatprep.subr.mxu0 0.0
    %3391 = vmatpush1.msra.mxu0 0.0
    %3392 = vmatprep.subr.mxu0 0.0
    %3393 = vmatpush1.msra.mxu0 0.0
    %3394 = vmatprep.subr.mxu0 0.0
    %3395 = vmatpush1.msra.mxu0 0.0
    %3396 = vmatprep.mubr.f32.mxu0 0.0
    %3397 = vmatmul.mubr.f32.gmra.mrb[0].mxu0 %v3327
    %v3398 = vpop.f32.mrb[0].mxu0
    %v3399 = vadd.f32 0.0, %v3398
    %v3400 = vpop.f32.mrb[0].mxu0
    %3401 = vmatprep.mubr.f32.mxu0 0.0
    %3402 = vmatmul.mubr.f32.gmra.mrb[0].mxu0 %v3330
    %v3403 = vpop.f32.mrb[0].mxu0
    %v3404 = vadd.f32 0.0, %v3403
    %v3405 = vpop.f32.mrb[0].mxu0
    %3406 = vdwg.mxu0
    %3409 = vrot.lane.b32.xlu0 %v2668, 120
    %v3410 = vpop.permute.xlu0 %3409
    %3411 = vrot.lane.b32.xlu0 %v2673, 120
    %v3412 = vpop.permute.xlu0 %3411
    %v3416 = vsel %vm447, %v3316, 0
    %v3419 = vsel %vm447, %v3317, 0
    %3421 = vmatprep.subr.mxu0 0.0
    %3422 = vmatpush1.msra.mxu0 %v3410
    %3423 = vmatprep.subr.mxu0 0.0
    %3424 = vmatpush1.msra.mxu0 %v3412
    %3425 = vmatprep.subr.mxu0 0.0
    %3426 = vmatpush1.msra.mxu0 0.0
    %3427 = vmatprep.subr.mxu0 0.0
    %3428 = vmatpush1.msra.mxu0 0.0
    %3429 = vmatprep.subr.mxu0 0.0
    %3430 = vmatpush1.msra.mxu0 0.0
    %3431 = vmatprep.subr.mxu0 0.0
    %3432 = vmatpush1.msra.mxu0 0.0
    %3433 = vmatprep.subr.mxu0 0.0
    %3434 = vmatpush1.msra.mxu0 0.0
    %3435 = vmatprep.subr.mxu0 0.0
    %3436 = vmatpush1.msra.mxu0 0.0
    %3437 = vmatprep.subr.mxu0 0.0
    %3438 = vmatpush1.msra.mxu0 0.0
    %3439 = vmatprep.subr.mxu0 0.0
    %3440 = vmatpush1.msra.mxu0 0.0
    %3441 = vmatprep.subr.mxu0 0.0
    %3442 = vmatpush1.msra.mxu0 0.0
    %3443 = vmatprep.subr.mxu0 0.0
    %3444 = vmatpush1.msra.mxu0 0.0
    %3445 = vmatprep.subr.mxu0 0.0
    %3446 = vmatpush1.msra.mxu0 0.0
    %3447 = vmatprep.subr.mxu0 0.0
    %3448 = vmatpush1.msra.mxu0 0.0
    %3449 = vmatprep.subr.mxu0 0.0
    %3450 = vmatpush1.msra.mxu0 0.0
    %3451 = vmatprep.subr.mxu0 0.0
    %3452 = vmatpush1.msra.mxu0 0.0
    %3453 = vmatprep.subr.mxu0 0.0
    %3454 = vmatpush1.msra.mxu0 0.0
    %3455 = vmatprep.subr.mxu0 0.0
    %3456 = vmatpush1.msra.mxu0 0.0
    %3457 = vmatprep.subr.mxu0 0.0
    %3458 = vmatpush1.msra.mxu0 0.0
    %3459 = vmatprep.subr.mxu0 0.0
    %3460 = vmatpush1.msra.mxu0 0.0
    %3461 = vmatprep.subr.mxu0 0.0
    %3462 = vmatpush1.msra.mxu0 0.0
    %3463 = vmatprep.subr.mxu0 0.0
    %3464 = vmatpush1.msra.mxu0 0.0
    %3465 = vmatprep.subr.mxu0 0.0
    %3466 = vmatpush1.msra.mxu0 0.0
    %3467 = vmatprep.subr.mxu0 0.0
    %3468 = vmatpush1.msra.mxu0 0.0
    %3469 = vmatprep.subr.mxu0 0.0
    %3470 = vmatpush1.msra.mxu0 0.0
    %3471 = vmatprep.subr.mxu0 0.0
    %3472 = vmatpush1.msra.mxu0 0.0
    %3473 = vmatprep.subr.mxu0 0.0
    %3474 = vmatpush1.msra.mxu0 0.0
    %3475 = vmatprep.subr.mxu0 0.0
    %3476 = vmatpush1.msra.mxu0 0.0
    %3477 = vmatprep.subr.mxu0 0.0
    %3478 = vmatpush1.msra.mxu0 0.0
    %3479 = vmatprep.subr.mxu0 0.0
    %3480 = vmatpush1.msra.mxu0 0.0
    %3481 = vmatprep.subr.mxu0 0.0
    %3482 = vmatpush1.msra.mxu0 0.0
    %3483 = vmatprep.subr.mxu0 0.0
    %3484 = vmatpush1.msra.mxu0 0.0
    %3485 = vmatprep.mubr.f32.mxu0 0.0
    %3486 = vmatmul.mubr.f32.gmra.mrb[0].mxu0 %v3416
    %v3487 = vpop.f32.mrb[0].mxu0
    %v3488 = vadd.f32 0.0, %v3487
    %v3489 = vpop.f32.mrb[0].mxu0
    %3490 = vmatprep.mubr.f32.mxu0 0.0
    %3491 = vmatmul.mubr.f32.gmra.mrb[0].mxu0 %v3419
    %v3492 = vpop.f32.mrb[0].mxu0
    %v3493 = vadd.f32 0.0, %v3492
    %v3494 = vpop.f32.mrb[0].mxu0
    %3495 = vdwg.mxu0
    %3496 = vrot.lane.b32.xlu0 %v2676, 112
    %v3497 = vpop.permute.xlu0 %3496
    %3498 = vrot.lane.b32.xlu0 %v2677, 112
    %v3499 = vpop.permute.xlu0 %3498
    %3500 = vrot.lane.b32.xlu0 %v2541, 80
    %v3501 = vpop.permute.xlu0 %3500
    %3502 = vrot.lane.b32.xlu0 %v2546, 80
    %v3503 = vpop.permute.xlu0 %3502
    %v3504 = vsel %vm270, %v3497, 0
    %v3506 = vsel %vm270, %v3499, 0
    %v3508 = vsel %vm270, %v3501, 0
    %v3510 = vsel %vm270, %v3503, 0
    %3512 = vmatprep.subr.mxu0 0.0
    %3513 = vmatpush1.xpose.msra.mxu0 %v3508
    %3514 = vmatprep.subr.mxu0 0.0
    %3515 = vmatpush1.xpose.msra.mxu0 %v3510
    %3516 = vmatprep.subr.mxu0 0.0
    %3517 = vmatpush1.xpose.msra.mxu0 0.0
    %3518 = vmatprep.subr.mxu0 0.0
    %3519 = vmatpush1.xpose.msra.mxu0 0.0
    %3520 = vmatprep.subr.mxu0 0.0
    %3521 = vmatpush1.xpose.msra.mxu0 0.0
    %3522 = vmatprep.subr.mxu0 0.0
    %3523 = vmatpush1.xpose.msra.mxu0 0.0
    %3524 = vmatprep.subr.mxu0 0.0
    %3525 = vmatpush1.xpose.msra.mxu0 0.0
    %3526 = vmatprep.subr.mxu0 0.0
    %3527 = vmatpush1.xpose.msra.mxu0 0.0
    %3528 = vmatprep.subr.mxu0 0.0
    %3529 = vmatpush1.xpose.msra.mxu0 0.0
    %3530 = vmatprep.subr.mxu0 0.0
    %3531 = vmatpush1.xpose.msra.mxu0 0.0
    %3532 = vmatprep.subr.mxu0 0.0
    %3533 = vmatpush1.xpose.msra.mxu0 0.0
    %3534 = vmatprep.subr.mxu0 0.0
    %3535 = vmatpush1.xpose.msra.mxu0 0.0
    %3536 = vmatprep.subr.mxu0 0.0
    %3537 = vmatpush1.xpose.msra.mxu0 0.0
    %3538 = vmatprep.subr.mxu0 0.0
    %3539 = vmatpush1.xpose.msra.mxu0 0.0
    %3540 = vmatprep.subr.mxu0 0.0
    %3541 = vmatpush1.xpose.msra.mxu0 0.0
    %3542 = vmatprep.subr.mxu0 0.0
    %3543 = vmatpush1.xpose.msra.mxu0 0.0
    %3544 = vmatprep.subr.mxu0 0.0
    %3545 = vmatpush1.xpose.msra.mxu0 0.0
    %3546 = vmatprep.subr.mxu0 0.0
    %3547 = vmatpush1.xpose.msra.mxu0 0.0
    %3548 = vmatprep.subr.mxu0 0.0
    %3549 = vmatpush1.xpose.msra.mxu0 0.0
    %3550 = vmatprep.subr.mxu0 0.0
    %3551 = vmatpush1.xpose.msra.mxu0 0.0
    %3552 = vmatprep.subr.mxu0 0.0
    %3553 = vmatpush1.xpose.msra.mxu0 0.0
    %3554 = vmatprep.subr.mxu0 0.0
    %3555 = vmatpush1.xpose.msra.mxu0 0.0
    %3556 = vmatprep.subr.mxu0 0.0
    %3557 = vmatpush1.xpose.msra.mxu0 0.0
    %3558 = vmatprep.subr.mxu0 0.0
    %3559 = vmatpush1.xpose.msra.mxu0 0.0
    %3560 = vmatprep.subr.mxu0 0.0
    %3561 = vmatpush1.xpose.msra.mxu0 0.0
    %3562 = vmatprep.subr.mxu0 0.0
    %3563 = vmatpush1.xpose.msra.mxu0 0.0
    %3564 = vmatprep.subr.mxu0 0.0
    %3565 = vmatpush1.xpose.msra.mxu0 0.0
    %3566 = vmatprep.subr.mxu0 0.0
    %3567 = vmatpush1.xpose.msra.mxu0 0.0
    %3568 = vmatprep.subr.mxu0 0.0
    %3569 = vmatpush1.xpose.msra.mxu0 0.0
    %3570 = vmatprep.subr.mxu0 0.0
    %3571 = vmatpush1.xpose.msra.mxu0 0.0
    %3572 = vmatprep.subr.mxu0 0.0
    %3573 = vmatpush1.xpose.msra.mxu0 0.0
    %3574 = vmatprep.subr.mxu0 0.0
    %3575 = vmatpush1.xpose.msra.mxu0 0.0
    %3576 = vmatprep.mubr.f32.mxu0 0.0
    %3577 = vmatmul.mubr.f32.gmra.mrb[0].mxu0 %v3504
    %v3578 = vpop.f32.mrb[0].mxu0
    %v3579 = vadd.f32 0.0, %v3578
    %v3580 = vpop.f32.mrb[0].mxu0
    %3581 = vmatprep.mubr.f32.mxu0 0.0
    %3582 = vmatmul.mubr.f32.gmra.mrb[0].mxu0 %v3506
    %v3583 = vpop.f32.mrb[0].mxu0
    %v3584 = vadd.f32 0.0, %v3583
    %v3585 = vpop.f32.mrb[0].mxu0
    %3586 = vdwg.mxu0
    %3587 = vrot.lane.b32.xlu0 %v2678, 112
    %v3588 = vpop.permute.xlu0 %3587
    %3589 = vrot.lane.b32.xlu0 %v2679, 112
    %v3590 = vpop.permute.xlu0 %3589
    %3591 = vrot.lane.b32.xlu0 %v2551, 80
    %v3592 = vpop.permute.xlu0 %3591
    %3593 = vrot.lane.b32.xlu0 %v2556, 80
    %v3594 = vpop.permute.xlu0 %3593
    %v3595 = vsel %vm270, %v3588, 0
    %v3597 = vsel %vm270, %v3590, 0
    %v3599 = vsel %vm270, %v3592, 0
    %v3601 = vsel %vm270, %v3594, 0
    %3603 = vmatprep.subr.mxu0 0.0
    %3604 = vmatpush1.xpose.msra.mxu0 %v3599
    %3605 = vmatprep.subr.mxu0 0.0
    %3606 = vmatpush1.xpose.msra.mxu0 %v3601
    %3607 = vmatprep.subr.mxu0 0.0
    %3608 = vmatpush1.xpose.msra.mxu0 0.0
    %3609 = vmatprep.subr.mxu0 0.0
    %3610 = vmatpush1.xpose.msra.mxu0 0.0
    %3611 = vmatprep.subr.mxu0 0.0
    %3612 = vmatpush1.xpose.msra.mxu0 0.0
    %3613 = vmatprep.subr.mxu0 0.0
    %3614 = vmatpush1.xpose.msra.mxu0 0.0
    %3615 = vmatprep.subr.mxu0 0.0
    %3616 = vmatpush1.xpose.msra.mxu0 0.0
    %3617 = vmatprep.subr.mxu0 0.0
    %3618 = vmatpush1.xpose.msra.mxu0 0.0
    %3619 = vmatprep.subr.mxu0 0.0
    %3620 = vmatpush1.xpose.msra.mxu0 0.0
    %3621 = vmatprep.subr.mxu0 0.0
    %3622 = vmatpush1.xpose.msra.mxu0 0.0
    %3623 = vmatprep.subr.mxu0 0.0
    %3624 = vmatpush1.xpose.msra.mxu0 0.0
    %3625 = vmatprep.subr.mxu0 0.0
    %3626 = vmatpush1.xpose.msra.mxu0 0.0
    %3627 = vmatprep.subr.mxu0 0.0
    %3628 = vmatpush1.xpose.msra.mxu0 0.0
    %3629 = vmatprep.subr.mxu0 0.0
    %3630 = vmatpush1.xpose.msra.mxu0 0.0
    %3631 = vmatprep.subr.mxu0 0.0
    %3632 = vmatpush1.xpose.msra.mxu0 0.0
    %3633 = vmatprep.subr.mxu0 0.0
    %3634 = vmatpush1.xpose.msra.mxu0 0.0
    %3635 = vmatprep.subr.mxu0 0.0
    %3636 = vmatpush1.xpose.msra.mxu0 0.0
    %3637 = vmatprep.subr.mxu0 0.0
    %3638 = vmatpush1.xpose.msra.mxu0 0.0
    %3639 = vmatprep.subr.mxu0 0.0
    %3640 = vmatpush1.xpose.msra.mxu0 0.0
    %3641 = vmatprep.subr.mxu0 0.0
    %3642 = vmatpush1.xpose.msra.mxu0 0.0
    %3643 = vmatprep.subr.mxu0 0.0
    %3644 = vmatpush1.xpose.msra.mxu0 0.0
    %3645 = vmatprep.subr.mxu0 0.0
    %3646 = vmatpush1.xpose.msra.mxu0 0.0
    %3647 = vmatprep.subr.mxu0 0.0
    %3648 = vmatpush1.xpose.msra.mxu0 0.0
    %3649 = vmatprep.subr.mxu0 0.0
    %3650 = vmatpush1.xpose.msra.mxu0 0.0
    %3651 = vmatprep.subr.mxu0 0.0
    %3652 = vmatpush1.xpose.msra.mxu0 0.0
    %3653 = vmatprep.subr.mxu0 0.0
    %3654 = vmatpush1.xpose.msra.mxu0 0.0
    %3655 = vmatprep.subr.mxu0 0.0
    %3656 = vmatpush1.xpose.msra.mxu0 0.0
    %3657 = vmatprep.subr.mxu0 0.0
    %3658 = vmatpush1.xpose.msra.mxu0 0.0
    %3659 = vmatprep.subr.mxu0 0.0
    %3660 = vmatpush1.xpose.msra.mxu0 0.0
    %3661 = vmatprep.subr.mxu0 0.0
    %3662 = vmatpush1.xpose.msra.mxu0 0.0
    %3663 = vmatprep.subr.mxu0 0.0
    %3664 = vmatpush1.xpose.msra.mxu0 0.0
    %3665 = vmatprep.subr.mxu0 0.0
    %3666 = vmatpush1.xpose.msra.mxu0 0.0
    %3667 = vmatprep.mubr.f32.mxu0 0.0
    %3668 = vmatmul.mubr.f32.gmra.mrb[0].mxu0 %v3595
    %v3669 = vpop.f32.mrb[0].mxu0
    %v3670 = vadd.f32 0.0, %v3669
    %v3671 = vpop.f32.mrb[0].mxu0
    %3672 = vmatprep.mubr.f32.mxu0 0.0
    %3673 = vmatmul.mubr.f32.gmra.mrb[0].mxu0 %v3597
    %v3674 = vpop.f32.mrb[0].mxu0
    %v3675 = vadd.f32 0.0, %v3674
    %v3676 = vpop.f32.mrb[0].mxu0
    %3677 = vdwg.mxu0
    %v3678 = vsel %vm447, %v3579, -inf
    %3679 = vmax.xlane.f32.xlu0 %v3678
    %v3680 = vpop.xlane.xlu0 %3679
    %v3681 = vsel %vm447, %v3584, -inf
    %3682 = vmax.xlane.f32.xlu0 %v3681
    %v3683 = vpop.xlane.xlu0 %3682
    %v3684 = vsel %vm447, %v3670, -inf
    %3685 = vmax.xlane.f32.xlu0 %v3684
    %v3686 = vpop.xlane.xlu0 %3685
    %v3687 = vsel %vm447, %v3675, -inf
    %3688 = vmax.xlane.f32.xlu0 %v3687
    %v3689 = vpop.xlane.xlu0 %3688
    %v3690 = vsub.f32 %v3579, %v3680
    %v3691 = vsub.f32 %v3584, %v3683
    %v3692 = vsub.f32 %v3670, %v3686
    %v3693 = vsub.f32 %v3675, %v3689
    %v3694 = vmul.f32 %v3690, 1.442695
    %v3695 = vpow.pop %v3694
    %v3696 = vmul.f32 %v3691, 1.442695
    %v3697 = vpow.pop %v3696
    %v3698 = vmul.f32 %v3692, 1.442695
    %v3699 = vpow.pop %v3698
    %v3700 = vmul.f32 %v3693, 1.442695
    %v3701 = vpow.pop %v3700
    %v3702 = vsel %vm447, %v3695, 0.0
    %3703 = vadd.xlane.f32.xlu0 %v3702
    %v3704 = vpop.xlane.xlu0 %3703
    %v3705 = vsel %vm447, %v3697, 0.0
    %3706 = vadd.xlane.f32.xlu0 %v3705
    %v3707 = vpop.xlane.xlu0 %3706
    %v3708 = vsel %vm447, %v3699, 0.0
    %3709 = vadd.xlane.f32.xlu0 %v3708
    %v3710 = vpop.xlane.xlu0 %3709
    %v3711 = vsel %vm447, %v3701, 0.0
    %3712 = vadd.xlane.f32.xlu0 %v3711
    %v3713 = vpop.xlane.xlu0 %3712
    %v3714 = vrcp.pop %v3704
    %v3715 = vrcp.pop %v3707
    %v3716 = vrcp.pop %v3710
    %v3717 = vrcp.pop %v3713
    %v3718 = vmul.f32 %v3704, %v3714
    %v3719 = vmul.f32 %v3707, %v3715
    %v3720 = vmul.f32 %v3710, %v3716
    %v3721 = vmul.f32 %v3713, %v3717
    %v3722 = vsub.f32 2.0, %v3718
    %v3723 = vsub.f32 2.0, %v3719
    %v3724 = vsub.f32 2.0, %v3720
    %v3725 = vsub.f32 2.0, %v3721
    %v3726 = vmul.f32 %v3714, %v3722
    %v3727 = vmul.f32 %v3715, %v3723
    %v3728 = vmul.f32 %v3716, %v3724
    %v3729 = vmul.f32 %v3717, %v3725
    %v3730 = vmul.f32 %v3695, %v3726
    %v3731 = vmul.f32 %v3697, %v3727
    %v3732 = vmul.f32 %v3699, %v3728
    %v3733 = vmul.f32 %v3701, %v3729
    %3734 = vrot.lane.b32.xlu0 %v2658, 112
    %v3735 = vpop.permute.xlu0 %3734
    %3736 = vrot.lane.b32.xlu0 %v2663, 112
    %v3737 = vpop.permute.xlu0 %3736
    %v3741 = vsel %vm447, %v3730, 0
    %v3744 = vsel %vm447, %v3731, 0
    %3746 = vmatprep.subr.mxu0 0.0
    %3747 = vmatpush1.msra.mxu0 %v3735
    %3748 = vmatprep.subr.mxu0 0.0
    %3749 = vmatpush1.msra.mxu0 %v3737
    %3750 = vmatprep.subr.mxu0 0.0
    %3751 = vmatpush1.msra.mxu0 0.0
    %3752 = vmatprep.subr.mxu0 0.0
    %3753 = vmatpush1.msra.mxu0 0.0
    %3754 = vmatprep.subr.mxu0 0.0
    %3755 = vmatpush1.msra.mxu0 0.0
    %3756 = vmatprep.subr.mxu0 0.0
    %3757 = vmatpush1.msra.mxu0 0.0
    %3758 = vmatprep.subr.mxu0 0.0
    %3759 = vmatpush1.msra.mxu0 0.0
    %3760 = vmatprep.subr.mxu0 0.0
    %3761 = vmatpush1.msra.mxu0 0.0
    %3762 = vmatprep.subr.mxu0 0.0
    %3763 = vmatpush1.msra.mxu0 0.0
    %3764 = vmatprep.subr.mxu0 0.0
    %3765 = vmatpush1.msra.mxu0 0.0
    %3766 = vmatprep.subr.mxu0 0.0
    %3767 = vmatpush1.msra.mxu0 0.0
    %3768 = vmatprep.subr.mxu0 0.0
    %3769 = vmatpush1.msra.mxu0 0.0
    %3770 = vmatprep.subr.mxu0 0.0
    %3771 = vmatpush1.msra.mxu0 0.0
    %3772 = vmatprep.subr.mxu0 0.0
    %3773 = vmatpush1.msra.mxu0 0.0
    %3774 = vmatprep.subr.mxu0 0.0
    %3775 = vmatpush1.msra.mxu0 0.0
    %3776 = vmatprep.subr.mxu0 0.0
    %3777 = vmatpush1.msra.mxu0 0.0
    %3778 = vmatprep.subr.mxu0 0.0
    %3779 = vmatpush1.msra.mxu0 0.0
    %3780 = vmatprep.subr.mxu0 0.0
    %3781 = vmatpush1.msra.mxu0 0.0
    %3782 = vmatprep.subr.mxu0 0.0
    %3783 = vmatpush1.msra.mxu0 0.0
    %3784 = vmatprep.subr.mxu0 0.0
    %3785 = vmatpush1.msra.mxu0 0.0
    %3786 = vmatprep.subr.mxu0 0.0
    %3787 = vmatpush1.msra.mxu0 0.0
    %3788 = vmatprep.subr.mxu0 0.0
    %3789 = vmatpush1.msra.mxu0 0.0
    %3790 = vmatprep.subr.mxu0 0.0
    %3791 = vmatpush1.msra.mxu0 0.0
    %3792 = vmatprep.subr.mxu0 0.0
    %3793 = vmatpush1.msra.mxu0 0.0
    %3794 = vmatprep.subr.mxu0 0.0
    %3795 = vmatpush1.msra.mxu0 0.0
    %3796 = vmatprep.subr.mxu0 0.0
    %3797 = vmatpush1.msra.mxu0 0.0
    %3798 = vmatprep.subr.mxu0 0.0
    %3799 = vmatpush1.msra.mxu0 0.0
    %3800 = vmatprep.subr.mxu0 0.0
    %3801 = vmatpush1.msra.mxu0 0.0
    %3802 = vmatprep.subr.mxu0 0.0
    %3803 = vmatpush1.msra.mxu0 0.0
    %3804 = vmatprep.subr.mxu0 0.0
    %3805 = vmatpush1.msra.mxu0 0.0
    %3806 = vmatprep.subr.mxu0 0.0
    %3807 = vmatpush1.msra.mxu0 0.0
    %3808 = vmatprep.subr.mxu0 0.0
    %3809 = vmatpush1.msra.mxu0 0.0
    %3810 = vmatprep.mubr.f32.mxu0 0.0
    %3811 = vmatmul.mubr.f32.gmra.mrb[0].mxu0 %v3741
    %v3812 = vpop.f32.mrb[0].mxu0
    %v3813 = vadd.f32 0.0, %v3812
    %v3814 = vpop.f32.mrb[0].mxu0
    %3815 = vmatprep.mubr.f32.mxu0 0.0
    %3816 = vmatmul.mubr.f32.gmra.mrb[0].mxu0 %v3744
    %v3817 = vpop.f32.mrb[0].mxu0
    %v3818 = vadd.f32 0.0, %v3817
    %v3819 = vpop.f32.mrb[0].mxu0
    %3820 = vdwg.mxu0
    %3821 = vrot.lane.b32.xlu0 %v2668, 112
    %v3822 = vpop.permute.xlu0 %3821
    %3823 = vrot.lane.b32.xlu0 %v2673, 112
    %v3824 = vpop.permute.xlu0 %3823
    %v3828 = vsel %vm447, %v3732, 0
    %v3831 = vsel %vm447, %v3733, 0
    %3833 = vmatprep.subr.mxu0 0.0
    %3834 = vmatpush1.msra.mxu0 %v3822
    %3835 = vmatprep.subr.mxu0 0.0
    %3836 = vmatpush1.msra.mxu0 %v3824
    %3837 = vmatprep.subr.mxu0 0.0
    %3838 = vmatpush1.msra.mxu0 0.0
    %3839 = vmatprep.subr.mxu0 0.0
    %3840 = vmatpush1.msra.mxu0 0.0
    %3841 = vmatprep.subr.mxu0 0.0
    %3842 = vmatpush1.msra.mxu0 0.0
    %3843 = vmatprep.subr.mxu0 0.0
    %3844 = vmatpush1.msra.mxu0 0.0
    %3845 = vmatprep.subr.mxu0 0.0
    %3846 = vmatpush1.msra.mxu0 0.0
    %3847 = vmatprep.subr.mxu0 0.0
    %3848 = vmatpush1.msra.mxu0 0.0
    %3849 = vmatprep.subr.mxu0 0.0
    %3850 = vmatpush1.msra.mxu0 0.0
    %3851 = vmatprep.subr.mxu0 0.0
    %3852 = vmatpush1.msra.mxu0 0.0
    %3853 = vmatprep.subr.mxu0 0.0
    %3854 = vmatpush1.msra.mxu0 0.0
    %3855 = vmatprep.subr.mxu0 0.0
    %3856 = vmatpush1.msra.mxu0 0.0
    %3857 = vmatprep.subr.mxu0 0.0
    %3858 = vmatpush1.msra.mxu0 0.0
    %3859 = vmatprep.subr.mxu0 0.0
    %3860 = vmatpush1.msra.mxu0 0.0
    %3861 = vmatprep.subr.mxu0 0.0
    %3862 = vmatpush1.msra.mxu0 0.0
    %3863 = vmatprep.subr.mxu0 0.0
    %3864 = vmatpush1.msra.mxu0 0.0
    %3865 = vmatprep.subr.mxu0 0.0
    %3866 = vmatpush1.msra.mxu0 0.0
    %3867 = vmatprep.subr.mxu0 0.0
    %3868 = vmatpush1.msra.mxu0 0.0
    %3869 = vmatprep.subr.mxu0 0.0
    %3870 = vmatpush1.msra.mxu0 0.0
    %3871 = vmatprep.subr.mxu0 0.0
    %3872 = vmatpush1.msra.mxu0 0.0
    %3873 = vmatprep.subr.mxu0 0.0
    %3874 = vmatpush1.msra.mxu0 0.0
    %3875 = vmatprep.subr.mxu0 0.0
    %3876 = vmatpush1.msra.mxu0 0.0
    %3877 = vmatprep.subr.mxu0 0.0
    %3878 = vmatpush1.msra.mxu0 0.0
    %3879 = vmatprep.subr.mxu0 0.0
    %3880 = vmatpush1.msra.mxu0 0.0
    %3881 = vmatprep.subr.mxu0 0.0
    %3882 = vmatpush1.msra.mxu0 0.0
    %3883 = vmatprep.subr.mxu0 0.0
    %3884 = vmatpush1.msra.mxu0 0.0
    %3885 = vmatprep.subr.mxu0 0.0
    %3886 = vmatpush1.msra.mxu0 0.0
    %3887 = vmatprep.subr.mxu0 0.0
    %3888 = vmatpush1.msra.mxu0 0.0
    %3889 = vmatprep.subr.mxu0 0.0
    %3890 = vmatpush1.msra.mxu0 0.0
    %3891 = vmatprep.subr.mxu0 0.0
    %3892 = vmatpush1.msra.mxu0 0.0
    %3893 = vmatprep.subr.mxu0 0.0
    %3894 = vmatpush1.msra.mxu0 0.0
    %3895 = vmatprep.subr.mxu0 0.0
    %3896 = vmatpush1.msra.mxu0 0.0
    %3897 = vmatprep.mubr.f32.mxu0 0.0
    %3898 = vmatmul.mubr.f32.gmra.mrb[0].mxu0 %v3828
    %v3899 = vpop.f32.mrb[0].mxu0
    %v3900 = vadd.f32 0.0, %v3899
    %v3901 = vpop.f32.mrb[0].mxu0
    %3902 = vmatprep.mubr.f32.mxu0 0.0
    %3903 = vmatmul.mubr.f32.gmra.mrb[0].mxu0 %v3831
    %v3904 = vpop.f32.mrb[0].mxu0
    %v3905 = vadd.f32 0.0, %v3904
    %v3906 = vpop.f32.mrb[0].mxu0
    %3907 = vdwg.mxu0
    %3908 = vrot.lane.b32.xlu0 %v2676, 104
    %v3909 = vpop.permute.xlu0 %3908
    %3910 = vrot.lane.b32.xlu0 %v2677, 104
    %v3911 = vpop.permute.xlu0 %3910
    %3912 = vrot.lane.b32.xlu0 %v2541, 72
    %v3913 = vpop.permute.xlu0 %3912
    %3914 = vrot.lane.b32.xlu0 %v2546, 72
    %v3915 = vpop.permute.xlu0 %3914
    %v3916 = vsel %vm270, %v3909, 0
    %v3918 = vsel %vm270, %v3911, 0
    %v3920 = vsel %vm270, %v3913, 0
    %v3922 = vsel %vm270, %v3915, 0
    %3924 = vmatprep.subr.mxu0 0.0
    %3925 = vmatpush1.xpose.msra.mxu0 %v3920
    %3926 = vmatprep.subr.mxu0 0.0
    %3927 = vmatpush1.xpose.msra.mxu0 %v3922
    %3928 = vmatprep.subr.mxu0 0.0
    %3929 = vmatpush1.xpose.msra.mxu0 0.0
    %3930 = vmatprep.subr.mxu0 0.0
    %3931 = vmatpush1.xpose.msra.mxu0 0.0
    %3932 = vmatprep.subr.mxu0 0.0
    %3933 = vmatpush1.xpose.msra.mxu0 0.0
    %3934 = vmatprep.subr.mxu0 0.0
    %3935 = vmatpush1.xpose.msra.mxu0 0.0
    %3936 = vmatprep.subr.mxu0 0.0
    %3937 = vmatpush1.xpose.msra.mxu0 0.0
    %3938 = vmatprep.subr.mxu0 0.0
    %3939 = vmatpush1.xpose.msra.mxu0 0.0
    %3940 = vmatprep.subr.mxu0 0.0
    %3941 = vmatpush1.xpose.msra.mxu0 0.0
    %3942 = vmatprep.subr.mxu0 0.0
    %3943 = vmatpush1.xpose.msra.mxu0 0.0
    %3944 = vmatprep.subr.mxu0 0.0
    %3945 = vmatpush1.xpose.msra.mxu0 0.0
    %3946 = vmatprep.subr.mxu0 0.0
    %3947 = vmatpush1.xpose.msra.mxu0 0.0
    %3948 = vmatprep.subr.mxu0 0.0
    %3949 = vmatpush1.xpose.msra.mxu0 0.0
    %3950 = vmatprep.subr.mxu0 0.0
    %3951 = vmatpush1.xpose.msra.mxu0 0.0
    %3952 = vmatprep.subr.mxu0 0.0
    %3953 = vmatpush1.xpose.msra.mxu0 0.0
    %3954 = vmatprep.subr.mxu0 0.0
    %3955 = vmatpush1.xpose.msra.mxu0 0.0
    %3956 = vmatprep.subr.mxu0 0.0
    %3957 = vmatpush1.xpose.msra.mxu0 0.0
    %3958 = vmatprep.subr.mxu0 0.0
    %3959 = vmatpush1.xpose.msra.mxu0 0.0
    %3960 = vmatprep.subr.mxu0 0.0
    %3961 = vmatpush1.xpose.msra.mxu0 0.0
    %3962 = vmatprep.subr.mxu0 0.0
    %3963 = vmatpush1.xpose.msra.mxu0 0.0
    %3964 = vmatprep.subr.mxu0 0.0
    %3965 = vmatpush1.xpose.msra.mxu0 0.0
    %3966 = vmatprep.subr.mxu0 0.0
    %3967 = vmatpush1.xpose.msra.mxu0 0.0
    %3968 = vmatprep.subr.mxu0 0.0
    %3969 = vmatpush1.xpose.msra.mxu0 0.0
    %3970 = vmatprep.subr.mxu0 0.0
    %3971 = vmatpush1.xpose.msra.mxu0 0.0
    %3972 = vmatprep.subr.mxu0 0.0
    %3973 = vmatpush1.xpose.msra.mxu0 0.0
    %3974 = vmatprep.subr.mxu0 0.0
    %3975 = vmatpush1.xpose.msra.mxu0 0.0
    %3976 = vmatprep.subr.mxu0 0.0
    %3977 = vmatpush1.xpose.msra.mxu0 0.0
    %3978 = vmatprep.subr.mxu0 0.0
    %3979 = vmatpush1.xpose.msra.mxu0 0.0
    %3980 = vmatprep.subr.mxu0 0.0
    %3981 = vmatpush1.xpose.msra.mxu0 0.0
    %3982 = vmatprep.subr.mxu0 0.0
    %3983 = vmatpush1.xpose.msra.mxu0 0.0
    %3984 = vmatprep.subr.mxu0 0.0
    %3985 = vmatpush1.xpose.msra.mxu0 0.0
    %3986 = vmatprep.subr.mxu0 0.0
    %3987 = vmatpush1.xpose.msra.mxu0 0.0
    %3988 = vmatprep.mubr.f32.mxu0 0.0
    %3989 = vmatmul.mubr.f32.gmra.mrb[0].mxu0 %v3916
    %v3990 = vpop.f32.mrb[0].mxu0
    %v3991 = vadd.f32 0.0, %v3990
    %v3992 = vpop.f32.mrb[0].mxu0
    %3993 = vmatprep.mubr.f32.mxu0 0.0
    %3994 = vmatmul.mubr.f32.gmra.mrb[0].mxu0 %v3918
    %v3995 = vpop.f32.mrb[0].mxu0
    %v3996 = vadd.f32 0.0, %v3995
    %v3997 = vpop.f32.mrb[0].mxu0
    %3998 = vdwg.mxu0
    %3999 = vrot.lane.b32.xlu0 %v2678, 104
    %v4000 = vpop.permute.xlu0 %3999
    %4001 = vrot.lane.b32.xlu0 %v2679, 104
    %v4002 = vpop.permute.xlu0 %4001
    %4003 = vrot.lane.b32.xlu0 %v2551, 72
    %v4004 = vpop.permute.xlu0 %4003
    %4005 = vrot.lane.b32.xlu0 %v2556, 72
    %v4006 = vpop.permute.xlu0 %4005
    %v4007 = vsel %vm270, %v4000, 0
    %v4009 = vsel %vm270, %v4002, 0
    %v4011 = vsel %vm270, %v4004, 0
    %v4013 = vsel %vm270, %v4006, 0
    %4015 = vmatprep.subr.mxu0 0.0
    %4016 = vmatpush1.xpose.msra.mxu0 %v4011
    %4017 = vmatprep.subr.mxu0 0.0
    %4018 = vmatpush1.xpose.msra.mxu0 %v4013
    %4019 = vmatprep.subr.mxu0 0.0
    %4020 = vmatpush1.xpose.msra.mxu0 0.0
    %4021 = vmatprep.subr.mxu0 0.0
    %4022 = vmatpush1.xpose.msra.mxu0 0.0
    %4023 = vmatprep.subr.mxu0 0.0
    %4024 = vmatpush1.xpose.msra.mxu0 0.0
    %4025 = vmatprep.subr.mxu0 0.0
    %4026 = vmatpush1.xpose.msra.mxu0 0.0
    %4027 = vmatprep.subr.mxu0 0.0
    %4028 = vmatpush1.xpose.msra.mxu0 0.0
    %4029 = vmatprep.subr.mxu0 0.0
    %4030 = vmatpush1.xpose.msra.mxu0 0.0
    %4031 = vmatprep.subr.mxu0 0.0
    %4032 = vmatpush1.xpose.msra.mxu0 0.0
    %4033 = vmatprep.subr.mxu0 0.0
    %4034 = vmatpush1.xpose.msra.mxu0 0.0
    %4035 = vmatprep.subr.mxu0 0.0
    %4036 = vmatpush1.xpose.msra.mxu0 0.0
    %4037 = vmatprep.subr.mxu0 0.0
    %4038 = vmatpush1.xpose.msra.mxu0 0.0
    %4039 = vmatprep.subr.mxu0 0.0
    %4040 = vmatpush1.xpose.msra.mxu0 0.0
    %4041 = vmatprep.subr.mxu0 0.0
    %4042 = vmatpush1.xpose.msra.mxu0 0.0
    %4043 = vmatprep.subr.mxu0 0.0
    %4044 = vmatpush1.xpose.msra.mxu0 0.0
    %4045 = vmatprep.subr.mxu0 0.0
    %4046 = vmatpush1.xpose.msra.mxu0 0.0
    %4047 = vmatprep.subr.mxu0 0.0
    %4048 = vmatpush1.xpose.msra.mxu0 0.0
    %4049 = vmatprep.subr.mxu0 0.0
    %4050 = vmatpush1.xpose.msra.mxu0 0.0
    %4051 = vmatprep.subr.mxu0 0.0
    %4052 = vmatpush1.xpose.msra.mxu0 0.0
    %4053 = vmatprep.subr.mxu0 0.0
    %4054 = vmatpush1.xpose.msra.mxu0 0.0
    %4055 = vmatprep.subr.mxu0 0.0
    %4056 = vmatpush1.xpose.msra.mxu0 0.0
    %4057 = vmatprep.subr.mxu0 0.0
    %4058 = vmatpush1.xpose.msra.mxu0 0.0
    %4059 = vmatprep.subr.mxu0 0.0
    %4060 = vmatpush1.xpose.msra.mxu0 0.0
    %4061 = vmatprep.subr.mxu0 0.0
    %4062 = vmatpush1.xpose.msra.mxu0 0.0
    %4063 = vmatprep.subr.mxu0 0.0
    %4064 = vmatpush1.xpose.msra.mxu0 0.0
    %4065 = vmatprep.subr.mxu0 0.0
    %4066 = vmatpush1.xpose.msra.mxu0 0.0
    %4067 = vmatprep.subr.mxu0 0.0
    %4068 = vmatpush1.xpose.msra.mxu0 0.0
    %4069 = vmatprep.subr.mxu0 0.0
    %4070 = vmatpush1.xpose.msra.mxu0 0.0
    %4071 = vmatprep.subr.mxu0 0.0
    %4072 = vmatpush1.xpose.msra.mxu0 0.0
    %4073 = vmatprep.subr.mxu0 0.0
    %4074 = vmatpush1.xpose.msra.mxu0 0.0
    %4075 = vmatprep.subr.mxu0 0.0
    %4076 = vmatpush1.xpose.msra.mxu0 0.0
    %4077 = vmatprep.subr.mxu0 0.0
    %4078 = vmatpush1.xpose.msra.mxu0 0.0
    %4079 = vmatprep.mubr.f32.mxu0 0.0
    %4080 = vmatmul.mubr.f32.gmra.mrb[0].mxu0 %v4007
    %v4081 = vpop.f32.mrb[0].mxu0
    %v4082 = vadd.f32 0.0, %v4081
    %v4083 = vpop.f32.mrb[0].mxu0
    %4084 = vmatprep.mubr.f32.mxu0 0.0
    %4085 = vmatmul.mubr.f32.gmra.mrb[0].mxu0 %v4009
    %v4086 = vpop.f32.mrb[0].mxu0
    %v4087 = vadd.f32 0.0, %v4086
    %v4088 = vpop.f32.mrb[0].mxu0
    %4089 = vdwg.mxu0
    %v4090 = vsel %vm447, %v3991, -inf
    %4091 = vmax.xlane.f32.xlu0 %v4090
    %v4092 = vpop.xlane.xlu0 %4091
    %v4093 = vsel %vm447, %v3996, -inf
    %4094 = vmax.xlane.f32.xlu0 %v4093
    %v4095 = vpop.xlane.xlu0 %4094
    %v4096 = vsel %vm447, %v4082, -inf
    %4097 = vmax.xlane.f32.xlu0 %v4096
    %v4098 = vpop.xlane.xlu0 %4097
    %v4099 = vsel %vm447, %v4087, -inf
    %4100 = vmax.xlane.f32.xlu0 %v4099
    %v4101 = vpop.xlane.xlu0 %4100
    %v4102 = vsub.f32 %v3991, %v4092
    %v4103 = vsub.f32 %v3996, %v4095
    %v4104 = vsub.f32 %v4082, %v4098
    %v4105 = vsub.f32 %v4087, %v4101
    %v4106 = vmul.f32 %v4102, 1.442695
    %v4107 = vpow.pop %v4106
    %v4108 = vmul.f32 %v4103, 1.442695
    %v4109 = vpow.pop %v4108
    %v4110 = vmul.f32 %v4104, 1.442695
    %v4111 = vpow.pop %v4110
    %v4112 = vmul.f32 %v4105, 1.442695
    %v4113 = vpow.pop %v4112
    %v4114 = vsel %vm447, %v4107, 0.0
    %4115 = vadd.xlane.f32.xlu0 %v4114
    %v4116 = vpop.xlane.xlu0 %4115
    %v4117 = vsel %vm447, %v4109, 0.0
    %4118 = vadd.xlane.f32.xlu0 %v4117
    %v4119 = vpop.xlane.xlu0 %4118
    %v4120 = vsel %vm447, %v4111, 0.0
    %4121 = vadd.xlane.f32.xlu0 %v4120
    %v4122 = vpop.xlane.xlu0 %4121
    %v4123 = vsel %vm447, %v4113, 0.0
    %4124 = vadd.xlane.f32.xlu0 %v4123
    %v4125 = vpop.xlane.xlu0 %4124
    %v4126 = vrcp.pop %v4116
    %v4127 = vrcp.pop %v4119
    %v4128 = vrcp.pop %v4122
    %v4129 = vrcp.pop %v4125
    %v4130 = vmul.f32 %v4116, %v4126
    %v4131 = vmul.f32 %v4119, %v4127
    %v4132 = vmul.f32 %v4122, %v4128
    %v4133 = vmul.f32 %v4125, %v4129
    %v4134 = vsub.f32 2.0, %v4130
    %v4135 = vsub.f32 2.0, %v4131
    %v4136 = vsub.f32 2.0, %v4132
    %v4137 = vsub.f32 2.0, %v4133
    %v4138 = vmul.f32 %v4126, %v4134
    %v4139 = vmul.f32 %v4127, %v4135
    %v4140 = vmul.f32 %v4128, %v4136
    %v4141 = vmul.f32 %v4129, %v4137
    %v4142 = vmul.f32 %v4107, %v4138
    %v4143 = vmul.f32 %v4109, %v4139
    %v4144 = vmul.f32 %v4111, %v4140
    %v4145 = vmul.f32 %v4113, %v4141
    %4146 = vrot.lane.b32.xlu0 %v2658, 104
    %v4147 = vpop.permute.xlu0 %4146
    %4148 = vrot.lane.b32.xlu0 %v2663, 104
    %v4149 = vpop.permute.xlu0 %4148
    %v4153 = vsel %vm447, %v4142, 0
    %v4156 = vsel %vm447, %v4143, 0
    %4158 = vmatprep.subr.mxu0 0.0
    %4159 = vmatpush1.msra.mxu0 %v4147
    %4160 = vmatprep.subr.mxu0 0.0
    %4161 = vmatpush1.msra.mxu0 %v4149
    %4162 = vmatprep.subr.mxu0 0.0
    %4163 = vmatpush1.msra.mxu0 0.0
    %4164 = vmatprep.subr.mxu0 0.0
    %4165 = vmatpush1.msra.mxu0 0.0
    %4166 = vmatprep.subr.mxu0 0.0
    %4167 = vmatpush1.msra.mxu0 0.0
    %4168 = vmatprep.subr.mxu0 0.0
    %4169 = vmatpush1.msra.mxu0 0.0
    %4170 = vmatprep.subr.mxu0 0.0
    %4171 = vmatpush1.msra.mxu0 0.0
    %4172 = vmatprep.subr.mxu0 0.0
    %4173 = vmatpush1.msra.mxu0 0.0
    %4174 = vmatprep.subr.mxu0 0.0
    %4175 = vmatpush1.msra.mxu0 0.0
    %4176 = vmatprep.subr.mxu0 0.0
    %4177 = vmatpush1.msra.mxu0 0.0
    %4178 = vmatprep.subr.mxu0 0.0
    %4179 = vmatpush1.msra.mxu0 0.0
    %4180 = vmatprep.subr.mxu0 0.0
    %4181 = vmatpush1.msra.mxu0 0.0
    %4182 = vmatprep.subr.mxu0 0.0
    %4183 = vmatpush1.msra.mxu0 0.0
    %4184 = vmatprep.subr.mxu0 0.0
    %4185 = vmatpush1.msra.mxu0 0.0
    %4186 = vmatprep.subr.mxu0 0.0
    %4187 = vmatpush1.msra.mxu0 0.0
    %4188 = vmatprep.subr.mxu0 0.0
    %4189 = vmatpush1.msra.mxu0 0.0
    %4190 = vmatprep.subr.mxu0 0.0
    %4191 = vmatpush1.msra.mxu0 0.0
    %4192 = vmatprep.subr.mxu0 0.0
    %4193 = vmatpush1.msra.mxu0 0.0
    %4194 = vmatprep.subr.mxu0 0.0
    %4195 = vmatpush1.msra.mxu0 0.0
    %4196 = vmatprep.subr.mxu0 0.0
    %4197 = vmatpush1.msra.mxu0 0.0
    %4198 = vmatprep.subr.mxu0 0.0
    %4199 = vmatpush1.msra.mxu0 0.0
    %4200 = vmatprep.subr.mxu0 0.0
    %4201 = vmatpush1.msra.mxu0 0.0
    %4202 = vmatprep.subr.mxu0 0.0
    %4203 = vmatpush1.msra.mxu0 0.0
    %4204 = vmatprep.subr.mxu0 0.0
    %4205 = vmatpush1.msra.mxu0 0.0
    %4206 = vmatprep.subr.mxu0 0.0
    %4207 = vmatpush1.msra.mxu0 0.0
    %4208 = vmatprep.subr.mxu0 0.0
    %4209 = vmatpush1.msra.mxu0 0.0
    %4210 = vmatprep.subr.mxu0 0.0
    %4211 = vmatpush1.msra.mxu0 0.0
    %4212 = vmatprep.subr.mxu0 0.0
    %4213 = vmatpush1.msra.mxu0 0.0
    %4214 = vmatprep.subr.mxu0 0.0
    %4215 = vmatpush1.msra.mxu0 0.0
    %4216 = vmatprep.subr.mxu0 0.0
    %4217 = vmatpush1.msra.mxu0 0.0
    %4218 = vmatprep.subr.mxu0 0.0
    %4219 = vmatpush1.msra.mxu0 0.0
    %4220 = vmatprep.subr.mxu0 0.0
    %4221 = vmatpush1.msra.mxu0 0.0
    %4222 = vmatprep.mubr.f32.mxu0 0.0
    %4223 = vmatmul.mubr.f32.gmra.mrb[0].mxu0 %v4153
    %v4224 = vpop.f32.mrb[0].mxu0
    %v4225 = vadd.f32 0.0, %v4224
    %v4226 = vpop.f32.mrb[0].mxu0
    %4227 = vmatprep.mubr.f32.mxu0 0.0
    %4228 = vmatmul.mubr.f32.gmra.mrb[0].mxu0 %v4156
    %v4229 = vpop.f32.mrb[0].mxu0
    %v4230 = vadd.f32 0.0, %v4229
    %v4231 = vpop.f32.mrb[0].mxu0
    %4232 = vdwg.mxu0
    %4233 = vrot.lane.b32.xlu0 %v2668, 104
    %v4234 = vpop.permute.xlu0 %4233
    %4235 = vrot.lane.b32.xlu0 %v2673, 104
    %v4236 = vpop.permute.xlu0 %4235
    %v4240 = vsel %vm447, %v4144, 0
    %v4243 = vsel %vm447, %v4145, 0
    %4245 = vmatprep.subr.mxu0 0.0
    %4246 = vmatpush1.msra.mxu0 %v4234
    %4247 = vmatprep.subr.mxu0 0.0
    %4248 = vmatpush1.msra.mxu0 %v4236
    %4249 = vmatprep.subr.mxu0 0.0
    %4250 = vmatpush1.msra.mxu0 0.0
    %4251 = vmatprep.subr.mxu0 0.0
    %4252 = vmatpush1.msra.mxu0 0.0
    %4253 = vmatprep.subr.mxu0 0.0
    %4254 = vmatpush1.msra.mxu0 0.0
    %4255 = vmatprep.subr.mxu0 0.0
    %4256 = vmatpush1.msra.mxu0 0.0
    %4257 = vmatprep.subr.mxu0 0.0
    %4258 = vmatpush1.msra.mxu0 0.0
    %4259 = vmatprep.subr.mxu0 0.0
    %4260 = vmatpush1.msra.mxu0 0.0
    %4261 = vmatprep.subr.mxu0 0.0
    %4262 = vmatpush1.msra.mxu0 0.0
    %4263 = vmatprep.subr.mxu0 0.0
    %4264 = vmatpush1.msra.mxu0 0.0
    %4265 = vmatprep.subr.mxu0 0.0
    %4266 = vmatpush1.msra.mxu0 0.0
    %4267 = vmatprep.subr.mxu0 0.0
    %4268 = vmatpush1.msra.mxu0 0.0
    %4269 = vmatprep.subr.mxu0 0.0
    %4270 = vmatpush1.msra.mxu0 0.0
    %4271 = vmatprep.subr.mxu0 0.0
    %4272 = vmatpush1.msra.mxu0 0.0
    %4273 = vmatprep.subr.mxu0 0.0
    %4274 = vmatpush1.msra.mxu0 0.0
    %4275 = vmatprep.subr.mxu0 0.0
    %4276 = vmatpush1.msra.mxu0 0.0
    %4277 = vmatprep.subr.mxu0 0.0
    %4278 = vmatpush1.msra.mxu0 0.0
    %4279 = vmatprep.subr.mxu0 0.0
    %4280 = vmatpush1.msra.mxu0 0.0
    %4281 = vmatprep.subr.mxu0 0.0
    %4282 = vmatpush1.msra.mxu0 0.0
    %4283 = vmatprep.subr.mxu0 0.0
    %4284 = vmatpush1.msra.mxu0 0.0
    %4285 = vmatprep.subr.mxu0 0.0
    %4286 = vmatpush1.msra.mxu0 0.0
    %4287 = vmatprep.subr.mxu0 0.0
    %4288 = vmatpush1.msra.mxu0 0.0
    %4289 = vmatprep.subr.mxu0 0.0
    %4290 = vmatpush1.msra.mxu0 0.0
    %4291 = vmatprep.subr.mxu0 0.0
    %4292 = vmatpush1.msra.mxu0 0.0
    %4293 = vmatprep.subr.mxu0 0.0
    %4294 = vmatpush1.msra.mxu0 0.0
    %4295 = vmatprep.subr.mxu0 0.0
    %4296 = vmatpush1.msra.mxu0 0.0
    %4297 = vmatprep.subr.mxu0 0.0
    %4298 = vmatpush1.msra.mxu0 0.0
    %4299 = vmatprep.subr.mxu0 0.0
    %4300 = vmatpush1.msra.mxu0 0.0
    %4301 = vmatprep.subr.mxu0 0.0
    %4302 = vmatpush1.msra.mxu0 0.0
    %4303 = vmatprep.subr.mxu0 0.0
    %4304 = vmatpush1.msra.mxu0 0.0
    %4305 = vmatprep.subr.mxu0 0.0
    %4306 = vmatpush1.msra.mxu0 0.0
    %4307 = vmatprep.subr.mxu0 0.0
    %4308 = vmatpush1.msra.mxu0 0.0
    %4309 = vmatprep.mubr.f32.mxu0 0.0
    %4310 = vmatmul.mubr.f32.gmra.mrb[0].mxu0 %v4240
    %v4311 = vpop.f32.mrb[0].mxu0
    %v4312 = vadd.f32 0.0, %v4311
    %v4313 = vpop.f32.mrb[0].mxu0
    %4314 = vmatprep.mubr.f32.mxu0 0.0
    %4315 = vmatmul.mubr.f32.gmra.mrb[0].mxu0 %v4243
    %v4316 = vpop.f32.mrb[0].mxu0
    %v4317 = vadd.f32 0.0, %v4316
    %v4318 = vpop.f32.mrb[0].mxu0
    %4319 = vdwg.mxu0
    %4324 = vrot.lane.b32.xlu0 %v3399, 8
    %v4325 = vpop.permute.xlu0 %4324
    %4326 = vrot.lane.b32.xlu0 %v3404, 8
    %v4327 = vpop.permute.xlu0 %4326
    %4328 = vrot.lane.b32.xlu0 %v3488, 8
    %v4329 = vpop.permute.xlu0 %4328
    %4330 = vrot.lane.b32.xlu0 %v3493, 8
    %v4331 = vpop.permute.xlu0 %4330
    %4340 = vrot.lane.b32.xlu0 %v3813, 16
    %v4341 = vpop.permute.xlu0 %4340
    %4342 = vrot.lane.b32.xlu0 %v3818, 16
    %v4343 = vpop.permute.xlu0 %4342
    %4344 = vrot.lane.b32.xlu0 %v3900, 16
    %v4345 = vpop.permute.xlu0 %4344
    %4346 = vrot.lane.b32.xlu0 %v3905, 16
    %v4347 = vpop.permute.xlu0 %4346
    %4356 = vrot.lane.b32.xlu0 %v4225, 24
    %v4357 = vpop.permute.xlu0 %4356
    %4358 = vrot.lane.b32.xlu0 %v4230, 24
    %v4359 = vpop.permute.xlu0 %4358
    %4360 = vrot.lane.b32.xlu0 %v4312, 24
    %v4361 = vpop.permute.xlu0 %4360
    %4362 = vrot.lane.b32.xlu0 %v4317, 24
    %v4363 = vpop.permute.xlu0 %4362
    %v4368 = vsel %vm270, %v2991, %v4325
    %v4369 = vsel %vm270, %v2996, %v4327
    %v4370 = vsel %vm270, %v3072, %v4329
    %v4371 = vsel %vm270, %v3077, %v4331
    %v4372 = vsel %vm447, %v4368, %v4341
    %v4373 = vsel %vm447, %v4369, %v4343
    %v4374 = vsel %vm447, %v4370, %v4345
    %v4375 = vsel %vm447, %v4371, %v4347
    %v4376 = vsel %vm1962, %v4372, %v4357
    %v4377 = vsel %vm1962, %v4373, %v4359
    %v4378 = vsel %vm1962, %v4374, %v4361
    %v4379 = vsel %vm1962, %v4375, %v4363
    %s4380 = scalar_lea.vmem %s3, 32
    %v4381 = vld [vmem:[%s4380] sm:$0xff]
    %v4382 = vld [vmem:[%s4380 + $0x8] sm:$0xff]
    %v4383 = vld [vmem:[%s4380 + $0x10] sm:$0xff]
    %v4384 = vld [vmem:[%s4380 + $0x18] sm:$0xff]
    %v4385 = vld [vmem:[%s2447 + $0x1] sm:$0x1]
    %v4386 = vlaneseq
    %v4387 = vshrl.u32 %v4386, 7
    %v4388 = vsub.s32 0, %v4387
    %v4389 = vrot.slane %v4385, %v4388
    %v4391 = vsel %vm45, %v4376, 0
    %v4394 = vsel %vm45, %v4377, 0
    %v4397 = vsel %vm45, %v4378, 0
    %v4400 = vsel %vm45, %v4379, 0
    %4402 = vmatprep.subr.mxu0 0.0
    %4403 = vmatpush1.msra.mxu0 %v4381
    %4404 = vmatprep.subr.mxu0 0.0
    %4405 = vmatpush1.msra.mxu0 %v4382
    %4406 = vmatprep.subr.mxu0 0.0
    %4407 = vmatpush1.msra.mxu0 %v4383
    %4408 = vmatprep.subr.mxu0 0.0
    %4409 = vmatpush1.msra.mxu0 %v4384
    %4410 = vmatprep.subr.mxu0 0.0
    %4411 = vmatpush1.msra.mxu0 0.0
    %4412 = vmatprep.subr.mxu0 0.0
    %4413 = vmatpush1.msra.mxu0 0.0
    %4414 = vmatprep.subr.mxu0 0.0
    %4415 = vmatpush1.msra.mxu0 0.0
    %4416 = vmatprep.subr.mxu0 0.0
    %4417 = vmatpush1.msra.mxu0 0.0
    %4418 = vmatprep.subr.mxu0 0.0
    %4419 = vmatpush1.msra.mxu0 0.0
    %4420 = vmatprep.subr.mxu0 0.0
    %4421 = vmatpush1.msra.mxu0 0.0
    %4422 = vmatprep.subr.mxu0 0.0
    %4423 = vmatpush1.msra.mxu0 0.0
    %4424 = vmatprep.subr.mxu0 0.0
    %4425 = vmatpush1.msra.mxu0 0.0
    %4426 = vmatprep.subr.mxu0 0.0
    %4427 = vmatpush1.msra.mxu0 0.0
    %4428 = vmatprep.subr.mxu0 0.0
    %4429 = vmatpush1.msra.mxu0 0.0
    %4430 = vmatprep.subr.mxu0 0.0
    %4431 = vmatpush1.msra.mxu0 0.0
    %4432 = vmatprep.subr.mxu0 0.0
    %4433 = vmatpush1.msra.mxu0 0.0
    %4434 = vmatprep.subr.mxu0 0.0
    %4435 = vmatpush1.msra.mxu0 0.0
    %4436 = vmatprep.subr.mxu0 0.0
    %4437 = vmatpush1.msra.mxu0 0.0
    %4438 = vmatprep.subr.mxu0 0.0
    %4439 = vmatpush1.msra.mxu0 0.0
    %4440 = vmatprep.subr.mxu0 0.0
    %4441 = vmatpush1.msra.mxu0 0.0
    %4442 = vmatprep.subr.mxu0 0.0
    %4443 = vmatpush1.msra.mxu0 0.0
    %4444 = vmatprep.subr.mxu0 0.0
    %4445 = vmatpush1.msra.mxu0 0.0
    %4446 = vmatprep.subr.mxu0 0.0
    %4447 = vmatpush1.msra.mxu0 0.0
    %4448 = vmatprep.subr.mxu0 0.0
    %4449 = vmatpush1.msra.mxu0 0.0
    %4450 = vmatprep.subr.mxu0 0.0
    %4451 = vmatpush1.msra.mxu0 0.0
    %4452 = vmatprep.subr.mxu0 0.0
    %4453 = vmatpush1.msra.mxu0 0.0
    %4454 = vmatprep.subr.mxu0 0.0
    %4455 = vmatpush1.msra.mxu0 0.0
    %4456 = vmatprep.subr.mxu0 0.0
    %4457 = vmatpush1.msra.mxu0 0.0
    %4458 = vmatprep.subr.mxu0 0.0
    %4459 = vmatpush1.msra.mxu0 0.0
    %4460 = vmatprep.subr.mxu0 0.0
    %4461 = vmatpush1.msra.mxu0 0.0
    %4462 = vmatprep.subr.mxu0 0.0
    %4463 = vmatpush1.msra.mxu0 0.0
    %4464 = vmatprep.subr.mxu0 0.0
    %4465 = vmatpush1.msra.mxu0 0.0
    %4466 = vmatprep.mubr.f32.mxu0 0.0
    %4467 = vmatmul.mubr.f32.gmra.mrb[0].mxu0 %v4391
    %v4468 = vpop.f32.mrb[0].mxu0
    %v4469 = vadd.f32 %v4389, %v4468
    %v4470 = vpop.f32.mrb[0].mxu0
    %4471 = vmatprep.mubr.f32.mxu0 0.0
    %4472 = vmatmul.mubr.f32.gmra.mrb[0].mxu0 %v4394
    %v4473 = vpop.f32.mrb[0].mxu0
    %v4474 = vadd.f32 %v4389, %v4473
    %v4475 = vpop.f32.mrb[0].mxu0
    %4476 = vmatprep.mubr.f32.mxu0 0.0
    %4477 = vmatmul.mubr.f32.gmra.mrb[0].mxu0 %v4397
    %v4478 = vpop.f32.mrb[0].mxu0
    %v4479 = vadd.f32 %v4389, %v4478
    %v4480 = vpop.f32.mrb[0].mxu0
    %4481 = vmatprep.mubr.f32.mxu0 0.0
    %4482 = vmatmul.mubr.f32.gmra.mrb[0].mxu0 %v4400
    %v4483 = vpop.f32.mrb[0].mxu0
    %v4484 = vadd.f32 %v4389, %v4483
    %v4485 = vpop.f32.mrb[0].mxu0
    %4486 = vdwg.mxu0
    %v4487 = vadd.f32 %v2443, %v4469
    %v4488 = vadd.f32 %v2444, %v4474
    %v4489 = vadd.f32 %v2445, %v4479
    %v4490 = vadd.f32 %v2446, %v4484
    %v4491 = vld [vmem:[%s2447 + $0x4] sm:$0x1]
    %v4492 = vld [vmem:[%s2447 + $0x5] sm:$0x1]
    %v4493 = vsel %vm45, %v4487, 0.0
    %4494 = vadd.xlane.f32.xlu0 %v4493
    %v4495 = vpop.xlane.xlu0 %4494
    %v4496 = vsel %vm45, %v4488, 0.0
    %4497 = vadd.xlane.f32.xlu0 %v4496
    %v4498 = vpop.xlane.xlu0 %4497
    %v4499 = vsel %vm45, %v4489, 0.0
    %4500 = vadd.xlane.f32.xlu0 %v4499
    %v4501 = vpop.xlane.xlu0 %4500
    %v4502 = vsel %vm45, %v4490, 0.0
    %4503 = vadd.xlane.f32.xlu0 %v4502
    %v4504 = vpop.xlane.xlu0 %4503
    %v4505 = vmul.f32 %v4495, %v2091
    %v4506 = vmul.f32 %v4498, %v2091
    %v4507 = vmul.f32 %v4501, %v2091
    %v4508 = vmul.f32 %v4504, %v2091
    %v4509 = vsub.f32 %v4487, %v4505
    %v4510 = vsub.f32 %v4488, %v4506
    %v4511 = vsub.f32 %v4489, %v4507
    %v4512 = vsub.f32 %v4490, %v4508
    %v4513 = vmul.f32 %v4509, %v4509
    %v4514 = vmul.f32 %v4510, %v4510
    %v4515 = vmul.f32 %v4511, %v4511
    %v4516 = vmul.f32 %v4512, %v4512
    %v4517 = vsel %vm45, %v4513, 0.0
    %4518 = vadd.xlane.f32.xlu0 %v4517
    %v4519 = vpop.xlane.xlu0 %4518
    %v4520 = vsel %vm45, %v4514, 0.0
    %4521 = vadd.xlane.f32.xlu0 %v4520
    %v4522 = vpop.xlane.xlu0 %4521
    %v4523 = vsel %vm45, %v4515, 0.0
    %4524 = vadd.xlane.f32.xlu0 %v4523
    %v4525 = vpop.xlane.xlu0 %4524
    %v4526 = vsel %vm45, %v4516, 0.0
    %4527 = vadd.xlane.f32.xlu0 %v4526
    %v4528 = vpop.xlane.xlu0 %4527
    %v4529 = vmul.f32 %v4519, %v2091
    %v4530 = vmul.f32 %v4522, %v2091
    %v4531 = vmul.f32 %v4525, %v2091
    %v4532 = vmul.f32 %v4528, %v2091
    %v4533 = vadd.f32 %v4529, 1e-05
    %v4534 = vadd.f32 %v4530, 1e-05
    %v4535 = vadd.f32 %v4531, 1e-05
    %v4536 = vadd.f32 %v4532, 1e-05
    %v4537 = vrsqrt.pop %v4533
    %v4538 = vrsqrt.pop %v4534
    %v4539 = vrsqrt.pop %v4535
    %v4540 = vrsqrt.pop %v4536
    %v4541 = vmul.f32 %v4509, %v4537
    %v4542 = vmul.f32 %v4510, %v4538
    %v4543 = vmul.f32 %v4511, %v4539
    %v4544 = vmul.f32 %v4512, %v4540
    %v4545 = vlaneseq
    %v4546 = vshrl.u32 %v4545, 7
    %v4547 = vsub.s32 0, %v4546
    %v4548 = vrot.slane %v4491, %v4547
    %v4549 = vmul.f32 %v4541, %v4548
    %v4550 = vmul.f32 %v4542, %v4548
    %v4551 = vmul.f32 %v4543, %v4548
    %v4552 = vmul.f32 %v4544, %v4548
    %v4553 = vlaneseq
    %v4554 = vshrl.u32 %v4553, 7
    %v4555 = vsub.s32 0, %v4554
    %v4556 = vrot.slane %v4492, %v4555
    %v4557 = vadd.f32 %v4549, %v4556
    %v4558 = vadd.f32 %v4550, %v4556
    %v4559 = vadd.f32 %v4551, %v4556
    %v4560 = vadd.f32 %v4552, %v4556
    %s4561 = scalar_lea.vmem %s4, 96
    %v4562 = vld [vmem:[%s4561] sm:$0xff]
    %v4563 = vld [vmem:[%s4561 + $0x8] sm:$0xff]
    %v4564 = vld [vmem:[%s4561 + $0x10] sm:$0xff]
    %v4565 = vld [vmem:[%s4561 + $0x18] sm:$0xff]
    %v4566 = vld [vmem:[%s2447 + $0x2] sm:$0x1]
    %v4567 = vlaneseq
    %v4568 = vshrl.u32 %v4567, 7
    %v4569 = vsub.s32 0, %v4568
    %v4570 = vrot.slane %v4566, %v4569
    %v4572 = vsel %vm45, %v4557, 0
    %v4575 = vsel %vm45, %v4558, 0
    %v4578 = vsel %vm45, %v4559, 0
    %v4581 = vsel %vm45, %v4560, 0
    %4583 = vmatprep.subr.mxu0 0.0
    %4584 = vmatpush1.msra.mxu0 %v4562
    %4585 = vmatprep.subr.mxu0 0.0
    %4586 = vmatpush1.msra.mxu0 %v4563
    %4587 = vmatprep.subr.mxu0 0.0
    %4588 = vmatpush1.msra.mxu0 %v4564
    %4589 = vmatprep.subr.mxu0 0.0
    %4590 = vmatpush1.msra.mxu0 %v4565
    %4591 = vmatprep.subr.mxu0 0.0
    %4592 = vmatpush1.msra.mxu0 0.0
    %4593 = vmatprep.subr.mxu0 0.0
    %4594 = vmatpush1.msra.mxu0 0.0
    %4595 = vmatprep.subr.mxu0 0.0
    %4596 = vmatpush1.msra.mxu0 0.0
    %4597 = vmatprep.subr.mxu0 0.0
    %4598 = vmatpush1.msra.mxu0 0.0
    %4599 = vmatprep.subr.mxu0 0.0
    %4600 = vmatpush1.msra.mxu0 0.0
    %4601 = vmatprep.subr.mxu0 0.0
    %4602 = vmatpush1.msra.mxu0 0.0
    %4603 = vmatprep.subr.mxu0 0.0
    %4604 = vmatpush1.msra.mxu0 0.0
    %4605 = vmatprep.subr.mxu0 0.0
    %4606 = vmatpush1.msra.mxu0 0.0
    %4607 = vmatprep.subr.mxu0 0.0
    %4608 = vmatpush1.msra.mxu0 0.0
    %4609 = vmatprep.subr.mxu0 0.0
    %4610 = vmatpush1.msra.mxu0 0.0
    %4611 = vmatprep.subr.mxu0 0.0
    %4612 = vmatpush1.msra.mxu0 0.0
    %4613 = vmatprep.subr.mxu0 0.0
    %4614 = vmatpush1.msra.mxu0 0.0
    %4615 = vmatprep.subr.mxu0 0.0
    %4616 = vmatpush1.msra.mxu0 0.0
    %4617 = vmatprep.subr.mxu0 0.0
    %4618 = vmatpush1.msra.mxu0 0.0
    %4619 = vmatprep.subr.mxu0 0.0
    %4620 = vmatpush1.msra.mxu0 0.0
    %4621 = vmatprep.subr.mxu0 0.0
    %4622 = vmatpush1.msra.mxu0 0.0
    %4623 = vmatprep.subr.mxu0 0.0
    %4624 = vmatpush1.msra.mxu0 0.0
    %4625 = vmatprep.subr.mxu0 0.0
    %4626 = vmatpush1.msra.mxu0 0.0
    %4627 = vmatprep.subr.mxu0 0.0
    %4628 = vmatpush1.msra.mxu0 0.0
    %4629 = vmatprep.subr.mxu0 0.0
    %4630 = vmatpush1.msra.mxu0 0.0
    %4631 = vmatprep.subr.mxu0 0.0
    %4632 = vmatpush1.msra.mxu0 0.0
    %4633 = vmatprep.subr.mxu0 0.0
    %4634 = vmatpush1.msra.mxu0 0.0
    %4635 = vmatprep.subr.mxu0 0.0
    %4636 = vmatpush1.msra.mxu0 0.0
    %4637 = vmatprep.subr.mxu0 0.0
    %4638 = vmatpush1.msra.mxu0 0.0
    %4639 = vmatprep.subr.mxu0 0.0
    %4640 = vmatpush1.msra.mxu0 0.0
    %4641 = vmatprep.subr.mxu0 0.0
    %4642 = vmatpush1.msra.mxu0 0.0
    %4643 = vmatprep.subr.mxu0 0.0
    %4644 = vmatpush1.msra.mxu0 0.0
    %4645 = vmatprep.subr.mxu0 0.0
    %4646 = vmatpush1.msra.mxu0 0.0
    %4647 = vmatprep.mubr.f32.mxu0 0.0
    %4648 = vmatmul.mubr.f32.gmra.mrb[0].mxu0 %v4572
    %v4649 = vpop.f32.mrb[0].mxu0
    %v4650 = vadd.f32 %v4570, %v4649
    %v4651 = vpop.f32.mrb[0].mxu0
    %4652 = vmatprep.mubr.f32.mxu0 0.0
    %4653 = vmatmul.mubr.f32.gmra.mrb[0].mxu0 %v4575
    %v4654 = vpop.f32.mrb[0].mxu0
    %v4655 = vadd.f32 %v4570, %v4654
    %v4656 = vpop.f32.mrb[0].mxu0
    %4657 = vmatprep.mubr.f32.mxu0 0.0
    %4658 = vmatmul.mubr.f32.gmra.mrb[0].mxu0 %v4578
    %v4659 = vpop.f32.mrb[0].mxu0
    %v4660 = vadd.f32 %v4570, %v4659
    %v4661 = vpop.f32.mrb[0].mxu0
    %4662 = vmatprep.mubr.f32.mxu0 0.0
    %4663 = vmatmul.mubr.f32.gmra.mrb[0].mxu0 %v4581
    %v4664 = vpop.f32.mrb[0].mxu0
    %v4665 = vadd.f32 %v4570, %v4664
    %v4666 = vpop.f32.mrb[0].mxu0
    %4667 = vdwg.mxu0
    %v4668 = vmax.f32 %v4650, 0.0
    %v4669 = vmax.f32 %v4655, 0.0
    %v4670 = vmax.f32 %v4660, 0.0
    %v4671 = vmax.f32 %v4665, 0.0
    %v4672 = vld [vmem:[%s4561 + $0x20] sm:$0xff]
    %v4673 = vld [vmem:[%s4561 + $0x28] sm:$0xff]
    %v4674 = vld [vmem:[%s4561 + $0x30] sm:$0xff]
    %v4675 = vld [vmem:[%s4561 + $0x38] sm:$0xff]
    %v4676 = vld [vmem:[%s4561 + $0x40] sm:$0xff]
    %v4677 = vld [vmem:[%s4561 + $0x48] sm:$0xff]
    %v4678 = vld [vmem:[%s4561 + $0x50] sm:$0xff]
    %v4679 = vld [vmem:[%s4561 + $0x58] sm:$0xff]
    %v4681 = vsel %vm2266, %v4668, 0
    %v4684 = vsel %vm2266, %v4669, 0
    %v4687 = vsel %vm2266, %v4670, 0
    %v4690 = vsel %vm2266, %v4671, 0
    %4692 = vmatprep.subr.mxu0 0.0
    %4693 = vmatpush1.msra.mxu0 %v4672
    %4694 = vmatprep.subr.mxu0 0.0
    %4695 = vmatpush1.msra.mxu0 %v4673
    %4696 = vmatprep.subr.mxu0 0.0
    %4697 = vmatpush1.msra.mxu0 %v4674
    %4698 = vmatprep.subr.mxu0 0.0
    %4699 = vmatpush1.msra.mxu0 %v4675
    %4700 = vmatprep.subr.mxu0 0.0
    %4701 = vmatpush1.msra.mxu0 %v4676
    %4702 = vmatprep.subr.mxu0 0.0
    %4703 = vmatpush1.msra.mxu0 %v4677
    %4704 = vmatprep.subr.mxu0 0.0
    %4705 = vmatpush1.msra.mxu0 %v4678
    %4706 = vmatprep.subr.mxu0 0.0
    %4707 = vmatpush1.msra.mxu0 %v4679
    %4708 = vmatprep.subr.mxu0 0.0
    %4709 = vmatpush1.msra.mxu0 0.0
    %4710 = vmatprep.subr.mxu0 0.0
    %4711 = vmatpush1.msra.mxu0 0.0
    %4712 = vmatprep.subr.mxu0 0.0
    %4713 = vmatpush1.msra.mxu0 0.0
    %4714 = vmatprep.subr.mxu0 0.0
    %4715 = vmatpush1.msra.mxu0 0.0
    %4716 = vmatprep.subr.mxu0 0.0
    %4717 = vmatpush1.msra.mxu0 0.0
    %4718 = vmatprep.subr.mxu0 0.0
    %4719 = vmatpush1.msra.mxu0 0.0
    %4720 = vmatprep.subr.mxu0 0.0
    %4721 = vmatpush1.msra.mxu0 0.0
    %4722 = vmatprep.subr.mxu0 0.0
    %4723 = vmatpush1.msra.mxu0 0.0
    %4724 = vmatprep.subr.mxu0 0.0
    %4725 = vmatpush1.msra.mxu0 0.0
    %4726 = vmatprep.subr.mxu0 0.0
    %4727 = vmatpush1.msra.mxu0 0.0
    %4728 = vmatprep.subr.mxu0 0.0
    %4729 = vmatpush1.msra.mxu0 0.0
    %4730 = vmatprep.subr.mxu0 0.0
    %4731 = vmatpush1.msra.mxu0 0.0
    %4732 = vmatprep.subr.mxu0 0.0
    %4733 = vmatpush1.msra.mxu0 0.0
    %4734 = vmatprep.subr.mxu0 0.0
    %4735 = vmatpush1.msra.mxu0 0.0
    %4736 = vmatprep.subr.mxu0 0.0
    %4737 = vmatpush1.msra.mxu0 0.0
    %4738 = vmatprep.subr.mxu0 0.0
    %4739 = vmatpush1.msra.mxu0 0.0
    %4740 = vmatprep.subr.mxu0 0.0
    %4741 = vmatpush1.msra.mxu0 0.0
    %4742 = vmatprep.subr.mxu0 0.0
    %4743 = vmatpush1.msra.mxu0 0.0
    %4744 = vmatprep.subr.mxu0 0.0
    %4745 = vmatpush1.msra.mxu0 0.0
    %4746 = vmatprep.subr.mxu0 0.0
    %4747 = vmatpush1.msra.mxu0 0.0
    %4748 = vmatprep.subr.mxu0 0.0
    %4749 = vmatpush1.msra.mxu0 0.0
    %4750 = vmatprep.subr.mxu0 0.0
    %4751 = vmatpush1.msra.mxu0 0.0
    %4752 = vmatprep.subr.mxu0 0.0
    %4753 = vmatpush1.msra.mxu0 0.0
    %4754 = vmatprep.subr.mxu0 0.0
    %4755 = vmatpush1.msra.mxu0 0.0
    %4756 = vmatprep.mubr.f32.mxu0 0.0
    %4757 = vmatmul.mubr.f32.gmra.mrb[0].mxu0 %v4681
    %v4758 = vpop.f32.mrb[0].mxu0
    %v4759 = vadd.f32 0.0, %v4758
    %v4760 = vpop.f32.mrb[0].mxu0
    %4761 = vmatprep.mubr.f32.mxu0 0.0
    %4762 = vmatmul.mubr.f32.gmra.mrb[0].mxu0 %v4684
    %v4763 = vpop.f32.mrb[0].mxu0
    %v4764 = vadd.f32 0.0, %v4763
    %v4765 = vpop.f32.mrb[0].mxu0
    %4766 = vmatprep.mubr.f32.mxu0 0.0
    %4767 = vmatmul.mubr.f32.gmra.mrb[0].mxu0 %v4687
    %v4768 = vpop.f32.mrb[0].mxu0
    %v4769 = vadd.f32 0.0, %v4768
    %v4770 = vpop.f32.mrb[0].mxu0
    %4771 = vmatprep.mubr.f32.mxu0 0.0
    %4772 = vmatmul.mubr.f32.gmra.mrb[0].mxu0 %v4690
    %v4773 = vpop.f32.mrb[0].mxu0
    %v4774 = vadd.f32 0.0, %v4773
    %v4775 = vpop.f32.mrb[0].mxu0
    %4776 = vdwg.mxu0
    %v4777 = vld [vmem:[%s2447 + $0x3] sm:$0x1]
    %v4778 = vlaneseq
    %v4779 = vshrl.u32 %v4778, 7
    %v4780 = vsub.s32 0, %v4779
    %v4781 = vrot.slane %v4777, %v4780
    %v4782 = vadd.f32 %v4759, %v4781
    %v4783 = vadd.f32 %v4764, %v4781
    %v4784 = vadd.f32 %v4769, %v4781
    %v4785 = vadd.f32 %v4774, %v4781
    %v4786 = vadd.f32 %v4557, %v4782
    %v4787 = vadd.f32 %v4558, %v4783
    %v4788 = vadd.f32 %v4559, %v4784
    %v4789 = vadd.f32 %v4560, %v4785
    %v4790 = vld [vmem:[%s2447 + $0x6] sm:$0x1]
    %v4791 = vld [vmem:[%s2447 + $0x7] sm:$0x1]
    %v4792 = vsel %vm45, %v4786, 0.0
    %4793 = vadd.xlane.f32.xlu0 %v4792
    %v4794 = vpop.xlane.xlu0 %4793
    %v4795 = vsel %vm45, %v4787, 0.0
    %4796 = vadd.xlane.f32.xlu0 %v4795
    %v4797 = vpop.xlane.xlu0 %4796
    %v4798 = vsel %vm45, %v4788, 0.0
    %4799 = vadd.xlane.f32.xlu0 %v4798
    %v4800 = vpop.xlane.xlu0 %4799
    %v4801 = vsel %vm45, %v4789, 0.0
    %4802 = vadd.xlane.f32.xlu0 %v4801
    %v4803 = vpop.xlane.xlu0 %4802
    %v4804 = vmul.f32 %v4794, %v2091
    %v4805 = vmul.f32 %v4797, %v2091
    %v4806 = vmul.f32 %v4800, %v2091
    %v4807 = vmul.f32 %v4803, %v2091
    %v4808 = vsub.f32 %v4786, %v4804
    %v4809 = vsub.f32 %v4787, %v4805
    %v4810 = vsub.f32 %v4788, %v4806
    %v4811 = vsub.f32 %v4789, %v4807
    %v4812 = vmul.f32 %v4808, %v4808
    %v4813 = vmul.f32 %v4809, %v4809
    %v4814 = vmul.f32 %v4810, %v4810
    %v4815 = vmul.f32 %v4811, %v4811
    %v4816 = vsel %vm45, %v4812, 0.0
    %4817 = vadd.xlane.f32.xlu0 %v4816
    %v4818 = vpop.xlane.xlu0 %4817
    %v4819 = vsel %vm45, %v4813, 0.0
    %4820 = vadd.xlane.f32.xlu0 %v4819
    %v4821 = vpop.xlane.xlu0 %4820
    %v4822 = vsel %vm45, %v4814, 0.0
    %4823 = vadd.xlane.f32.xlu0 %v4822
    %v4824 = vpop.xlane.xlu0 %4823
    %v4825 = vsel %vm45, %v4815, 0.0
    %4826 = vadd.xlane.f32.xlu0 %v4825
    %v4827 = vpop.xlane.xlu0 %4826
    %v4828 = vmul.f32 %v4818, %v2091
    %v4829 = vmul.f32 %v4821, %v2091
    %v4830 = vmul.f32 %v4824, %v2091
    %v4831 = vmul.f32 %v4827, %v2091
    %v4832 = vadd.f32 %v4828, 1e-05
    %v4833 = vadd.f32 %v4829, 1e-05
    %v4834 = vadd.f32 %v4830, 1e-05
    %v4835 = vadd.f32 %v4831, 1e-05
    %v4836 = vrsqrt.pop %v4832
    %v4837 = vrsqrt.pop %v4833
    %v4838 = vrsqrt.pop %v4834
    %v4839 = vrsqrt.pop %v4835
    %v4840 = vmul.f32 %v4808, %v4836
    %v4841 = vmul.f32 %v4809, %v4837
    %v4842 = vmul.f32 %v4810, %v4838
    %v4843 = vmul.f32 %v4811, %v4839
    %v4844 = vlaneseq
    %v4845 = vshrl.u32 %v4844, 7
    %v4846 = vsub.s32 0, %v4845
    %v4847 = vrot.slane %v4790, %v4846
    %v4848 = vmul.f32 %v4840, %v4847
    %v4849 = vmul.f32 %v4841, %v4847
    %v4850 = vmul.f32 %v4842, %v4847
    %v4851 = vmul.f32 %v4843, %v4847
    %v4852 = vlaneseq
    %v4853 = vshrl.u32 %v4852, 7
    %v4854 = vsub.s32 0, %v4853
    %v4855 = vrot.slane %v4791, %v4854
    %v4856 = vadd.f32 %v4848, %v4855
    %v4857 = vadd.f32 %v4849, %v4855
    %v4858 = vadd.f32 %v4850, %v4855
    %v4859 = vadd.f32 %v4851, %v4855
    %4860 = vst.msk [vmem:[#allocation2] sm:$0xff] %vm45, %v4856
    %4861 = vst.msk [vmem:[#allocation2 + $0x8] sm:$0xff] %vm45, %v4857
    %4862 = vst.msk [vmem:[#allocation2 + $0x10] sm:$0xff] %vm45, %v4858
    %4863 = vst.msk [vmem:[#allocation2 + $0x18] sm:$0xff] %vm45, %v4859
    // Predicated region
    $region26: #{transformer_encoder.1} parent=1 // pred_check
      _
    $region27: #{transformer_encoder.1} parent=1 // pred_check_branch
      %4865 = sbr.rel (0) target = $region29
    $region28: #{transformer_encoder.1} parent=1 // pred_region
      %s4867 = ssub.s32 512, 512
      %4868 = vsyncadd [#allocation3], %s4867
      %s4869 = sshll.u32 [#allocation2], 4
      %s4870 = int_to_ptr.vmem [resolvable:$true] %s4869
      %4875 = dma.vmem_to_hbm [thread:$0]  %s4870, 512, %s6, [#allocation3], 128, 128, 8
    $region29: #{transformer_encoder.1} parent=1 // pred_fallthru
      _
    // Predicated region
    $region30: #{transformer_encoder.1} parent=1 // pred_check
      _
    $region31: #{transformer_encoder.1} parent=1 // pred_check_branch
      %4877 = sbr.rel (0) target = $region33
    $region32: #{transformer_encoder.1} parent=1 // pred_region
      %4878 = dma.done [#allocation3], 512
    $region33: #{transformer_encoder.1} parent=1 // pred_fallthru
      _
    %4879 = vsyncpa [#allocation3], 1

</llo_original>
